<compile_context>
chip_gen: v6e
topology: v6e:2x2x1
jax: 0.10.0
libtpu: 0.0.40
codegen_flags: <defaults>
</compile_context>

<pallas_src>
import jax
import jax.numpy as jnp
from jax.experimental import pallas as pl
from jax.experimental.pallas import tpu as pltpu

H1 = 512   # hidden 1 (fixed by the module)
H2 = 256   # hidden 2 (fixed by the module)


def discriminator_kernel(x_ref, w1_ref, b1_ref, w2_ref, b2_ref,
                         w3_ref, b3_ref, o_ref, acc_ref):
    k = pl.program_id(1)

    @pl.when(k == 0)
    def _init():
        acc_ref[...] = jnp.zeros_like(acc_ref)

    # Layer-1 partial product for this K slab.  x is read from HBM once in its
    # native dtype and cast to bf16 here (VPU), feeding the bf16 MXU with f32
    # accumulation.
    x = x_ref[...].astype(jnp.bfloat16)
    acc_ref[...] += jnp.dot(x, w1_ref[...], preferred_element_type=jnp.float32)

    @pl.when(k == pl.num_programs(1) - 1)
    def _finish():
        h1 = acc_ref[...] + b1_ref[...]                      # (b_tile, 512) f32
        h1 = jnp.maximum(h1, 0.2 * h1)                       # LeakyReLU(0.2)

        h2 = jnp.dot(h1.astype(jnp.bfloat16), w2_ref[...],
                     preferred_element_type=jnp.float32) + b2_ref[...]
        h2 = jnp.maximum(h2, 0.2 * h2)                       # (b_tile, 256) f32

        # N=1 linear as a VPU multiply + lane reduction (an MXU pass would be
        # ~1% utilized).  w3 is a pre-cast f32 (1, 256) row; b3 an SMEM scalar.
        logits = jnp.sum(h2 * w3_ref[...], axis=-1, keepdims=True) + b3_ref[0, 0]

        # Exact sigmoid: exp on the EUP, a single divide over (b_tile, 1) is
        # negligible and keeps the output strictly inside [0, 1].
        o_ref[...] = 1.0 / (1.0 + jnp.exp(-logits))


def _choose_batch_tile(B):
    """Batch tile (multiple of 8) and tile count.

    Large batches use ~512-row tiles (amortizes ~0.35us/step pipeline overhead,
    keeps the x DMA near the HBM roofline); medium batches split into >=2 tiles
    so v7x can shard the 'parallel' batch axis across both TensorCores; the
    tile is derived from B so the last tile is never mostly padding."""
    max_tile = 512
    if 8 * pl.cdiv(B, 8) <= max_tile:
        n_tiles = 2 if B >= 128 else 1
    else:
        n_tiles = pl.cdiv(B, max_tile)
    b_tile = 8 * pl.cdiv(pl.cdiv(B, n_tiles), 8)
    return b_tile, n_tiles


def _choose_k_tile(D, b_tile, x_itemsize, budget_bytes=24 << 20):
    """Largest K slab (multiple of 128 dividing D) whose streamed x tile plus
    w1 slab fit a per-step VMEM budget; full D when it already fits."""
    per_k = 2 * b_tile * x_itemsize + 2 * H1 * 2      # x (2 bufs) + w1 (2 bufs)
    if D * per_k <= budget_bytes:
        return D
    cap = max(128, (budget_bytes // per_k) // 128 * 128)
    for tk in range(min(cap, (D // 128) * 128), 0, -128):
        if D % tk == 0:
            return tk
    # TODO(synk): no 128-aligned divisor of D; fall back to fully-resident K.
    return D


def discriminator_forward(img, params):
    """img: (B, C, H, W) array (any float dtype). Returns validity (B, 1) f32."""
    w1, b1, w2, b2, w3, b3 = params
    B = img.shape[0]
    D = w1.shape[0]

    # Flatten like torch's .view(B, -1); NO dtype cast here (done in-kernel).
    x = img.reshape(B, -1)
    x_isz = x.dtype.itemsize

    b_tile, n_b = _choose_batch_tile(B)
    b_pad = b_tile * n_b
    if b_pad != B:
        x = jnp.pad(x, ((0, b_pad - B), (0, 0)))

    tk = _choose_k_tile(D, b_tile, x_isz)
    nk = D // tk

    w1b = w1.astype(jnp.bfloat16)                     # (D, 512)
    w2b = w2.astype(jnp.bfloat16)                     # (512, 256)
    b1f = b1.reshape(1, H1).astype(jnp.float32)
    b2f = b2.reshape(1, H2).astype(jnp.float32)
    w3f = w3.reshape(1, H2).astype(jnp.float32)       # tiny: keep f32
    b3s = b3.reshape(1, 1).astype(jnp.float32)        # SMEM scalar

    cost = pl.CostEstimate(
        flops=2 * B * D * H1 + 2 * B * H1 * H2 + 2 * B * H2,
        transcendentals=B,
        bytes_accessed=(b_pad * D * x_isz + (D * H1 + H1 * H2) * 2
                        + (H1 + 3 * H2 + 1) * 4 + b_pad * 4),
    )

    def _vmem_limit(single_buffer):
        wbufs = 1 if single_buffer else 2
        w1bufs = wbufs if nk == 1 else 2
        fp = (2 * b_tile * tk * x_isz                 # x, double-buffered
              + w1bufs * tk * H1 * 2                  # w1 slab(s), bf16
              + wbufs * (H1 * H2 * 2 + (H1 + 2 * H2) * 4)  # w2, b1, b2, w3
              + b_tile * H1 * 4                       # f32 accumulator scratch
              + 2 * b_tile * 4)                       # out, double-buffered
        return min(56 << 20, max(32 << 20, int(fp * 1.25) + (4 << 20)))

    def run(single_buffer):
        def const_spec(shape):
            if single_buffer:
                return pl.BlockSpec(shape, lambda i, k: (0, 0),
                                    pipeline_mode=pl.Buffered(1))
            return pl.BlockSpec(shape, lambda i, k: (0, 0))

        if nk == 1 and single_buffer:
            w1_spec = pl.BlockSpec((tk, H1), lambda i, k: (k, 0),
                                   pipeline_mode=pl.Buffered(1))
        else:  # K-tiled: keep double-buffering so the next slab DMA overlaps.
            w1_spec = pl.BlockSpec((tk, H1), lambda i, k: (k, 0))

        return pl.pallas_call(
            discriminator_kernel,
            out_shape=jax.ShapeDtypeStruct((b_pad, 1), jnp.float32),
            grid=(n_b, nk),
            in_specs=[
                pl.BlockSpec((b_tile, tk), lambda i, k: (i, k)),     # x stream
                w1_spec,                                             # w1
                const_spec((1, H1)),                                 # b1
                const_spec((H1, H2)),                                # w2
                const_spec((1, H2)),                                 # b2
                const_spec((1, H2)),                                 # w3 row
                pl.BlockSpec(memory_space=pltpu.MemorySpace.SMEM),   # b3 scalar
            ],
            out_specs=pl.BlockSpec((b_tile, 1), lambda i, k: (i, 0)),
            scratch_shapes=[pltpu.VMEM((b_tile, H1), jnp.float32)],
            compiler_params=pltpu.CompilerParams(
                dimension_semantics=("parallel", "arbitrary"),
                vmem_limit_bytes=_vmem_limit(single_buffer)),
            cost_estimate=cost,
        )(x, w1b, b1f, w2b, b2f, w3f, b3s)

    try:
        out = run(single_buffer=True)
    except Exception:
        # Fallback if this jax build rejects pl.Buffered(1) for single-buffered
        # resident weights; identical semantics, just double-buffers weights.
        out = run(single_buffer=False)

    return out[:B]


def discriminator_reference(img, params):
    """Pure-JAX f32 reference with identical semantics (sanity check)."""
    w1, b1, w2, b2, w3, b3 = params
    x = img.reshape(img.shape[0], -1)
    h1 = x @ w1 + b1.reshape(1, -1)
    h1 = jnp.where(h1 > 0, h1, 0.2 * h1)
    h2 = h1 @ w2 + b2.reshape(1, -1)
    h2 = jnp.where(h2 > 0, h2, 0.2 * h2)
    logits = h2 @ w3 + b3.reshape(1, -1)
    return jax.nn.sigmoid(logits)


def init_params(key, in_features):
    """Deterministic init mimicking torch.nn.Linear default U[-1/sqrt(fan_in), +]."""
    dims = [(in_features, H1), (H1, H2), (H2, 1)]
    params = []
    for fan_in, fan_out in dims:
        kw, kb, key = jax.random.split(key, 3)
        bound = 1.0 / (fan_in ** 0.5)
        w = jax.random.uniform(kw, (fan_in, fan_out), jnp.float32, -bound, bound)
        b = jax.random.uniform(kb, (1, fan_out), jnp.float32, -bound, bound)
        params.extend([w, b])
    return tuple(params)


if __name__ == "__main__":
    # Small shapes consistent with the module: img_shape = (channels, img_size, img_size)
    B, C, H, W = 2, 4, 16, 16
    key = jax.random.PRNGKey(0)
    k_img, k_par = jax.random.split(key)

    img = jax.random.normal(k_img, (B, C, H, W), jnp.float32)
    params = init_params(k_par, C * H * W)

    validity = discriminator_forward(img, params)
    jax.block_until_ready(validity)

    assert validity.shape == (B, 1)
    assert bool(jnp.all((validity >= 0.0) & (validity <= 1.0)))

    ref = discriminator_reference(img, params)
    assert bool(jnp.all(jnp.abs(validity - ref) < 2e-2)), "mismatch vs f32 reference"

    print("KERNEL_OK")
</pallas_src>

<mosaic_0001>
module attributes {stable_mosaic.version = 11 : i64} {
  func.func @discriminator_kernel(%arg0: i32, %arg1: i32, %arg2: memref<8x1024xf32, #tpu.memory_space<vmem>>, %arg3: memref<1024x512xbf16, #tpu.memory_space<vmem>>, %arg4: memref<1x512xf32, #tpu.memory_space<vmem>>, %arg5: memref<512x256xbf16, #tpu.memory_space<vmem>>, %arg6: memref<1x256xf32, #tpu.memory_space<vmem>>, %arg7: memref<1x256xf32, #tpu.memory_space<vmem>>, %arg8: memref<1x1xf32, #tpu.memory_space<smem>>, %arg9: memref<8x1xf32, #tpu.memory_space<vmem>>, %arg10: memref<8x512xf32, #tpu.memory_space<vmem>>) attributes {dimension_semantics = [#tpu.dimension_semantics<parallel>, #tpu.dimension_semantics<arbitrary>], iteration_bounds = array<i64: 1, 1>, scalar_prefetch = 0 : i64, scratch_operands = 1 : i64, tpu.core_type = #tpu.core_type<tc>, window_params = [{transform_indices = @transform_0, window_bounds = array<i64: 8, 1024>}, {pipeline_mode = #tpu.pipeline_mode<synchronous>, transform_indices = @transform_1, window_bounds = array<i64: 1024, 512>}, {pipeline_mode = #tpu.pipeline_mode<synchronous>, transform_indices = @transform_2, window_bounds = array<i64: 1, 512>}, {pipeline_mode = #tpu.pipeline_mode<synchronous>, transform_indices = @transform_3, window_bounds = array<i64: 512, 256>}, {pipeline_mode = #tpu.pipeline_mode<synchronous>, transform_indices = @transform_4, window_bounds = array<i64: 1, 256>}, {pipeline_mode = #tpu.pipeline_mode<synchronous>, transform_indices = @transform_5, window_bounds = array<i64: 1, 256>}, {transform_indices = @transform_6, window_bounds = array<i64: 1, 1>}, {transform_indices = @transform_7, window_bounds = array<i64: 8, 1>}]} {
    %c0_i32 = arith.constant 0 : i32
    %0 = arith.cmpi eq, %arg1, %c0_i32 : i32
    %1 = arith.extui %0 : i1 to i32
    %c0_i32_0 = arith.constant 0 : i32
    %2 = arith.cmpi ne, %1, %c0_i32_0 : i32
    scf.if %2 {
      %cst_10 = arith.constant 0.000000e+00 : f32
      %13 = vector.broadcast %cst_10 : f32 to vector<8x512xf32>
      %c0_11 = arith.constant 0 : index
      %c0_12 = arith.constant 0 : index
      %14 = vector.load %arg10[%c0_11, %c0_12] : memref<8x512xf32, #tpu.memory_space<vmem>>, vector<8x512xf32>
      tpu.vector_store %arg10[%c0_11, %c0_12], %13 {strides = array<i32>} : memref<8x512xf32, #tpu.memory_space<vmem>>, vector<8x512xf32>,
    } else {
    }
    %c0 = arith.constant 0 : index
    %c0_1 = arith.constant 0 : index
    %3 = vector.load %arg2[%c0, %c0_1] : memref<8x1024xf32, #tpu.memory_space<vmem>>, vector<8x1024xf32>
    %4 = arith.truncf %3 : vector<8x1024xf32> to vector<8x1024xbf16>
    %c0_2 = arith.constant 0 : index
    %c0_3 = arith.constant 0 : index
    %5 = vector.load %arg10[%c0_2, %c0_3] : memref<8x512xf32, #tpu.memory_space<vmem>>, vector<8x512xf32>
    %c0_4 = arith.constant 0 : index
    %c0_5 = arith.constant 0 : index
    %6 = vector.load %arg3[%c0_4, %c0_5] : memref<1024x512xbf16, #tpu.memory_space<vmem>>, vector<1024x512xbf16>
    %cst = arith.constant dense<0.000000e+00> : vector<8x512xf32>
    %7 = tpu.matmul %4, %6, %cst {dimension_numbers = #tpu.dot_dimension_numbers<[1], [0], [0], [1], [0, 0, 1, 1], [], []>} : vector<8x1024xbf16>, vector<1024x512xbf16>, vector<8x512xf32> -> vector<8x512xf32>
    %8 = arith.addf %5, %7 : vector<8x512xf32>
    %c0_6 = arith.constant 0 : index
    %c0_7 = arith.constant 0 : index
    %9 = vector.load %arg10[%c0_6, %c0_7] : memref<8x512xf32, #tpu.memory_space<vmem>>, vector<8x512xf32>
    tpu.vector_store %arg10[%c0_6, %c0_7], %8 {strides = array<i32>} : memref<8x512xf32, #tpu.memory_space<vmem>>, vector<8x512xf32>,
    %c0_i32_8 = arith.constant 0 : i32
    %10 = arith.cmpi eq, %arg1, %c0_i32_8 : i32
    %11 = arith.extui %10 : i1 to i32
    %c0_i32_9 = arith.constant 0 : i32
    %12 = arith.cmpi ne, %11, %c0_i32_9 : i32
    scf.if %12 {
      %c0_10 = arith.constant 0 : index
      %c0_11 = arith.constant 0 : index
      %13 = vector.load %arg10[%c0_10, %c0_11] : memref<8x512xf32, #tpu.memory_space<vmem>>, vector<8x512xf32>
      %c0_12 = arith.constant 0 : index
      %c0_13 = arith.constant 0 : index
      %14 = vector.load %arg4[%c0_12, %c0_13] : memref<1x512xf32, #tpu.memory_space<vmem>>, vector<1x512xf32>
      %15 = vector.broadcast %14 : vector<1x512xf32> to vector<8x512xf32>
      %16 = arith.addf %13, %15 : vector<8x512xf32>
      %cst_14 = arith.constant 2.000000e-01 : f32
      %17 = vector.broadcast %cst_14 : f32 to vector<8x512xf32>
      %18 = arith.mulf %17, %16 : vector<8x512xf32>
      %19 = arith.maximumf %16, %18 : vector<8x512xf32>
      %20 = arith.truncf %19 : vector<8x512xf32> to vector<8x512xbf16>
      %c0_15 = arith.constant 0 : index
      %c0_16 = arith.constant 0 : index
      %21 = vector.load %arg5[%c0_15, %c0_16] : memref<512x256xbf16, #tpu.memory_space<vmem>>, vector<512x256xbf16>
      %cst_17 = arith.constant dense<0.000000e+00> : vector<8x256xf32>
      %22 = tpu.matmul %20, %21, %cst_17 {dimension_numbers = #tpu.dot_dimension_numbers<[1], [0], [0], [1], [0, 0, 1, 1], [], []>} : vector<8x512xbf16>, vector<512x256xbf16>, vector<8x256xf32> -> vector<8x256xf32>
      %c0_18 = arith.constant 0 : index
      %c0_19 = arith.constant 0 : index
      %23 = vector.load %arg6[%c0_18, %c0_19] : memref<1x256xf32, #tpu.memory_space<vmem>>, vector<1x256xf32>
      %24 = vector.broadcast %23 : vector<1x256xf32> to vector<8x256xf32>
      %25 = arith.addf %22, %24 : vector<8x256xf32>
      %cst_20 = arith.constant 2.000000e-01 : f32
      %26 = vector.broadcast %cst_20 : f32 to vector<8x256xf32>
      %27 = arith.mulf %26, %25 : vector<8x256xf32>
      %28 = arith.maximumf %25, %27 : vector<8x256xf32>
      %c0_21 = arith.constant 0 : index
      %c0_22 = arith.constant 0 : index
      %29 = vector.load %arg7[%c0_21, %c0_22] : memref<1x256xf32, #tpu.memory_space<vmem>>, vector<1x256xf32>
      %30 = vector.broadcast %29 : vector<1x256xf32> to vector<8x256xf32>
      %31 = arith.mulf %28, %30 : vector<8x256xf32>
      %cst_23 = arith.constant dense<0.000000e+00> : vector<8xf32>
      %32 = vector.multi_reduction <add>, %31, %cst_23 [1] : vector<8x256xf32> to vector<8xf32>
      %33 = vector.shape_cast %32 : vector<8xf32> to vector<8x1xf32>
      %c0_24 = arith.constant 0 : index
      %c0_25 = arith.constant 0 : index
      %34 = memref.load %arg8[%c0_24, %c0_25] : memref<1x1xf32, #tpu.memory_space<smem>>
      %35 = vector.broadcast %34 : f32 to vector<8x1xf32>
      %36 = arith.addf %33, %35 : vector<8x1xf32>
      %cst_26 = arith.constant 0.000000e+00 : f32
      %37 = vector.broadcast %cst_26 : f32 to vector<8x1xf32>
      %38 = arith.subf %37, %36 : vector<8x1xf32>
      %39 = math.exp %38 : vector<8x1xf32>
      %cst_27 = arith.constant 1.000000e+00 : f32
      %40 = vector.broadcast %cst_27 : f32 to vector<8x1xf32>
      %41 = arith.addf %40, %39 : vector<8x1xf32>
      %cst_28 = arith.constant 1.000000e+00 : f32
      %42 = vector.broadcast %cst_28 : f32 to vector<8x1xf32>
      %43 = arith.divf %42, %41 : vector<8x1xf32>
      %c0_29 = arith.constant 0 : index
      %c0_30 = arith.constant 0 : index
      %44 = vector.load %arg9[%c0_29, %c0_30] : memref<8x1xf32, #tpu.memory_space<vmem>>, vector<8x1xf32>
      tpu.vector_store %arg9[%c0_29, %c0_30], %43 {strides = array<i32>} : memref<8x1xf32, #tpu.memory_space<vmem>>, vector<8x1xf32>,
    } else {
    }
    return
  }
  func.func @transform_0(%arg0: i32, %arg1: i32) -> (i32, i32) {
    %c0_i32 = arith.constant 0 : i32
    return %arg0, %arg1 : i32, i32
  }
  func.func @transform_1(%arg0: i32, %arg1: i32) -> (i32, i32) {
    %c0_i32 = arith.constant 0 : i32
    %c0_i32_0 = arith.constant 0 : i32
    return %arg1, %c0_i32 : i32, i32
  }
  func.func @transform_2(%arg0: i32, %arg1: i32) -> (i32, i32) {
    %c0_i32 = arith.constant 0 : i32
    %c0_i32_0 = arith.constant 0 : i32
    %c0_i32_1 = arith.constant 0 : i32
    return %c0_i32, %c0_i32_0 : i32, i32
  }
  func.func @transform_3(%arg0: i32, %arg1: i32) -> (i32, i32) {
    %c0_i32 = arith.constant 0 : i32
    %c0_i32_0 = arith.constant 0 : i32
    %c0_i32_1 = arith.constant 0 : i32
    return %c0_i32, %c0_i32_0 : i32, i32
  }
  func.func @transform_4(%arg0: i32, %arg1: i32) -> (i32, i32) {
    %c0_i32 = arith.constant 0 : i32
    %c0_i32_0 = arith.constant 0 : i32
    %c0_i32_1 = arith.constant 0 : i32
    return %c0_i32, %c0_i32_0 : i32, i32
  }
  func.func @transform_5(%arg0: i32, %arg1: i32) -> (i32, i32) {
    %c0_i32 = arith.constant 0 : i32
    %c0_i32_0 = arith.constant 0 : i32
    %c0_i32_1 = arith.constant 0 : i32
    return %c0_i32, %c0_i32_0 : i32, i32
  }
  func.func @transform_6(%arg0: i32, %arg1: i32) -> (i32, i32) {
    %c0_i32 = arith.constant 0 : i32
    %c0_i32_0 = arith.constant 0 : i32
    %c0_i32_1 = arith.constant 0 : i32
    return %c0_i32, %c0_i32_0 : i32, i32
  }
  func.func @transform_7(%arg0: i32, %arg1: i32) -> (i32, i32) {
    %c0_i32 = arith.constant 0 : i32
    %c0_i32_0 = arith.constant 0 : i32
    return %arg0, %c0_i32 : i32, i32
  }
}

module attributes {stable_mosaic.version = 11 : i64} {
  func.func @discriminator_kernel(%arg0: i32, %arg1: i32, %arg2: memref<8x1024xf32, #tpu.memory_space<vmem>>, %arg3: memref<1024x512xbf16, #tpu.memory_space<vmem>>, %arg4: memref<1x512xf32, #tpu.memory_space<vmem>>, %arg5: memref<512x256xbf16, #tpu.memory_space<vmem>>, %arg6: memref<1x256xf32, #tpu.memory_space<vmem>>, %arg7: memref<1x256xf32, #tpu.memory_space<vmem>>, %arg8: memref<1x1xf32, #tpu.memory_space<smem>>, %arg9: memref<8x1xf32, #tpu.memory_space<vmem>>, %arg10: memref<8x512xf32, #tpu.memory_space<vmem>>) attributes {dimension_semantics = [#tpu.dimension_semantics<parallel>, #tpu.dimension_semantics<arbitrary>], iteration_bounds = array<i64: 1, 1>, scalar_prefetch = 0 : i64, scratch_operands = 1 : i64, tpu.core_type = #tpu.core_type<tc>, window_params = [{transform_indices = @transform_0, window_bounds = array<i64: 8, 1024>}, {transform_indices = @transform_1, window_bounds = array<i64: 1024, 512>}, {pipeline_mode = #tpu.pipeline_mode<synchronous>, transform_indices = @transform_2, window_bounds = array<i64: 1, 512>}, {pipeline_mode = #tpu.pipeline_mode<synchronous>, transform_indices = @transform_3, window_bounds = array<i64: 512, 256>}, {pipeline_mode = #tpu.pipeline_mode<synchronous>, transform_indices = @transform_4, window_bounds = array<i64: 1, 256>}, {pipeline_mode = #tpu.pipeline_mode<synchronous>, transform_indices = @transform_5, window_bounds = array<i64: 1, 256>}, {transform_indices = @transform_6, window_bounds = array<i64: 1, 1>}, {transform_indices = @transform_7, window_bounds = array<i64: 8, 1>}]} {
    %c0_i32 = arith.constant 0 : i32
    %0 = arith.cmpi eq, %arg1, %c0_i32 : i32
    %1 = arith.extui %0 : i1 to i32
    %c0_i32_0 = arith.constant 0 : i32
    %2 = arith.cmpi ne, %1, %c0_i32_0 : i32
    scf.if %2 {
      %cst_10 = arith.constant 0.000000e+00 : f32
      %13 = vector.broadcast %cst_10 : f32 to vector<8x512xf32>
      %c0_11 = arith.constant 0 : index
      %c0_12 = arith.constant 0 : index
      %14 = vector.load %arg10[%c0_11, %c0_12] : memref<8x512xf32, #tpu.memory_space<vmem>>, vector<8x512xf32>
      tpu.vector_store %arg10[%c0_11, %c0_12], %13 {strides = array<i32>} : memref<8x512xf32, #tpu.memory_space<vmem>>, vector<8x512xf32>,
    } else {
    }
    %c0 = arith.constant 0 : index
    %c0_1 = arith.constant 0 : index
    %3 = vector.load %arg2[%c0, %c0_1] : memref<8x1024xf32, #tpu.memory_space<vmem>>, vector<8x1024xf32>
    %4 = arith.truncf %3 : vector<8x1024xf32> to vector<8x1024xbf16>
    %c0_2 = arith.constant 0 : index
    %c0_3 = arith.constant 0 : index
    %5 = vector.load %arg10[%c0_2, %c0_3] : memref<8x512xf32, #tpu.memory_space<vmem>>, vector<8x512xf32>
    %c0_4 = arith.constant 0 : index
    %c0_5 = arith.constant 0 : index
    %6 = vector.load %arg3[%c0_4, %c0_5] : memref<1024x512xbf16, #tpu.memory_space<vmem>>, vector<1024x512xbf16>
    %cst = arith.constant dense<0.000000e+00> : vector<8x512xf32>
    %7 = tpu.matmul %4, %6, %cst {dimension_numbers = #tpu.dot_dimension_numbers<[1], [0], [0], [1], [0, 0, 1, 1], [], []>} : vector<8x1024xbf16>, vector<1024x512xbf16>, vector<8x512xf32> -> vector<8x512xf32>
    %8 = arith.addf %5, %7 : vector<8x512xf32>
    %c0_6 = arith.constant 0 : index
    %c0_7 = arith.constant 0 : index
    %9 = vector.load %arg10[%c0_6, %c0_7] : memref<8x512xf32, #tpu.memory_space<vmem>>, vector<8x512xf32>
    tpu.vector_store %arg10[%c0_6, %c0_7], %8 {strides = array<i32>} : memref<8x512xf32, #tpu.memory_space<vmem>>, vector<8x512xf32>,
    %c0_i32_8 = arith.constant 0 : i32
    %10 = arith.cmpi eq, %arg1, %c0_i32_8 : i32
    %11 = arith.extui %10 : i1 to i32
    %c0_i32_9 = arith.constant 0 : i32
    %12 = arith.cmpi ne, %11, %c0_i32_9 : i32
    scf.if %12 {
      %c0_10 = arith.constant 0 : index
      %c0_11 = arith.constant 0 : index
      %13 = vector.load %arg10[%c0_10, %c0_11] : memref<8x512xf32, #tpu.memory_space<vmem>>, vector<8x512xf32>
      %c0_12 = arith.constant 0 : index
      %c0_13 = arith.constant 0 : index
      %14 = vector.load %arg4[%c0_12, %c0_13] : memref<1x512xf32, #tpu.memory_space<vmem>>, vector<1x512xf32>
      %15 = vector.broadcast %14 : vector<1x512xf32> to vector<8x512xf32>
      %16 = arith.addf %13, %15 : vector<8x512xf32>
      %cst_14 = arith.constant 2.000000e-01 : f32
      %17 = vector.broadcast %cst_14 : f32 to vector<8x512xf32>
      %18 = arith.mulf %17, %16 : vector<8x512xf32>
      %19 = arith.maximumf %16, %18 : vector<8x512xf32>
      %20 = arith.truncf %19 : vector<8x512xf32> to vector<8x512xbf16>
      %c0_15 = arith.constant 0 : index
      %c0_16 = arith.constant 0 : index
      %21 = vector.load %arg5[%c0_15, %c0_16] : memref<512x256xbf16, #tpu.memory_space<vmem>>, vector<512x256xbf16>
      %cst_17 = arith.constant dense<0.000000e+00> : vector<8x256xf32>
      %22 = tpu.matmul %20, %21, %cst_17 {dimension_numbers = #tpu.dot_dimension_numbers<[1], [0], [0], [1], [0, 0, 1, 1], [], []>} : vector<8x512xbf16>, vector<512x256xbf16>, vector<8x256xf32> -> vector<8x256xf32>
      %c0_18 = arith.constant 0 : index
      %c0_19 = arith.constant 0 : index
      %23 = vector.load %arg6[%c0_18, %c0_19] : memref<1x256xf32, #tpu.memory_space<vmem>>, vector<1x256xf32>
      %24 = vector.broadcast %23 : vector<1x256xf32> to vector<8x256xf32>
      %25 = arith.addf %22, %24 : vector<8x256xf32>
      %cst_20 = arith.constant 2.000000e-01 : f32
      %26 = vector.broadcast %cst_20 : f32 to vector<8x256xf32>
      %27 = arith.mulf %26, %25 : vector<8x256xf32>
      %28 = arith.maximumf %25, %27 : vector<8x256xf32>
      %c0_21 = arith.constant 0 : index
      %c0_22 = arith.constant 0 : index
      %29 = vector.load %arg7[%c0_21, %c0_22] : memref<1x256xf32, #tpu.memory_space<vmem>>, vector<1x256xf32>
      %30 = vector.broadcast %29 : vector<1x256xf32> to vector<8x256xf32>
      %31 = arith.mulf %28, %30 : vector<8x256xf32>
      %cst_23 = arith.constant dense<0.000000e+00> : vector<8xf32>
      %32 = vector.multi_reduction <add>, %31, %cst_23 [1] : vector<8x256xf32> to vector<8xf32>
      %33 = vector.shape_cast %32 : vector<8xf32> to vector<8x1xf32>
      %c0_24 = arith.constant 0 : index
      %c0_25 = arith.constant 0 : index
      %34 = memref.load %arg8[%c0_24, %c0_25] : memref<1x1xf32, #tpu.memory_space<smem>>
      %35 = vector.broadcast %34 : f32 to vector<8x1xf32>
      %36 = arith.addf %33, %35 : vector<8x1xf32>
      %cst_26 = arith.constant 0.000000e+00 : f32
      %37 = vector.broadcast %cst_26 : f32 to vector<8x1xf32>
      %38 = arith.subf %37, %36 : vector<8x1xf32>
      %39 = math.exp %38 : vector<8x1xf32>
      %cst_27 = arith.constant 1.000000e+00 : f32
      %40 = vector.broadcast %cst_27 : f32 to vector<8x1xf32>
      %41 = arith.addf %40, %39 : vector<8x1xf32>
      %cst_28 = arith.constant 1.000000e+00 : f32
      %42 = vector.broadcast %cst_28 : f32 to vector<8x1xf32>
      %43 = arith.divf %42, %41 : vector<8x1xf32>
      %c0_29 = arith.constant 0 : index
      %c0_30 = arith.constant 0 : index
      %44 = vector.load %arg9[%c0_29, %c0_30] : memref<8x1xf32, #tpu.memory_space<vmem>>, vector<8x1xf32>
      tpu.vector_store %arg9[%c0_29, %c0_30], %43 {strides = array<i32>} : memref<8x1xf32, #tpu.memory_space<vmem>>, vector<8x1xf32>,
    } else {
    }
    return
  }
  func.func @transform_0(%arg0: i32, %arg1: i32) -> (i32, i32) {
    %c0_i32 = arith.constant 0 : i32
    return %arg0, %arg1 : i32, i32
  }
  func.func @transform_1(%arg0: i32, %arg1: i32) -> (i32, i32) {
    %c0_i32 = arith.constant 0 : i32
    %c0_i32_0 = arith.constant 0 : i32
    return %arg1, %c0_i32 : i32, i32
  }
  func.func @transform_2(%arg0: i32, %arg1: i32) -> (i32, i32) {
    %c0_i32 = arith.constant 0 : i32
    %c0_i32_0 = arith.constant 0 : i32
    %c0_i32_1 = arith.constant 0 : i32
    return %c0_i32, %c0_i32_0 : i32, i32
  }
  func.func @transform_3(%arg0: i32, %arg1: i32) -> (i32, i32) {
    %c0_i32 = arith.constant 0 : i32
    %c0_i32_0 = arith.constant 0 : i32
    %c0_i32_1 = arith.constant 0 : i32
    return %c0_i32, %c0_i32_0 : i32, i32
  }
  func.func @transform_4(%arg0: i32, %arg1: i32) -> (i32, i32) {
    %c0_i32 = arith.constant 0 : i32
    %c0_i32_0 = arith.constant 0 : i32
    %c0_i32_1 = arith.constant 0 : i32
    return %c0_i32, %c0_i32_0 : i32, i32
  }
  func.func @transform_5(%arg0: i32, %arg1: i32) -> (i32, i32) {
    %c0_i32 = arith.constant 0 : i32
    %c0_i32_0 = arith.constant 0 : i32
    %c0_i32_1 = arith.constant 0 : i32
    return %c0_i32, %c0_i32_0 : i32, i32
  }
  func.func @transform_6(%arg0: i32, %arg1: i32) -> (i32, i32) {
    %c0_i32 = arith.constant 0 : i32
    %c0_i32_0 = arith.constant 0 : i32
    %c0_i32_1 = arith.constant 0 : i32
    return %c0_i32, %c0_i32_0 : i32, i32
  }
  func.func @transform_7(%arg0: i32, %arg1: i32) -> (i32, i32) {
    %c0_i32 = arith.constant 0 : i32
    %c0_i32_0 = arith.constant 0 : i32
    return %arg0, %c0_i32 : i32, i32
  }
}

</mosaic_0001>

<llo_original>
// kernel: tpu_custom_call.1
$region0: #{tpu_custom_call.1}
  #allocation0 [shape = 'u32[]', space=smem, size = 0x4, offset = 0x4, fixed_abs, tag = 'smem constant byte address 0x4 - core index']
  #allocation1 [shape = 'u32[144,128]{1,0:T(1,128)}', space=vmem, size = 0x12000, scoped, tag = 'internal scratch']
  #allocation2 [shape = 'f32[8,512]{1,0:T(8,128)}', space=vmem, size = 0x4000, scoped, tag = 'scratch operand']
  #allocation3 [shape = 'f32[1,1]{1,0:T(1,128)S(6)}', space=smem, size = 0x200, scoped, tag = 'scoped memory for tpu_custom_call.1']
  %s0 = inlined_call_operand.hbm [shape: f32[8,1024], index: 0, kind: input, shape index: {}]
  %s1 = inlined_call_operand.hbm [shape: bf16[1024,512], index: 1, kind: input, shape index: {}]
  %s2 = inlined_call_operand.vmem [shape: f32[1,512], index: 2, kind: input, shape index: {}]
  %s3 = inlined_call_operand.hbm [shape: bf16[512,256], index: 3, kind: input, shape index: {}]
  %s4 = inlined_call_operand.vmem [shape: f32[1,256], index: 4, kind: input, shape index: {}]
  %s5 = inlined_call_operand.vmem [shape: f32[1,256], index: 5, kind: input, shape index: {}]
  %s6 = inlined_call_operand.<no memory space> [shape: f32[1,1], index: 6, kind: input, shape index: {}]
  %s7 = inlined_call_operand.vmem [shape: f32[8,1], index: 7, kind: output, shape index: {}]
  %s8 = sld [smem:[#allocation0]]
  $region58: #{tpu_custom_call.1} parent=0
    _
  %s10 = ssub.s32 1, %s8
  %s11 = scalar_select 0, %s10, %s8
  %12 = sst [smem:[#allocation3]] %s6
  $region1: #{tpu_custom_call.1} parent=0
    #allocation4 [shape = 'u8[32768]{0}', space=vmem, size = 0x8000, scoped, tag = 'input window, operand 0, single buffered']
    #allocation5 [shape = 's32[1]{0}', space=sflag, size = 0x4, scoped, tag = 'scoped memory for tpu_custom_call.1']
    #allocation6 [shape = 'u8[1048576]{0}', space=vmem, size = 0x100000, scoped, tag = 'input window, operand 1, single buffered']
    #allocation7 [shape = 's32[1]{0}', space=sflag, size = 0x4, scoped, tag = 'scoped memory for tpu_custom_call.1']
    #allocation8 [shape = 'u8[262144]{0}', space=vmem, size = 0x40000, scoped, tag = 'input window, operand 3, single buffered']
    %13 = vsyncpa [#allocation5], 0
    %14 = vsyncpa [#allocation7], 0
    // Predicated region
    $region2: #{tpu_custom_call.1} parent=1 // pred_check
      _
    $region3: #{tpu_custom_call.1} parent=1 // pred_check_branch
      %16 = sbr.rel (0) target = $region5
    $region4: #{tpu_custom_call.1} parent=1 // pred_region
      %s18 = ssub.s32 1024, 1024
      %19 = vsyncadd [#allocation5], %s18
      %s21 = sshll.u32 [#allocation4], 4
      %s22 = int_to_ptr.vmem [resolvable:$true] %s21
      %24 = dma.hbm_to_vmem [thread:$0]  %s0, 1024, %s22, [#allocation5]
    $region5: #{tpu_custom_call.1} parent=1 // pred_fallthru
      _
    // Predicated region
    $region6: #{tpu_custom_call.1} parent=1 // pred_check
      _
    $region7: #{tpu_custom_call.1} parent=1 // pred_check_branch
      %26 = sbr.rel (0) target = $region9
    $region8: #{tpu_custom_call.1} parent=1 // pred_region
      %s28 = ssub.s32 32768, 32768
      %29 = vsyncadd [#allocation7], %s28
      %s30 = sshll.u32 [#allocation6], 4
      %s31 = int_to_ptr.vmem [resolvable:$true] %s30
      %36 = dma.hbm_to_vmem [thread:$0]  %s1, 32768, %s31, [#allocation7], 256, 256, 16
    $region9: #{tpu_custom_call.1} parent=1 // pred_fallthru
      _
    // Predicated region
    $region10: #{tpu_custom_call.1} parent=1 // pred_check
      _
    $region11: #{tpu_custom_call.1} parent=1 // pred_check_branch
      %38 = sbr.rel (0) target = $region13
    $region12: #{tpu_custom_call.1} parent=1 // pred_region
      _
    $region13: #{tpu_custom_call.1} parent=1 // pred_fallthru
      _
    // Predicated region
    $region14: #{tpu_custom_call.1} parent=1 // pred_check
      _
    $region15: #{tpu_custom_call.1} parent=1 // pred_check_branch
      %40 = sbr.rel (0) target = $region17
    $region16: #{tpu_custom_call.1} parent=1 // pred_region
      %s42 = ssub.s32 8192, 8192
      %43 = vsyncadd [#allocation7], %s42
      %s44 = sshll.u32 [#allocation8], 4
      %s45 = int_to_ptr.vmem [resolvable:$true] %s44
      %50 = dma.hbm_to_vmem [thread:$0]  %s3, 8192, %s45, [#allocation7], 128, 128, 8
    $region17: #{tpu_custom_call.1} parent=1 // pred_fallthru
      _
    // Predicated region
    $region18: #{tpu_custom_call.1} parent=1 // pred_check
      _
    $region19: #{tpu_custom_call.1} parent=1 // pred_check_branch
      %52 = sbr.rel (0) target = $region21
    $region20: #{tpu_custom_call.1} parent=1 // pred_region
      _
    $region21: #{tpu_custom_call.1} parent=1 // pred_fallthru
      _
    // Predicated region
    $region22: #{tpu_custom_call.1} parent=1 // pred_check
      _
    $region23: #{tpu_custom_call.1} parent=1 // pred_check_branch
      %54 = sbr.rel (0) target = $region25
    $region24: #{tpu_custom_call.1} parent=1 // pred_region
      _
    $region25: #{tpu_custom_call.1} parent=1 // pred_fallthru
      _
    // Predicated region
    $region26: #{tpu_custom_call.1} parent=1 // pred_check
      _
    $region27: #{tpu_custom_call.1} parent=1 // pred_check_branch
      %56 = sbr.rel (0) target = $region29
    $region28: #{tpu_custom_call.1} parent=1 // pred_region
      _
    $region29: #{tpu_custom_call.1} parent=1 // pred_fallthru
      _
    // Predicated region
    $region30: #{tpu_custom_call.1} parent=1 // pred_check
      _
    $region31: #{tpu_custom_call.1} parent=1 // pred_check_branch
      %58 = sbr.rel (0) target = $region33
    $region32: #{tpu_custom_call.1} parent=1 // pred_region
      %59 = dma.done [#allocation5], 1024
    $region33: #{tpu_custom_call.1} parent=1 // pred_fallthru
      _
    // Predicated region
    $region34: #{tpu_custom_call.1} parent=1 // pred_check
      _
    $region35: #{tpu_custom_call.1} parent=1 // pred_check_branch
      %61 = sbr.rel (0) target = $region37
    $region36: #{tpu_custom_call.1} parent=1 // pred_region
      %62 = dma.done [#allocation7], 32768
    $region37: #{tpu_custom_call.1} parent=1 // pred_fallthru
      _
    // Predicated region
    $region38: #{tpu_custom_call.1} parent=1 // pred_check
      _
    $region39: #{tpu_custom_call.1} parent=1 // pred_check_branch
      %64 = sbr.rel (0) target = $region41
    $region40: #{tpu_custom_call.1} parent=1 // pred_region
      %65 = dma.done [#allocation7], 8192
    $region41: #{tpu_custom_call.1} parent=1 // pred_fallthru
      _
    %p66 = scmp.eq.s32.totalorder 0, 0
    // Predicated region
    $region42: #{tpu_custom_call.1} parent=1 // pred_check
      %p67 = pneg %p66
    $region43: #{tpu_custom_call.1} parent=1 // pred_check_branch
      %69 = sbr.rel (%p67) target = $region45
    $region44: #{tpu_custom_call.1} parent=1 // pred_region
      %70 = vst [vmem:[#allocation2] sm:$0xff] 0.0
      %71 = vst [vmem:[#allocation2 + $0x8] sm:$0xff] 0.0
      %72 = vst [vmem:[#allocation2 + $0x10] sm:$0xff] 0.0
      %73 = vst [vmem:[#allocation2 + $0x18] sm:$0xff] 0.0
    $region45: #{tpu_custom_call.1} parent=1 // pred_fallthru
      _
    %v74 = vld [vmem:[#allocation4] sm:$0xff]
    %v75 = vld [vmem:[#allocation4 + $0x8] sm:$0xff]
    %v76 = vld [vmem:[#allocation4 + $0x10] sm:$0xff]
    %v77 = vld [vmem:[#allocation4 + $0x18] sm:$0xff]
    %v78 = vld [vmem:[#allocation4 + $0x20] sm:$0xff]
    %v79 = vld [vmem:[#allocation4 + $0x28] sm:$0xff]
    %v80 = vld [vmem:[#allocation4 + $0x30] sm:$0xff]
    %v81 = vld [vmem:[#allocation4 + $0x38] sm:$0xff]
    %v82 = vpack.c.bf16 %v74, %v74
    %v83 = vpack.c.bf16 %v75, %v75
    %v84 = vpack.c.bf16 %v76, %v76
    %v85 = vpack.c.bf16 %v77, %v77
    %v86 = vpack.c.bf16 %v78, %v78
    %v87 = vpack.c.bf16 %v79, %v79
    %v88 = vpack.c.bf16 %v80, %v80
    %v89 = vpack.c.bf16 %v81, %v81
    %v90 = vld [vmem:[#allocation2] sm:$0xff]
    %v91 = vld [vmem:[#allocation2 + $0x8] sm:$0xff]
    %v92 = vld [vmem:[#allocation2 + $0x10] sm:$0xff]
    %v93 = vld [vmem:[#allocation2 + $0x18] sm:$0xff]
    %v94 = vld [vmem:[#allocation6] sm:$0xff]
    %v95 = vld [vmem:[#allocation6 + $0x8] sm:$0xff]
    %v96 = vld [vmem:[#allocation6 + $0x10] sm:$0xff]
    %v97 = vld [vmem:[#allocation6 + $0x18] sm:$0xff]
    %v98 = vld [vmem:[#allocation6 + $0x20] sm:$0xff]
    %v99 = vld [vmem:[#allocation6 + $0x28] sm:$0xff]
    %v100 = vld [vmem:[#allocation6 + $0x30] sm:$0xff]
    %v101 = vld [vmem:[#allocation6 + $0x38] sm:$0xff]
    %v102 = vld [vmem:[#allocation6 + $0x40] sm:$0xff]
    %v103 = vld [vmem:[#allocation6 + $0x48] sm:$0xff]
    %v104 = vld [vmem:[#allocation6 + $0x50] sm:$0xff]
    %v105 = vld [vmem:[#allocation6 + $0x58] sm:$0xff]
    %v106 = vld [vmem:[#allocation6 + $0x60] sm:$0xff]
    %v107 = vld [vmem:[#allocation6 + $0x68] sm:$0xff]
    %v108 = vld [vmem:[#allocation6 + $0x70] sm:$0xff]
    %v109 = vld [vmem:[#allocation6 + $0x78] sm:$0xff]
    %v110 = vld [vmem:[#allocation6 + $0x80] sm:$0xff]
    %v111 = vld [vmem:[#allocation6 + $0x88] sm:$0xff]
    %v112 = vld [vmem:[#allocation6 + $0x90] sm:$0xff]
    %v113 = vld [vmem:[#allocation6 + $0x98] sm:$0xff]
    %v114 = vld [vmem:[#allocation6 + $0xa0] sm:$0xff]
    %v115 = vld [vmem:[#allocation6 + $0xa8] sm:$0xff]
    %v116 = vld [vmem:[#allocation6 + $0xb0] sm:$0xff]
    %v117 = vld [vmem:[#allocation6 + $0xb8] sm:$0xff]
    %v118 = vld [vmem:[#allocation6 + $0xc0] sm:$0xff]
    %v119 = vld [vmem:[#allocation6 + $0xc8] sm:$0xff]
    %v120 = vld [vmem:[#allocation6 + $0xd0] sm:$0xff]
    %v121 = vld [vmem:[#allocation6 + $0xd8] sm:$0xff]
    %v122 = vld [vmem:[#allocation6 + $0xe0] sm:$0xff]
    %v123 = vld [vmem:[#allocation6 + $0xe8] sm:$0xff]
    %v124 = vld [vmem:[#allocation6 + $0xf0] sm:$0xff]
    %v125 = vld [vmem:[#allocation6 + $0xf8] sm:$0xff]
    %v126 = vld [vmem:[#allocation6 + $0x100] sm:$0xff]
    %v127 = vld [vmem:[#allocation6 + $0x108] sm:$0xff]
    %v128 = vld [vmem:[#allocation6 + $0x110] sm:$0xff]
    %v129 = vld [vmem:[#allocation6 + $0x118] sm:$0xff]
    %v130 = vld [vmem:[#allocation6 + $0x120] sm:$0xff]
    %v131 = vld [vmem:[#allocation6 + $0x128] sm:$0xff]
    %v132 = vld [vmem:[#allocation6 + $0x130] sm:$0xff]
    %v133 = vld [vmem:[#allocation6 + $0x138] sm:$0xff]
    %v134 = vld [vmem:[#allocation6 + $0x140] sm:$0xff]
    %v135 = vld [vmem:[#allocation6 + $0x148] sm:$0xff]
    %v136 = vld [vmem:[#allocation6 + $0x150] sm:$0xff]
    %v137 = vld [vmem:[#allocation6 + $0x158] sm:$0xff]
    %v138 = vld [vmem:[#allocation6 + $0x160] sm:$0xff]
    %v139 = vld [vmem:[#allocation6 + $0x168] sm:$0xff]
    %v140 = vld [vmem:[#allocation6 + $0x170] sm:$0xff]
    %v141 = vld [vmem:[#allocation6 + $0x178] sm:$0xff]
    %v142 = vld [vmem:[#allocation6 + $0x180] sm:$0xff]
    %v143 = vld [vmem:[#allocation6 + $0x188] sm:$0xff]
    %v144 = vld [vmem:[#allocation6 + $0x190] sm:$0xff]
    %v145 = vld [vmem:[#allocation6 + $0x198] sm:$0xff]
    %v146 = vld [vmem:[#allocation6 + $0x1a0] sm:$0xff]
    %v147 = vld [vmem:[#allocation6 + $0x1a8] sm:$0xff]
    %v148 = vld [vmem:[#allocation6 + $0x1b0] sm:$0xff]
    %v149 = vld [vmem:[#allocation6 + $0x1b8] sm:$0xff]
    %v150 = vld [vmem:[#allocation6 + $0x1c0] sm:$0xff]
    %v151 = vld [vmem:[#allocation6 + $0x1c8] sm:$0xff]
    %v152 = vld [vmem:[#allocation6 + $0x1d0] sm:$0xff]
    %v153 = vld [vmem:[#allocation6 + $0x1d8] sm:$0xff]
    %v154 = vld [vmem:[#allocation6 + $0x1e0] sm:$0xff]
    %v155 = vld [vmem:[#allocation6 + $0x1e8] sm:$0xff]
    %v156 = vld [vmem:[#allocation6 + $0x1f0] sm:$0xff]
    %v157 = vld [vmem:[#allocation6 + $0x1f8] sm:$0xff]
    %v158 = vld [vmem:[#allocation6 + $0x200] sm:$0xff]
    %v159 = vld [vmem:[#allocation6 + $0x208] sm:$0xff]
    %v160 = vld [vmem:[#allocation6 + $0x210] sm:$0xff]
    %v161 = vld [vmem:[#allocation6 + $0x218] sm:$0xff]
    %v162 = vld [vmem:[#allocation6 + $0x220] sm:$0xff]
    %v163 = vld [vmem:[#allocation6 + $0x228] sm:$0xff]
    %v164 = vld [vmem:[#allocation6 + $0x230] sm:$0xff]
    %v165 = vld [vmem:[#allocation6 + $0x238] sm:$0xff]
    %v166 = vld [vmem:[#allocation6 + $0x240] sm:$0xff]
    %v167 = vld [vmem:[#allocation6 + $0x248] sm:$0xff]
    %v168 = vld [vmem:[#allocation6 + $0x250] sm:$0xff]
    %v169 = vld [vmem:[#allocation6 + $0x258] sm:$0xff]
    %v170 = vld [vmem:[#allocation6 + $0x260] sm:$0xff]
    %v171 = vld [vmem:[#allocation6 + $0x268] sm:$0xff]
    %v172 = vld [vmem:[#allocation6 + $0x270] sm:$0xff]
    %v173 = vld [vmem:[#allocation6 + $0x278] sm:$0xff]
    %v174 = vld [vmem:[#allocation6 + $0x280] sm:$0xff]
    %v175 = vld [vmem:[#allocation6 + $0x288] sm:$0xff]
    %v176 = vld [vmem:[#allocation6 + $0x290] sm:$0xff]
    %v177 = vld [vmem:[#allocation6 + $0x298] sm:$0xff]
    %v178 = vld [vmem:[#allocation6 + $0x2a0] sm:$0xff]
    %v179 = vld [vmem:[#allocation6 + $0x2a8] sm:$0xff]
    %v180 = vld [vmem:[#allocation6 + $0x2b0] sm:$0xff]
    %v181 = vld [vmem:[#allocation6 + $0x2b8] sm:$0xff]
    %v182 = vld [vmem:[#allocation6 + $0x2c0] sm:$0xff]
    %v183 = vld [vmem:[#allocation6 + $0x2c8] sm:$0xff]
    %v184 = vld [vmem:[#allocation6 + $0x2d0] sm:$0xff]
    %v185 = vld [vmem:[#allocation6 + $0x2d8] sm:$0xff]
    %v186 = vld [vmem:[#allocation6 + $0x2e0] sm:$0xff]
    %v187 = vld [vmem:[#allocation6 + $0x2e8] sm:$0xff]
    %v188 = vld [vmem:[#allocation6 + $0x2f0] sm:$0xff]
    %v189 = vld [vmem:[#allocation6 + $0x2f8] sm:$0xff]
    %v190 = vld [vmem:[#allocation6 + $0x300] sm:$0xff]
    %v191 = vld [vmem:[#allocation6 + $0x308] sm:$0xff]
    %v192 = vld [vmem:[#allocation6 + $0x310] sm:$0xff]
    %v193 = vld [vmem:[#allocation6 + $0x318] sm:$0xff]
    %v194 = vld [vmem:[#allocation6 + $0x320] sm:$0xff]
    %v195 = vld [vmem:[#allocation6 + $0x328] sm:$0xff]
    %v196 = vld [vmem:[#allocation6 + $0x330] sm:$0xff]
    %v197 = vld [vmem:[#allocation6 + $0x338] sm:$0xff]
    %v198 = vld [vmem:[#allocation6 + $0x340] sm:$0xff]
    %v199 = vld [vmem:[#allocation6 + $0x348] sm:$0xff]
    %v200 = vld [vmem:[#allocation6 + $0x350] sm:$0xff]
    %v201 = vld [vmem:[#allocation6 + $0x358] sm:$0xff]
    %v202 = vld [vmem:[#allocation6 + $0x360] sm:$0xff]
    %v203 = vld [vmem:[#allocation6 + $0x368] sm:$0xff]
    %v204 = vld [vmem:[#allocation6 + $0x370] sm:$0xff]
    %v205 = vld [vmem:[#allocation6 + $0x378] sm:$0xff]
    %v206 = vld [vmem:[#allocation6 + $0x380] sm:$0xff]
    %v207 = vld [vmem:[#allocation6 + $0x388] sm:$0xff]
    %v208 = vld [vmem:[#allocation6 + $0x390] sm:$0xff]
    %v209 = vld [vmem:[#allocation6 + $0x398] sm:$0xff]
    %v210 = vld [vmem:[#allocation6 + $0x3a0] sm:$0xff]
    %v211 = vld [vmem:[#allocation6 + $0x3a8] sm:$0xff]
    %v212 = vld [vmem:[#allocation6 + $0x3b0] sm:$0xff]
    %v213 = vld [vmem:[#allocation6 + $0x3b8] sm:$0xff]
    %v214 = vld [vmem:[#allocation6 + $0x3c0] sm:$0xff]
    %v215 = vld [vmem:[#allocation6 + $0x3c8] sm:$0xff]
    %v216 = vld [vmem:[#allocation6 + $0x3d0] sm:$0xff]
    %v217 = vld [vmem:[#allocation6 + $0x3d8] sm:$0xff]
    %v218 = vld [vmem:[#allocation6 + $0x3e0] sm:$0xff]
    %v219 = vld [vmem:[#allocation6 + $0x3e8] sm:$0xff]
    %v220 = vld [vmem:[#allocation6 + $0x3f0] sm:$0xff]
    %v221 = vld [vmem:[#allocation6 + $0x3f8] sm:$0xff]
    %v222 = vld [vmem:[#allocation6 + $0x400] sm:$0xff]
    %v223 = vld [vmem:[#allocation6 + $0x408] sm:$0xff]
    %v224 = vld [vmem:[#allocation6 + $0x410] sm:$0xff]
    %v225 = vld [vmem:[#allocation6 + $0x418] sm:$0xff]
    %v226 = vld [vmem:[#allocation6 + $0x420] sm:$0xff]
    %v227 = vld [vmem:[#allocation6 + $0x428] sm:$0xff]
    %v228 = vld [vmem:[#allocation6 + $0x430] sm:$0xff]
    %v229 = vld [vmem:[#allocation6 + $0x438] sm:$0xff]
    %v230 = vld [vmem:[#allocation6 + $0x440] sm:$0xff]
    %v231 = vld [vmem:[#allocation6 + $0x448] sm:$0xff]
    %v232 = vld [vmem:[#allocation6 + $0x450] sm:$0xff]
    %v233 = vld [vmem:[#allocation6 + $0x458] sm:$0xff]
    %v234 = vld [vmem:[#allocation6 + $0x460] sm:$0xff]
    %v235 = vld [vmem:[#allocation6 + $0x468] sm:$0xff]
    %v236 = vld [vmem:[#allocation6 + $0x470] sm:$0xff]
    %v237 = vld [vmem:[#allocation6 + $0x478] sm:$0xff]
    %v238 = vld [vmem:[#allocation6 + $0x480] sm:$0xff]
    %v239 = vld [vmem:[#allocation6 + $0x488] sm:$0xff]
    %v240 = vld [vmem:[#allocation6 + $0x490] sm:$0xff]
    %v241 = vld [vmem:[#allocation6 + $0x498] sm:$0xff]
    %v242 = vld [vmem:[#allocation6 + $0x4a0] sm:$0xff]
    %v243 = vld [vmem:[#allocation6 + $0x4a8] sm:$0xff]
    %v244 = vld [vmem:[#allocation6 + $0x4b0] sm:$0xff]
    %v245 = vld [vmem:[#allocation6 + $0x4b8] sm:$0xff]
    %v246 = vld [vmem:[#allocation6 + $0x4c0] sm:$0xff]
    %v247 = vld [vmem:[#allocation6 + $0x4c8] sm:$0xff]
    %v248 = vld [vmem:[#allocation6 + $0x4d0] sm:$0xff]
    %v249 = vld [vmem:[#allocation6 + $0x4d8] sm:$0xff]
    %v250 = vld [vmem:[#allocation6 + $0x4e0] sm:$0xff]
    %v251 = vld [vmem:[#allocation6 + $0x4e8] sm:$0xff]
    %v252 = vld [vmem:[#allocation6 + $0x4f0] sm:$0xff]
    %v253 = vld [vmem:[#allocation6 + $0x4f8] sm:$0xff]
    %v254 = vld [vmem:[#allocation6 + $0x500] sm:$0xff]
    %v255 = vld [vmem:[#allocation6 + $0x508] sm:$0xff]
    %v256 = vld [vmem:[#allocation6 + $0x510] sm:$0xff]
    %v257 = vld [vmem:[#allocation6 + $0x518] sm:$0xff]
    %v258 = vld [vmem:[#allocation6 + $0x520] sm:$0xff]
    %v259 = vld [vmem:[#allocation6 + $0x528] sm:$0xff]
    %v260 = vld [vmem:[#allocation6 + $0x530] sm:$0xff]
    %v261 = vld [vmem:[#allocation6 + $0x538] sm:$0xff]
    %v262 = vld [vmem:[#allocation6 + $0x540] sm:$0xff]
    %v263 = vld [vmem:[#allocation6 + $0x548] sm:$0xff]
    %v264 = vld [vmem:[#allocation6 + $0x550] sm:$0xff]
    %v265 = vld [vmem:[#allocation6 + $0x558] sm:$0xff]
    %v266 = vld [vmem:[#allocation6 + $0x560] sm:$0xff]
    %v267 = vld [vmem:[#allocation6 + $0x568] sm:$0xff]
    %v268 = vld [vmem:[#allocation6 + $0x570] sm:$0xff]
    %v269 = vld [vmem:[#allocation6 + $0x578] sm:$0xff]
    %v270 = vld [vmem:[#allocation6 + $0x580] sm:$0xff]
    %v271 = vld [vmem:[#allocation6 + $0x588] sm:$0xff]
    %v272 = vld [vmem:[#allocation6 + $0x590] sm:$0xff]
    %v273 = vld [vmem:[#allocation6 + $0x598] sm:$0xff]
    %v274 = vld [vmem:[#allocation6 + $0x5a0] sm:$0xff]
    %v275 = vld [vmem:[#allocation6 + $0x5a8] sm:$0xff]
    %v276 = vld [vmem:[#allocation6 + $0x5b0] sm:$0xff]
    %v277 = vld [vmem:[#allocation6 + $0x5b8] sm:$0xff]
    %v278 = vld [vmem:[#allocation6 + $0x5c0] sm:$0xff]
    %v279 = vld [vmem:[#allocation6 + $0x5c8] sm:$0xff]
    %v280 = vld [vmem:[#allocation6 + $0x5d0] sm:$0xff]
    %v281 = vld [vmem:[#allocation6 + $0x5d8] sm:$0xff]
    %v282 = vld [vmem:[#allocation6 + $0x5e0] sm:$0xff]
    %v283 = vld [vmem:[#allocation6 + $0x5e8] sm:$0xff]
    %v284 = vld [vmem:[#allocation6 + $0x5f0] sm:$0xff]
    %v285 = vld [vmem:[#allocation6 + $0x5f8] sm:$0xff]
    %v286 = vld [vmem:[#allocation6 + $0x600] sm:$0xff]
    %v287 = vld [vmem:[#allocation6 + $0x608] sm:$0xff]
    %v288 = vld [vmem:[#allocation6 + $0x610] sm:$0xff]
    %v289 = vld [vmem:[#allocation6 + $0x618] sm:$0xff]
    %v290 = vld [vmem:[#allocation6 + $0x620] sm:$0xff]
    %v291 = vld [vmem:[#allocation6 + $0x628] sm:$0xff]
    %v292 = vld [vmem:[#allocation6 + $0x630] sm:$0xff]
    %v293 = vld [vmem:[#allocation6 + $0x638] sm:$0xff]
    %v294 = vld [vmem:[#allocation6 + $0x640] sm:$0xff]
    %v295 = vld [vmem:[#allocation6 + $0x648] sm:$0xff]
    %v296 = vld [vmem:[#allocation6 + $0x650] sm:$0xff]
    %v297 = vld [vmem:[#allocation6 + $0x658] sm:$0xff]
    %v298 = vld [vmem:[#allocation6 + $0x660] sm:$0xff]
    %v299 = vld [vmem:[#allocation6 + $0x668] sm:$0xff]
    %v300 = vld [vmem:[#allocation6 + $0x670] sm:$0xff]
    %v301 = vld [vmem:[#allocation6 + $0x678] sm:$0xff]
    %v302 = vld [vmem:[#allocation6 + $0x680] sm:$0xff]
    %v303 = vld [vmem:[#allocation6 + $0x688] sm:$0xff]
    %v304 = vld [vmem:[#allocation6 + $0x690] sm:$0xff]
    %v305 = vld [vmem:[#allocation6 + $0x698] sm:$0xff]
    %v306 = vld [vmem:[#allocation6 + $0x6a0] sm:$0xff]
    %v307 = vld [vmem:[#allocation6 + $0x6a8] sm:$0xff]
    %v308 = vld [vmem:[#allocation6 + $0x6b0] sm:$0xff]
    %v309 = vld [vmem:[#allocation6 + $0x6b8] sm:$0xff]
    %v310 = vld [vmem:[#allocation6 + $0x6c0] sm:$0xff]
    %v311 = vld [vmem:[#allocation6 + $0x6c8] sm:$0xff]
    %v312 = vld [vmem:[#allocation6 + $0x6d0] sm:$0xff]
    %v313 = vld [vmem:[#allocation6 + $0x6d8] sm:$0xff]
    %v314 = vld [vmem:[#allocation6 + $0x6e0] sm:$0xff]
    %v315 = vld [vmem:[#allocation6 + $0x6e8] sm:$0xff]
    %v316 = vld [vmem:[#allocation6 + $0x6f0] sm:$0xff]
    %v317 = vld [vmem:[#allocation6 + $0x6f8] sm:$0xff]
    %v318 = vld [vmem:[#allocation6 + $0x700] sm:$0xff]
    %v319 = vld [vmem:[#allocation6 + $0x708] sm:$0xff]
    %v320 = vld [vmem:[#allocation6 + $0x710] sm:$0xff]
    %v321 = vld [vmem:[#allocation6 + $0x718] sm:$0xff]
    %v322 = vld [vmem:[#allocation6 + $0x720] sm:$0xff]
    %v323 = vld [vmem:[#allocation6 + $0x728] sm:$0xff]
    %v324 = vld [vmem:[#allocation6 + $0x730] sm:$0xff]
    %v325 = vld [vmem:[#allocation6 + $0x738] sm:$0xff]
    %v326 = vld [vmem:[#allocation6 + $0x740] sm:$0xff]
    %v327 = vld [vmem:[#allocation6 + $0x748] sm:$0xff]
    %v328 = vld [vmem:[#allocation6 + $0x750] sm:$0xff]
    %v329 = vld [vmem:[#allocation6 + $0x758] sm:$0xff]
    %v330 = vld [vmem:[#allocation6 + $0x760] sm:$0xff]
    %v331 = vld [vmem:[#allocation6 + $0x768] sm:$0xff]
    %v332 = vld [vmem:[#allocation6 + $0x770] sm:$0xff]
    %v333 = vld [vmem:[#allocation6 + $0x778] sm:$0xff]
    %v334 = vld [vmem:[#allocation6 + $0x780] sm:$0xff]
    %v335 = vld [vmem:[#allocation6 + $0x788] sm:$0xff]
    %v336 = vld [vmem:[#allocation6 + $0x790] sm:$0xff]
    %v337 = vld [vmem:[#allocation6 + $0x798] sm:$0xff]
    %v338 = vld [vmem:[#allocation6 + $0x7a0] sm:$0xff]
    %v339 = vld [vmem:[#allocation6 + $0x7a8] sm:$0xff]
    %v340 = vld [vmem:[#allocation6 + $0x7b0] sm:$0xff]
    %v341 = vld [vmem:[#allocation6 + $0x7b8] sm:$0xff]
    %v342 = vld [vmem:[#allocation6 + $0x7c0] sm:$0xff]
    %v343 = vld [vmem:[#allocation6 + $0x7c8] sm:$0xff]
    %v344 = vld [vmem:[#allocation6 + $0x7d0] sm:$0xff]
    %v345 = vld [vmem:[#allocation6 + $0x7d8] sm:$0xff]
    %v346 = vld [vmem:[#allocation6 + $0x7e0] sm:$0xff]
    %v347 = vld [vmem:[#allocation6 + $0x7e8] sm:$0xff]
    %v348 = vld [vmem:[#allocation6 + $0x7f0] sm:$0xff]
    %v349 = vld [vmem:[#allocation6 + $0x7f8] sm:$0xff]
    %v606 = vunpack.c.l.b16 %v94
    %v607 = vunpack.c.h.b16 %v94
    %v608 = vunpack.c.l.b16 %v95
    %v609 = vunpack.c.h.b16 %v95
    %v610 = vunpack.c.l.b16 %v96
    %v611 = vunpack.c.h.b16 %v96
    %v612 = vunpack.c.l.b16 %v97
    %v613 = vunpack.c.h.b16 %v97
    %v614 = vunpack.c.l.b16 %v98
    %v615 = vunpack.c.h.b16 %v98
    %v616 = vunpack.c.l.b16 %v99
    %v617 = vunpack.c.h.b16 %v99
    %v618 = vunpack.c.l.b16 %v100
    %v619 = vunpack.c.h.b16 %v100
    %v620 = vunpack.c.l.b16 %v101
    %v621 = vunpack.c.h.b16 %v101
    %v622 = vunpack.c.l.b16 %v102
    %v623 = vunpack.c.h.b16 %v102
    %v624 = vunpack.c.l.b16 %v103
    %v625 = vunpack.c.h.b16 %v103
    %v626 = vunpack.c.l.b16 %v104
    %v627 = vunpack.c.h.b16 %v104
    %v628 = vunpack.c.l.b16 %v105
    %v629 = vunpack.c.h.b16 %v105
    %v630 = vunpack.c.l.b16 %v106
    %v631 = vunpack.c.h.b16 %v106
    %v632 = vunpack.c.l.b16 %v107
    %v633 = vunpack.c.h.b16 %v107
    %v634 = vunpack.c.l.b16 %v108
    %v635 = vunpack.c.h.b16 %v108
    %v636 = vunpack.c.l.b16 %v109
    %v637 = vunpack.c.h.b16 %v109
    %v638 = vunpack.c.l.b16 %v110
    %v639 = vunpack.c.h.b16 %v110
    %v640 = vunpack.c.l.b16 %v111
    %v641 = vunpack.c.h.b16 %v111
    %v642 = vunpack.c.l.b16 %v112
    %v643 = vunpack.c.h.b16 %v112
    %v644 = vunpack.c.l.b16 %v113
    %v645 = vunpack.c.h.b16 %v113
    %v646 = vunpack.c.l.b16 %v114
    %v647 = vunpack.c.h.b16 %v114
    %v648 = vunpack.c.l.b16 %v115
    %v649 = vunpack.c.h.b16 %v115
    %v650 = vunpack.c.l.b16 %v116
    %v651 = vunpack.c.h.b16 %v116
    %v652 = vunpack.c.l.b16 %v117
    %v653 = vunpack.c.h.b16 %v117
    %v654 = vunpack.c.l.b16 %v118
    %v655 = vunpack.c.h.b16 %v118
    %v656 = vunpack.c.l.b16 %v119
    %v657 = vunpack.c.h.b16 %v119
    %v658 = vunpack.c.l.b16 %v120
    %v659 = vunpack.c.h.b16 %v120
    %v660 = vunpack.c.l.b16 %v121
    %v661 = vunpack.c.h.b16 %v121
    %v662 = vunpack.c.l.b16 %v122
    %v663 = vunpack.c.h.b16 %v122
    %v664 = vunpack.c.l.b16 %v123
    %v665 = vunpack.c.h.b16 %v123
    %v666 = vunpack.c.l.b16 %v124
    %v667 = vunpack.c.h.b16 %v124
    %v668 = vunpack.c.l.b16 %v125
    %v669 = vunpack.c.h.b16 %v125
    %v670 = vunpack.c.l.b16 %v126
    %v671 = vunpack.c.h.b16 %v126
    %v672 = vunpack.c.l.b16 %v127
    %v673 = vunpack.c.h.b16 %v127
    %v674 = vunpack.c.l.b16 %v128
    %v675 = vunpack.c.h.b16 %v128
    %v676 = vunpack.c.l.b16 %v129
    %v677 = vunpack.c.h.b16 %v129
    %v678 = vunpack.c.l.b16 %v130
    %v679 = vunpack.c.h.b16 %v130
    %v680 = vunpack.c.l.b16 %v131
    %v681 = vunpack.c.h.b16 %v131
    %v682 = vunpack.c.l.b16 %v132
    %v683 = vunpack.c.h.b16 %v132
    %v684 = vunpack.c.l.b16 %v133
    %v685 = vunpack.c.h.b16 %v133
    %v686 = vunpack.c.l.b16 %v134
    %v687 = vunpack.c.h.b16 %v134
    %v688 = vunpack.c.l.b16 %v135
    %v689 = vunpack.c.h.b16 %v135
    %v690 = vunpack.c.l.b16 %v136
    %v691 = vunpack.c.h.b16 %v136
    %v692 = vunpack.c.l.b16 %v137
    %v693 = vunpack.c.h.b16 %v137
    %v694 = vunpack.c.l.b16 %v138
    %v695 = vunpack.c.h.b16 %v138
    %v696 = vunpack.c.l.b16 %v139
    %v697 = vunpack.c.h.b16 %v139
    %v698 = vunpack.c.l.b16 %v140
    %v699 = vunpack.c.h.b16 %v140
    %v700 = vunpack.c.l.b16 %v141
    %v701 = vunpack.c.h.b16 %v141
    %v702 = vunpack.c.l.b16 %v142
    %v703 = vunpack.c.h.b16 %v142
    %v704 = vunpack.c.l.b16 %v143
    %v705 = vunpack.c.h.b16 %v143
    %v706 = vunpack.c.l.b16 %v144
    %v707 = vunpack.c.h.b16 %v144
    %v708 = vunpack.c.l.b16 %v145
    %v709 = vunpack.c.h.b16 %v145
    %v710 = vunpack.c.l.b16 %v146
    %v711 = vunpack.c.h.b16 %v146
    %v712 = vunpack.c.l.b16 %v147
    %v713 = vunpack.c.h.b16 %v147
    %v714 = vunpack.c.l.b16 %v148
    %v715 = vunpack.c.h.b16 %v148
    %v716 = vunpack.c.l.b16 %v149
    %v717 = vunpack.c.h.b16 %v149
    %v718 = vunpack.c.l.b16 %v150
    %v719 = vunpack.c.h.b16 %v150
    %v720 = vunpack.c.l.b16 %v151
    %v721 = vunpack.c.h.b16 %v151
    %v722 = vunpack.c.l.b16 %v152
    %v723 = vunpack.c.h.b16 %v152
    %v724 = vunpack.c.l.b16 %v153
    %v725 = vunpack.c.h.b16 %v153
    %v726 = vunpack.c.l.b16 %v154
    %v727 = vunpack.c.h.b16 %v154
    %v728 = vunpack.c.l.b16 %v155
    %v729 = vunpack.c.h.b16 %v155
    %v730 = vunpack.c.l.b16 %v156
    %v731 = vunpack.c.h.b16 %v156
    %v732 = vunpack.c.l.b16 %v157
    %v733 = vunpack.c.h.b16 %v157
    %v734 = vunpack.c.l.b16 %v158
    %v735 = vunpack.c.h.b16 %v158
    %v736 = vunpack.c.l.b16 %v159
    %v737 = vunpack.c.h.b16 %v159
    %v738 = vunpack.c.l.b16 %v160
    %v739 = vunpack.c.h.b16 %v160
    %v740 = vunpack.c.l.b16 %v161
    %v741 = vunpack.c.h.b16 %v161
    %v742 = vunpack.c.l.b16 %v162
    %v743 = vunpack.c.h.b16 %v162
    %v744 = vunpack.c.l.b16 %v163
    %v745 = vunpack.c.h.b16 %v163
    %v746 = vunpack.c.l.b16 %v164
    %v747 = vunpack.c.h.b16 %v164
    %v748 = vunpack.c.l.b16 %v165
    %v749 = vunpack.c.h.b16 %v165
    %v750 = vunpack.c.l.b16 %v166
    %v751 = vunpack.c.h.b16 %v166
    %v752 = vunpack.c.l.b16 %v167
    %v753 = vunpack.c.h.b16 %v167
    %v754 = vunpack.c.l.b16 %v168
    %v755 = vunpack.c.h.b16 %v168
    %v756 = vunpack.c.l.b16 %v169
    %v757 = vunpack.c.h.b16 %v169
    %v758 = vunpack.c.l.b16 %v170
    %v759 = vunpack.c.h.b16 %v170
    %v760 = vunpack.c.l.b16 %v171
    %v761 = vunpack.c.h.b16 %v171
    %v762 = vunpack.c.l.b16 %v172
    %v763 = vunpack.c.h.b16 %v172
    %v764 = vunpack.c.l.b16 %v173
    %v765 = vunpack.c.h.b16 %v173
    %v766 = vunpack.c.l.b16 %v174
    %v767 = vunpack.c.h.b16 %v174
    %v768 = vunpack.c.l.b16 %v175
    %v769 = vunpack.c.h.b16 %v175
    %v770 = vunpack.c.l.b16 %v176
    %v771 = vunpack.c.h.b16 %v176
    %v772 = vunpack.c.l.b16 %v177
    %v773 = vunpack.c.h.b16 %v177
    %v774 = vunpack.c.l.b16 %v178
    %v775 = vunpack.c.h.b16 %v178
    %v776 = vunpack.c.l.b16 %v179
    %v777 = vunpack.c.h.b16 %v179
    %v778 = vunpack.c.l.b16 %v180
    %v779 = vunpack.c.h.b16 %v180
    %v780 = vunpack.c.l.b16 %v181
    %v781 = vunpack.c.h.b16 %v181
    %v782 = vunpack.c.l.b16 %v182
    %v783 = vunpack.c.h.b16 %v182
    %v784 = vunpack.c.l.b16 %v183
    %v785 = vunpack.c.h.b16 %v183
    %v786 = vunpack.c.l.b16 %v184
    %v787 = vunpack.c.h.b16 %v184
    %v788 = vunpack.c.l.b16 %v185
    %v789 = vunpack.c.h.b16 %v185
    %v790 = vunpack.c.l.b16 %v186
    %v791 = vunpack.c.h.b16 %v186
    %v792 = vunpack.c.l.b16 %v187
    %v793 = vunpack.c.h.b16 %v187
    %v794 = vunpack.c.l.b16 %v188
    %v795 = vunpack.c.h.b16 %v188
    %v796 = vunpack.c.l.b16 %v189
    %v797 = vunpack.c.h.b16 %v189
    %v798 = vunpack.c.l.b16 %v190
    %v799 = vunpack.c.h.b16 %v190
    %v800 = vunpack.c.l.b16 %v191
    %v801 = vunpack.c.h.b16 %v191
    %v802 = vunpack.c.l.b16 %v192
    %v803 = vunpack.c.h.b16 %v192
    %v804 = vunpack.c.l.b16 %v193
    %v805 = vunpack.c.h.b16 %v193
    %v806 = vunpack.c.l.b16 %v194
    %v807 = vunpack.c.h.b16 %v194
    %v808 = vunpack.c.l.b16 %v195
    %v809 = vunpack.c.h.b16 %v195
    %v810 = vunpack.c.l.b16 %v196
    %v811 = vunpack.c.h.b16 %v196
    %v812 = vunpack.c.l.b16 %v197
    %v813 = vunpack.c.h.b16 %v197
    %v814 = vunpack.c.l.b16 %v198
    %v815 = vunpack.c.h.b16 %v198
    %v816 = vunpack.c.l.b16 %v199
    %v817 = vunpack.c.h.b16 %v199
    %v818 = vunpack.c.l.b16 %v200
    %v819 = vunpack.c.h.b16 %v200
    %v820 = vunpack.c.l.b16 %v201
    %v821 = vunpack.c.h.b16 %v201
    %v822 = vunpack.c.l.b16 %v202
    %v823 = vunpack.c.h.b16 %v202
    %v824 = vunpack.c.l.b16 %v203
    %v825 = vunpack.c.h.b16 %v203
    %v826 = vunpack.c.l.b16 %v204
    %v827 = vunpack.c.h.b16 %v204
    %v828 = vunpack.c.l.b16 %v205
    %v829 = vunpack.c.h.b16 %v205
    %v830 = vunpack.c.l.b16 %v206
    %v831 = vunpack.c.h.b16 %v206
    %v832 = vunpack.c.l.b16 %v207
    %v833 = vunpack.c.h.b16 %v207
    %v834 = vunpack.c.l.b16 %v208
    %v835 = vunpack.c.h.b16 %v208
    %v836 = vunpack.c.l.b16 %v209
    %v837 = vunpack.c.h.b16 %v209
    %v838 = vunpack.c.l.b16 %v210
    %v839 = vunpack.c.h.b16 %v210
    %v840 = vunpack.c.l.b16 %v211
    %v841 = vunpack.c.h.b16 %v211
    %v842 = vunpack.c.l.b16 %v212
    %v843 = vunpack.c.h.b16 %v212
    %v844 = vunpack.c.l.b16 %v213
    %v845 = vunpack.c.h.b16 %v213
    %v846 = vunpack.c.l.b16 %v214
    %v847 = vunpack.c.h.b16 %v214
    %v848 = vunpack.c.l.b16 %v215
    %v849 = vunpack.c.h.b16 %v215
    %v850 = vunpack.c.l.b16 %v216
    %v851 = vunpack.c.h.b16 %v216
    %v852 = vunpack.c.l.b16 %v217
    %v853 = vunpack.c.h.b16 %v217
    %v854 = vunpack.c.l.b16 %v218
    %v855 = vunpack.c.h.b16 %v218
    %v856 = vunpack.c.l.b16 %v219
    %v857 = vunpack.c.h.b16 %v219
    %v858 = vunpack.c.l.b16 %v220
    %v859 = vunpack.c.h.b16 %v220
    %v860 = vunpack.c.l.b16 %v221
    %v861 = vunpack.c.h.b16 %v221
    %v862 = vunpack.c.l.b16 %v222
    %v863 = vunpack.c.h.b16 %v222
    %v864 = vunpack.c.l.b16 %v223
    %v865 = vunpack.c.h.b16 %v223
    %v866 = vunpack.c.l.b16 %v224
    %v867 = vunpack.c.h.b16 %v224
    %v868 = vunpack.c.l.b16 %v225
    %v869 = vunpack.c.h.b16 %v225
    %v870 = vunpack.c.l.b16 %v226
    %v871 = vunpack.c.h.b16 %v226
    %v872 = vunpack.c.l.b16 %v227
    %v873 = vunpack.c.h.b16 %v227
    %v874 = vunpack.c.l.b16 %v228
    %v875 = vunpack.c.h.b16 %v228
    %v876 = vunpack.c.l.b16 %v229
    %v877 = vunpack.c.h.b16 %v229
    %v878 = vunpack.c.l.b16 %v230
    %v879 = vunpack.c.h.b16 %v230
    %v880 = vunpack.c.l.b16 %v231
    %v881 = vunpack.c.h.b16 %v231
    %v882 = vunpack.c.l.b16 %v232
    %v883 = vunpack.c.h.b16 %v232
    %v884 = vunpack.c.l.b16 %v233
    %v885 = vunpack.c.h.b16 %v233
    %v886 = vunpack.c.l.b16 %v234
    %v887 = vunpack.c.h.b16 %v234
    %v888 = vunpack.c.l.b16 %v235
    %v889 = vunpack.c.h.b16 %v235
    %v890 = vunpack.c.l.b16 %v236
    %v891 = vunpack.c.h.b16 %v236
    %v892 = vunpack.c.l.b16 %v237
    %v893 = vunpack.c.h.b16 %v237
    %v894 = vunpack.c.l.b16 %v238
    %v895 = vunpack.c.h.b16 %v238
    %v896 = vunpack.c.l.b16 %v239
    %v897 = vunpack.c.h.b16 %v239
    %v898 = vunpack.c.l.b16 %v240
    %v899 = vunpack.c.h.b16 %v240
    %v900 = vunpack.c.l.b16 %v241
    %v901 = vunpack.c.h.b16 %v241
    %v902 = vunpack.c.l.b16 %v242
    %v903 = vunpack.c.h.b16 %v242
    %v904 = vunpack.c.l.b16 %v243
    %v905 = vunpack.c.h.b16 %v243
    %v906 = vunpack.c.l.b16 %v244
    %v907 = vunpack.c.h.b16 %v244
    %v908 = vunpack.c.l.b16 %v245
    %v909 = vunpack.c.h.b16 %v245
    %v910 = vunpack.c.l.b16 %v246
    %v911 = vunpack.c.h.b16 %v246
    %v912 = vunpack.c.l.b16 %v247
    %v913 = vunpack.c.h.b16 %v247
    %v914 = vunpack.c.l.b16 %v248
    %v915 = vunpack.c.h.b16 %v248
    %v916 = vunpack.c.l.b16 %v249
    %v917 = vunpack.c.h.b16 %v249
    %v918 = vunpack.c.l.b16 %v250
    %v919 = vunpack.c.h.b16 %v250
    %v920 = vunpack.c.l.b16 %v251
    %v921 = vunpack.c.h.b16 %v251
    %v922 = vunpack.c.l.b16 %v252
    %v923 = vunpack.c.h.b16 %v252
    %v924 = vunpack.c.l.b16 %v253
    %v925 = vunpack.c.h.b16 %v253
    %v926 = vunpack.c.l.b16 %v254
    %v927 = vunpack.c.h.b16 %v254
    %v928 = vunpack.c.l.b16 %v255
    %v929 = vunpack.c.h.b16 %v255
    %v930 = vunpack.c.l.b16 %v256
    %v931 = vunpack.c.h.b16 %v256
    %v932 = vunpack.c.l.b16 %v257
    %v933 = vunpack.c.h.b16 %v257
    %v934 = vunpack.c.l.b16 %v258
    %v935 = vunpack.c.h.b16 %v258
    %v936 = vunpack.c.l.b16 %v259
    %v937 = vunpack.c.h.b16 %v259
    %v938 = vunpack.c.l.b16 %v260
    %v939 = vunpack.c.h.b16 %v260
    %v940 = vunpack.c.l.b16 %v261
    %v941 = vunpack.c.h.b16 %v261
    %v942 = vunpack.c.l.b16 %v262
    %v943 = vunpack.c.h.b16 %v262
    %v944 = vunpack.c.l.b16 %v263
    %v945 = vunpack.c.h.b16 %v263
    %v946 = vunpack.c.l.b16 %v264
    %v947 = vunpack.c.h.b16 %v264
    %v948 = vunpack.c.l.b16 %v265
    %v949 = vunpack.c.h.b16 %v265
    %v950 = vunpack.c.l.b16 %v266
    %v951 = vunpack.c.h.b16 %v266
    %v952 = vunpack.c.l.b16 %v267
    %v953 = vunpack.c.h.b16 %v267
    %v954 = vunpack.c.l.b16 %v268
    %v955 = vunpack.c.h.b16 %v268
    %v956 = vunpack.c.l.b16 %v269
    %v957 = vunpack.c.h.b16 %v269
    %v958 = vunpack.c.l.b16 %v270
    %v959 = vunpack.c.h.b16 %v270
    %v960 = vunpack.c.l.b16 %v271
    %v961 = vunpack.c.h.b16 %v271
    %v962 = vunpack.c.l.b16 %v272
    %v963 = vunpack.c.h.b16 %v272
    %v964 = vunpack.c.l.b16 %v273
    %v965 = vunpack.c.h.b16 %v273
    %v966 = vunpack.c.l.b16 %v274
    %v967 = vunpack.c.h.b16 %v274
    %v968 = vunpack.c.l.b16 %v275
    %v969 = vunpack.c.h.b16 %v275
    %v970 = vunpack.c.l.b16 %v276
    %v971 = vunpack.c.h.b16 %v276
    %v972 = vunpack.c.l.b16 %v277
    %v973 = vunpack.c.h.b16 %v277
    %v974 = vunpack.c.l.b16 %v278
    %v975 = vunpack.c.h.b16 %v278
    %v976 = vunpack.c.l.b16 %v279
    %v977 = vunpack.c.h.b16 %v279
    %v978 = vunpack.c.l.b16 %v280
    %v979 = vunpack.c.h.b16 %v280
    %v980 = vunpack.c.l.b16 %v281
    %v981 = vunpack.c.h.b16 %v281
    %v982 = vunpack.c.l.b16 %v282
    %v983 = vunpack.c.h.b16 %v282
    %v984 = vunpack.c.l.b16 %v283
    %v985 = vunpack.c.h.b16 %v283
    %v986 = vunpack.c.l.b16 %v284
    %v987 = vunpack.c.h.b16 %v284
    %v988 = vunpack.c.l.b16 %v285
    %v989 = vunpack.c.h.b16 %v285
    %v990 = vunpack.c.l.b16 %v286
    %v991 = vunpack.c.h.b16 %v286
    %v992 = vunpack.c.l.b16 %v287
    %v993 = vunpack.c.h.b16 %v287
    %v994 = vunpack.c.l.b16 %v288
    %v995 = vunpack.c.h.b16 %v288
    %v996 = vunpack.c.l.b16 %v289
    %v997 = vunpack.c.h.b16 %v289
    %v998 = vunpack.c.l.b16 %v290
    %v999 = vunpack.c.h.b16 %v290
    %v1000 = vunpack.c.l.b16 %v291
    %v1001 = vunpack.c.h.b16 %v291
    %v1002 = vunpack.c.l.b16 %v292
    %v1003 = vunpack.c.h.b16 %v292
    %v1004 = vunpack.c.l.b16 %v293
    %v1005 = vunpack.c.h.b16 %v293
    %v1006 = vunpack.c.l.b16 %v294
    %v1007 = vunpack.c.h.b16 %v294
    %v1008 = vunpack.c.l.b16 %v295
    %v1009 = vunpack.c.h.b16 %v295
    %v1010 = vunpack.c.l.b16 %v296
    %v1011 = vunpack.c.h.b16 %v296
    %v1012 = vunpack.c.l.b16 %v297
    %v1013 = vunpack.c.h.b16 %v297
    %v1014 = vunpack.c.l.b16 %v298
    %v1015 = vunpack.c.h.b16 %v298
    %v1016 = vunpack.c.l.b16 %v299
    %v1017 = vunpack.c.h.b16 %v299
    %v1018 = vunpack.c.l.b16 %v300
    %v1019 = vunpack.c.h.b16 %v300
    %v1020 = vunpack.c.l.b16 %v301
    %v1021 = vunpack.c.h.b16 %v301
    %v1022 = vunpack.c.l.b16 %v302
    %v1023 = vunpack.c.h.b16 %v302
    %v1024 = vunpack.c.l.b16 %v303
    %v1025 = vunpack.c.h.b16 %v303
    %v1026 = vunpack.c.l.b16 %v304
    %v1027 = vunpack.c.h.b16 %v304
    %v1028 = vunpack.c.l.b16 %v305
    %v1029 = vunpack.c.h.b16 %v305
    %v1030 = vunpack.c.l.b16 %v306
    %v1031 = vunpack.c.h.b16 %v306
    %v1032 = vunpack.c.l.b16 %v307
    %v1033 = vunpack.c.h.b16 %v307
    %v1034 = vunpack.c.l.b16 %v308
    %v1035 = vunpack.c.h.b16 %v308
    %v1036 = vunpack.c.l.b16 %v309
    %v1037 = vunpack.c.h.b16 %v309
    %v1038 = vunpack.c.l.b16 %v310
    %v1039 = vunpack.c.h.b16 %v310
    %v1040 = vunpack.c.l.b16 %v311
    %v1041 = vunpack.c.h.b16 %v311
    %v1042 = vunpack.c.l.b16 %v312
    %v1043 = vunpack.c.h.b16 %v312
    %v1044 = vunpack.c.l.b16 %v313
    %v1045 = vunpack.c.h.b16 %v313
    %v1046 = vunpack.c.l.b16 %v314
    %v1047 = vunpack.c.h.b16 %v314
    %v1048 = vunpack.c.l.b16 %v315
    %v1049 = vunpack.c.h.b16 %v315
    %v1050 = vunpack.c.l.b16 %v316
    %v1051 = vunpack.c.h.b16 %v316
    %v1052 = vunpack.c.l.b16 %v317
    %v1053 = vunpack.c.h.b16 %v317
    %v1054 = vunpack.c.l.b16 %v318
    %v1055 = vunpack.c.h.b16 %v318
    %v1056 = vunpack.c.l.b16 %v319
    %v1057 = vunpack.c.h.b16 %v319
    %v1058 = vunpack.c.l.b16 %v320
    %v1059 = vunpack.c.h.b16 %v320
    %v1060 = vunpack.c.l.b16 %v321
    %v1061 = vunpack.c.h.b16 %v321
    %v1062 = vunpack.c.l.b16 %v322
    %v1063 = vunpack.c.h.b16 %v322
    %v1064 = vunpack.c.l.b16 %v323
    %v1065 = vunpack.c.h.b16 %v323
    %v1066 = vunpack.c.l.b16 %v324
    %v1067 = vunpack.c.h.b16 %v324
    %v1068 = vunpack.c.l.b16 %v325
    %v1069 = vunpack.c.h.b16 %v325
    %v1070 = vunpack.c.l.b16 %v326
    %v1071 = vunpack.c.h.b16 %v326
    %v1072 = vunpack.c.l.b16 %v327
    %v1073 = vunpack.c.h.b16 %v327
    %v1074 = vunpack.c.l.b16 %v328
    %v1075 = vunpack.c.h.b16 %v328
    %v1076 = vunpack.c.l.b16 %v329
    %v1077 = vunpack.c.h.b16 %v329
    %v1078 = vunpack.c.l.b16 %v330
    %v1079 = vunpack.c.h.b16 %v330
    %v1080 = vunpack.c.l.b16 %v331
    %v1081 = vunpack.c.h.b16 %v331
    %v1082 = vunpack.c.l.b16 %v332
    %v1083 = vunpack.c.h.b16 %v332
    %v1084 = vunpack.c.l.b16 %v333
    %v1085 = vunpack.c.h.b16 %v333
    %v1086 = vunpack.c.l.b16 %v334
    %v1087 = vunpack.c.h.b16 %v334
    %v1088 = vunpack.c.l.b16 %v335
    %v1089 = vunpack.c.h.b16 %v335
    %v1090 = vunpack.c.l.b16 %v336
    %v1091 = vunpack.c.h.b16 %v336
    %v1092 = vunpack.c.l.b16 %v337
    %v1093 = vunpack.c.h.b16 %v337
    %v1094 = vunpack.c.l.b16 %v338
    %v1095 = vunpack.c.h.b16 %v338
    %v1096 = vunpack.c.l.b16 %v339
    %v1097 = vunpack.c.h.b16 %v339
    %v1098 = vunpack.c.l.b16 %v340
    %v1099 = vunpack.c.h.b16 %v340
    %v1100 = vunpack.c.l.b16 %v341
    %v1101 = vunpack.c.h.b16 %v341
    %v1102 = vunpack.c.l.b16 %v342
    %v1103 = vunpack.c.h.b16 %v342
    %v1104 = vunpack.c.l.b16 %v343
    %v1105 = vunpack.c.h.b16 %v343
    %v1106 = vunpack.c.l.b16 %v344
    %v1107 = vunpack.c.h.b16 %v344
    %v1108 = vunpack.c.l.b16 %v345
    %v1109 = vunpack.c.h.b16 %v345
    %v1110 = vunpack.c.l.b16 %v346
    %v1111 = vunpack.c.h.b16 %v346
    %v1112 = vunpack.c.l.b16 %v347
    %v1113 = vunpack.c.h.b16 %v347
    %v1114 = vunpack.c.l.b16 %v348
    %v1115 = vunpack.c.h.b16 %v348
    %v1116 = vunpack.c.l.b16 %v349
    %v1117 = vunpack.c.h.b16 %v349
    %v1118 = vpack.c.b16 %v610, %v606
    %v1119 = vpack.c.b16 %v611, %v607
    %v1120 = vpack.c.b16 %v612, %v608
    %v1121 = vpack.c.b16 %v613, %v609
    %v1122 = vpack.c.b16 %v618, %v614
    %v1123 = vpack.c.b16 %v619, %v615
    %v1124 = vpack.c.b16 %v620, %v616
    %v1125 = vpack.c.b16 %v621, %v617
    %v1126 = vpack.c.b16 %v626, %v622
    %v1127 = vpack.c.b16 %v627, %v623
    %v1128 = vpack.c.b16 %v628, %v624
    %v1129 = vpack.c.b16 %v629, %v625
    %v1130 = vpack.c.b16 %v634, %v630
    %v1131 = vpack.c.b16 %v635, %v631
    %v1132 = vpack.c.b16 %v636, %v632
    %v1133 = vpack.c.b16 %v637, %v633
    %v1134 = vpack.c.b16 %v642, %v638
    %v1135 = vpack.c.b16 %v643, %v639
    %v1136 = vpack.c.b16 %v644, %v640
    %v1137 = vpack.c.b16 %v645, %v641
    %v1138 = vpack.c.b16 %v650, %v646
    %v1139 = vpack.c.b16 %v651, %v647
    %v1140 = vpack.c.b16 %v652, %v648
    %v1141 = vpack.c.b16 %v653, %v649
    %v1142 = vpack.c.b16 %v658, %v654
    %v1143 = vpack.c.b16 %v659, %v655
    %v1144 = vpack.c.b16 %v660, %v656
    %v1145 = vpack.c.b16 %v661, %v657
    %v1146 = vpack.c.b16 %v666, %v662
    %v1147 = vpack.c.b16 %v667, %v663
    %v1148 = vpack.c.b16 %v668, %v664
    %v1149 = vpack.c.b16 %v669, %v665
    %v1150 = vpack.c.b16 %v674, %v670
    %v1151 = vpack.c.b16 %v675, %v671
    %v1152 = vpack.c.b16 %v676, %v672
    %v1153 = vpack.c.b16 %v677, %v673
    %v1154 = vpack.c.b16 %v682, %v678
    %v1155 = vpack.c.b16 %v683, %v679
    %v1156 = vpack.c.b16 %v684, %v680
    %v1157 = vpack.c.b16 %v685, %v681
    %v1158 = vpack.c.b16 %v690, %v686
    %v1159 = vpack.c.b16 %v691, %v687
    %v1160 = vpack.c.b16 %v692, %v688
    %v1161 = vpack.c.b16 %v693, %v689
    %v1162 = vpack.c.b16 %v698, %v694
    %v1163 = vpack.c.b16 %v699, %v695
    %v1164 = vpack.c.b16 %v700, %v696
    %v1165 = vpack.c.b16 %v701, %v697
    %v1166 = vpack.c.b16 %v706, %v702
    %v1167 = vpack.c.b16 %v707, %v703
    %v1168 = vpack.c.b16 %v708, %v704
    %v1169 = vpack.c.b16 %v709, %v705
    %v1170 = vpack.c.b16 %v714, %v710
    %v1171 = vpack.c.b16 %v715, %v711
    %v1172 = vpack.c.b16 %v716, %v712
    %v1173 = vpack.c.b16 %v717, %v713
    %v1174 = vpack.c.b16 %v722, %v718
    %v1175 = vpack.c.b16 %v723, %v719
    %v1176 = vpack.c.b16 %v724, %v720
    %v1177 = vpack.c.b16 %v725, %v721
    %v1178 = vpack.c.b16 %v730, %v726
    %v1179 = vpack.c.b16 %v731, %v727
    %v1180 = vpack.c.b16 %v732, %v728
    %v1181 = vpack.c.b16 %v733, %v729
    %v1182 = vpack.c.b16 %v738, %v734
    %v1183 = vpack.c.b16 %v739, %v735
    %v1184 = vpack.c.b16 %v740, %v736
    %v1185 = vpack.c.b16 %v741, %v737
    %v1186 = vpack.c.b16 %v746, %v742
    %v1187 = vpack.c.b16 %v747, %v743
    %v1188 = vpack.c.b16 %v748, %v744
    %v1189 = vpack.c.b16 %v749, %v745
    %v1190 = vpack.c.b16 %v754, %v750
    %v1191 = vpack.c.b16 %v755, %v751
    %v1192 = vpack.c.b16 %v756, %v752
    %v1193 = vpack.c.b16 %v757, %v753
    %v1194 = vpack.c.b16 %v762, %v758
    %v1195 = vpack.c.b16 %v763, %v759
    %v1196 = vpack.c.b16 %v764, %v760
    %v1197 = vpack.c.b16 %v765, %v761
    %v1198 = vpack.c.b16 %v770, %v766
    %v1199 = vpack.c.b16 %v771, %v767
    %v1200 = vpack.c.b16 %v772, %v768
    %v1201 = vpack.c.b16 %v773, %v769
    %v1202 = vpack.c.b16 %v778, %v774
    %v1203 = vpack.c.b16 %v779, %v775
    %v1204 = vpack.c.b16 %v780, %v776
    %v1205 = vpack.c.b16 %v781, %v777
    %v1206 = vpack.c.b16 %v786, %v782
    %v1207 = vpack.c.b16 %v787, %v783
    %v1208 = vpack.c.b16 %v788, %v784
    %v1209 = vpack.c.b16 %v789, %v785
    %v1210 = vpack.c.b16 %v794, %v790
    %v1211 = vpack.c.b16 %v795, %v791
    %v1212 = vpack.c.b16 %v796, %v792
    %v1213 = vpack.c.b16 %v797, %v793
    %v1214 = vpack.c.b16 %v802, %v798
    %v1215 = vpack.c.b16 %v803, %v799
    %v1216 = vpack.c.b16 %v804, %v800
    %v1217 = vpack.c.b16 %v805, %v801
    %v1218 = vpack.c.b16 %v810, %v806
    %v1219 = vpack.c.b16 %v811, %v807
    %v1220 = vpack.c.b16 %v812, %v808
    %v1221 = vpack.c.b16 %v813, %v809
    %v1222 = vpack.c.b16 %v818, %v814
    %v1223 = vpack.c.b16 %v819, %v815
    %v1224 = vpack.c.b16 %v820, %v816
    %v1225 = vpack.c.b16 %v821, %v817
    %v1226 = vpack.c.b16 %v826, %v822
    %v1227 = vpack.c.b16 %v827, %v823
    %v1228 = vpack.c.b16 %v828, %v824
    %v1229 = vpack.c.b16 %v829, %v825
    %v1230 = vpack.c.b16 %v834, %v830
    %v1231 = vpack.c.b16 %v835, %v831
    %v1232 = vpack.c.b16 %v836, %v832
    %v1233 = vpack.c.b16 %v837, %v833
    %v1234 = vpack.c.b16 %v842, %v838
    %v1235 = vpack.c.b16 %v843, %v839
    %v1236 = vpack.c.b16 %v844, %v840
    %v1237 = vpack.c.b16 %v845, %v841
    %v1238 = vpack.c.b16 %v850, %v846
    %v1239 = vpack.c.b16 %v851, %v847
    %v1240 = vpack.c.b16 %v852, %v848
    %v1241 = vpack.c.b16 %v853, %v849
    %v1242 = vpack.c.b16 %v858, %v854
    %v1243 = vpack.c.b16 %v859, %v855
    %v1244 = vpack.c.b16 %v860, %v856
    %v1245 = vpack.c.b16 %v861, %v857
    %v1246 = vpack.c.b16 %v866, %v862
    %v1247 = vpack.c.b16 %v867, %v863
    %v1248 = vpack.c.b16 %v868, %v864
    %v1249 = vpack.c.b16 %v869, %v865
    %v1250 = vpack.c.b16 %v874, %v870
    %v1251 = vpack.c.b16 %v875, %v871
    %v1252 = vpack.c.b16 %v876, %v872
    %v1253 = vpack.c.b16 %v877, %v873
    %v1254 = vpack.c.b16 %v882, %v878
    %v1255 = vpack.c.b16 %v883, %v879
    %v1256 = vpack.c.b16 %v884, %v880
    %v1257 = vpack.c.b16 %v885, %v881
    %v1258 = vpack.c.b16 %v890, %v886
    %v1259 = vpack.c.b16 %v891, %v887
    %v1260 = vpack.c.b16 %v892, %v888
    %v1261 = vpack.c.b16 %v893, %v889
    %v1262 = vpack.c.b16 %v898, %v894
    %v1263 = vpack.c.b16 %v899, %v895
    %v1264 = vpack.c.b16 %v900, %v896
    %v1265 = vpack.c.b16 %v901, %v897
    %v1266 = vpack.c.b16 %v906, %v902
    %v1267 = vpack.c.b16 %v907, %v903
    %v1268 = vpack.c.b16 %v908, %v904
    %v1269 = vpack.c.b16 %v909, %v905
    %v1270 = vpack.c.b16 %v914, %v910
    %v1271 = vpack.c.b16 %v915, %v911
    %v1272 = vpack.c.b16 %v916, %v912
    %v1273 = vpack.c.b16 %v917, %v913
    %v1274 = vpack.c.b16 %v922, %v918
    %v1275 = vpack.c.b16 %v923, %v919
    %v1276 = vpack.c.b16 %v924, %v920
    %v1277 = vpack.c.b16 %v925, %v921
    %v1278 = vpack.c.b16 %v930, %v926
    %v1279 = vpack.c.b16 %v931, %v927
    %v1280 = vpack.c.b16 %v932, %v928
    %v1281 = vpack.c.b16 %v933, %v929
    %v1282 = vpack.c.b16 %v938, %v934
    %v1283 = vpack.c.b16 %v939, %v935
    %v1284 = vpack.c.b16 %v940, %v936
    %v1285 = vpack.c.b16 %v941, %v937
    %v1286 = vpack.c.b16 %v946, %v942
    %v1287 = vpack.c.b16 %v947, %v943
    %v1288 = vpack.c.b16 %v948, %v944
    %v1289 = vpack.c.b16 %v949, %v945
    %v1290 = vpack.c.b16 %v954, %v950
    %v1291 = vpack.c.b16 %v955, %v951
    %v1292 = vpack.c.b16 %v956, %v952
    %v1293 = vpack.c.b16 %v957, %v953
    %v1294 = vpack.c.b16 %v962, %v958
    %v1295 = vpack.c.b16 %v963, %v959
    %v1296 = vpack.c.b16 %v964, %v960
    %v1297 = vpack.c.b16 %v965, %v961
    %v1298 = vpack.c.b16 %v970, %v966
    %v1299 = vpack.c.b16 %v971, %v967
    %v1300 = vpack.c.b16 %v972, %v968
    %v1301 = vpack.c.b16 %v973, %v969
    %v1302 = vpack.c.b16 %v978, %v974
    %v1303 = vpack.c.b16 %v979, %v975
    %v1304 = vpack.c.b16 %v980, %v976
    %v1305 = vpack.c.b16 %v981, %v977
    %v1306 = vpack.c.b16 %v986, %v982
    %v1307 = vpack.c.b16 %v987, %v983
    %v1308 = vpack.c.b16 %v988, %v984
    %v1309 = vpack.c.b16 %v989, %v985
    %v1310 = vpack.c.b16 %v994, %v990
    %v1311 = vpack.c.b16 %v995, %v991
    %v1312 = vpack.c.b16 %v996, %v992
    %v1313 = vpack.c.b16 %v997, %v993
    %v1314 = vpack.c.b16 %v1002, %v998
    %v1315 = vpack.c.b16 %v1003, %v999
    %v1316 = vpack.c.b16 %v1004, %v1000
    %v1317 = vpack.c.b16 %v1005, %v1001
    %v1318 = vpack.c.b16 %v1010, %v1006
    %v1319 = vpack.c.b16 %v1011, %v1007
    %v1320 = vpack.c.b16 %v1012, %v1008
    %v1321 = vpack.c.b16 %v1013, %v1009
    %v1322 = vpack.c.b16 %v1018, %v1014
    %v1323 = vpack.c.b16 %v1019, %v1015
    %v1324 = vpack.c.b16 %v1020, %v1016
    %v1325 = vpack.c.b16 %v1021, %v1017
    %v1326 = vpack.c.b16 %v1026, %v1022
    %v1327 = vpack.c.b16 %v1027, %v1023
    %v1328 = vpack.c.b16 %v1028, %v1024
    %v1329 = vpack.c.b16 %v1029, %v1025
    %v1330 = vpack.c.b16 %v1034, %v1030
    %v1331 = vpack.c.b16 %v1035, %v1031
    %v1332 = vpack.c.b16 %v1036, %v1032
    %v1333 = vpack.c.b16 %v1037, %v1033
    %v1334 = vpack.c.b16 %v1042, %v1038
    %v1335 = vpack.c.b16 %v1043, %v1039
    %v1336 = vpack.c.b16 %v1044, %v1040
    %v1337 = vpack.c.b16 %v1045, %v1041
    %v1338 = vpack.c.b16 %v1050, %v1046
    %v1339 = vpack.c.b16 %v1051, %v1047
    %v1340 = vpack.c.b16 %v1052, %v1048
    %v1341 = vpack.c.b16 %v1053, %v1049
    %v1342 = vpack.c.b16 %v1058, %v1054
    %v1343 = vpack.c.b16 %v1059, %v1055
    %v1344 = vpack.c.b16 %v1060, %v1056
    %v1345 = vpack.c.b16 %v1061, %v1057
    %v1346 = vpack.c.b16 %v1066, %v1062
    %v1347 = vpack.c.b16 %v1067, %v1063
    %v1348 = vpack.c.b16 %v1068, %v1064
    %v1349 = vpack.c.b16 %v1069, %v1065
    %v1350 = vpack.c.b16 %v1074, %v1070
    %v1351 = vpack.c.b16 %v1075, %v1071
    %v1352 = vpack.c.b16 %v1076, %v1072
    %v1353 = vpack.c.b16 %v1077, %v1073
    %v1354 = vpack.c.b16 %v1082, %v1078
    %v1355 = vpack.c.b16 %v1083, %v1079
    %v1356 = vpack.c.b16 %v1084, %v1080
    %v1357 = vpack.c.b16 %v1085, %v1081
    %v1358 = vpack.c.b16 %v1090, %v1086
    %v1359 = vpack.c.b16 %v1091, %v1087
    %v1360 = vpack.c.b16 %v1092, %v1088
    %v1361 = vpack.c.b16 %v1093, %v1089
    %v1362 = vpack.c.b16 %v1098, %v1094
    %v1363 = vpack.c.b16 %v1099, %v1095
    %v1364 = vpack.c.b16 %v1100, %v1096
    %v1365 = vpack.c.b16 %v1101, %v1097
    %v1366 = vpack.c.b16 %v1106, %v1102
    %v1367 = vpack.c.b16 %v1107, %v1103
    %v1368 = vpack.c.b16 %v1108, %v1104
    %v1369 = vpack.c.b16 %v1109, %v1105
    %v1370 = vpack.c.b16 %v1114, %v1110
    %v1371 = vpack.c.b16 %v1115, %v1111
    %v1372 = vpack.c.b16 %v1116, %v1112
    %v1373 = vpack.c.b16 %v1117, %v1113
    %1630 = vmatprep.subr.bf16.mxu0 %v1147
    %1631 = vmatpush1.bf16.msra.mxu0 %v1146
    %1632 = vmatprep.subr.bf16.mxu0 %v1143
    %1633 = vmatpush1.bf16.msra.mxu0 %v1142
    %1634 = vmatprep.subr.bf16.mxu0 %v1139
    %1635 = vmatpush1.bf16.msra.mxu0 %v1138
    %1636 = vmatprep.subr.bf16.mxu0 %v1135
    %1637 = vmatpush1.bf16.msra.mxu0 %v1134
    %1638 = vmatprep.subr.bf16.mxu0 %v1131
    %1639 = vmatpush1.bf16.msra.mxu0 %v1130
    %1640 = vmatprep.subr.bf16.mxu0 %v1127
    %1641 = vmatpush1.bf16.msra.mxu0 %v1126
    %1642 = vmatprep.subr.bf16.mxu0 %v1123
    %1643 = vmatpush1.bf16.msra.mxu0 %v1122
    %1644 = vmatprep.subr.bf16.mxu0 %v1119
    %1645 = vmatpush1.bf16.msra.mxu0 %v1118
    %1646 = vmatprep.subr.bf16.mxu0 %v1179
    %1647 = vmatpush2.bf16.msra.mxu0 %v1178
    %1648 = vmatprep.subr.bf16.mxu0 %v1175
    %1649 = vmatpush2.bf16.msra.mxu0 %v1174
    %1650 = vmatprep.subr.bf16.mxu0 %v1171
    %1651 = vmatpush2.bf16.msra.mxu0 %v1170
    %1652 = vmatprep.subr.bf16.mxu0 %v1167
    %1653 = vmatpush2.bf16.msra.mxu0 %v1166
    %1654 = vmatprep.subr.bf16.mxu0 %v1163
    %1655 = vmatpush2.bf16.msra.mxu0 %v1162
    %1656 = vmatprep.subr.bf16.mxu0 %v1159
    %1657 = vmatpush2.bf16.msra.mxu0 %v1158
    %1658 = vmatprep.subr.bf16.mxu0 %v1155
    %1659 = vmatpush2.bf16.msra.mxu0 %v1154
    %1660 = vmatprep.subr.bf16.mxu0 %v1151
    %1661 = vmatpush2.bf16.msra.mxu0 %v1150
    %1662 = vmatprep.mubr.bf16.mxu0 %v83
    %1663 = vmatmul.mubr.bf16.gmra.mxu0 %v82
    %v1664 = vpop.f32.mrf.mxu0
    %v1665 = vadd.f32 0.0, %v1664
    %v1666 = vpop.f32.mrf.mxu0
    %v1667 = vadd.f32 0.0, %v1666
    %v1668 = vpop.f32.mrf.mxu0
    %v1669 = vpop.f32.mrf.mxu0
    %1670 = vdwg.mxu0
    %1671 = vmatprep.subr.bf16.mxu0 %v1211
    %1672 = vmatpush1.bf16.msra.mxu0 %v1210
    %1673 = vmatprep.subr.bf16.mxu0 %v1207
    %1674 = vmatpush1.bf16.msra.mxu0 %v1206
    %1675 = vmatprep.subr.bf16.mxu0 %v1203
    %1676 = vmatpush1.bf16.msra.mxu0 %v1202
    %1677 = vmatprep.subr.bf16.mxu0 %v1199
    %1678 = vmatpush1.bf16.msra.mxu0 %v1198
    %1679 = vmatprep.subr.bf16.mxu0 %v1195
    %1680 = vmatpush1.bf16.msra.mxu0 %v1194
    %1681 = vmatprep.subr.bf16.mxu0 %v1191
    %1682 = vmatpush1.bf16.msra.mxu0 %v1190
    %1683 = vmatprep.subr.bf16.mxu0 %v1187
    %1684 = vmatpush1.bf16.msra.mxu0 %v1186
    %1685 = vmatprep.subr.bf16.mxu0 %v1183
    %1686 = vmatpush1.bf16.msra.mxu0 %v1182
    %1687 = vmatprep.subr.bf16.mxu0 %v1243
    %1688 = vmatpush2.bf16.msra.mxu0 %v1242
    %1689 = vmatprep.subr.bf16.mxu0 %v1239
    %1690 = vmatpush2.bf16.msra.mxu0 %v1238
    %1691 = vmatprep.subr.bf16.mxu0 %v1235
    %1692 = vmatpush2.bf16.msra.mxu0 %v1234
    %1693 = vmatprep.subr.bf16.mxu0 %v1231
    %1694 = vmatpush2.bf16.msra.mxu0 %v1230
    %1695 = vmatprep.subr.bf16.mxu0 %v1227
    %1696 = vmatpush2.bf16.msra.mxu0 %v1226
    %1697 = vmatprep.subr.bf16.mxu0 %v1223
    %1698 = vmatpush2.bf16.msra.mxu0 %v1222
    %1699 = vmatprep.subr.bf16.mxu0 %v1219
    %1700 = vmatpush2.bf16.msra.mxu0 %v1218
    %1701 = vmatprep.subr.bf16.mxu0 %v1215
    %1702 = vmatpush2.bf16.msra.mxu0 %v1214
    %1703 = vmatprep.mubr.bf16.mxu0 %v85
    %1704 = vmatmul.mubr.bf16.gmra.mxu0 %v84
    %v1705 = vpop.f32.mrf.mxu0
    %v1706 = vadd.f32 %v1665, %v1705
    %v1707 = vpop.f32.mrf.mxu0
    %v1708 = vadd.f32 %v1667, %v1707
    %v1709 = vpop.f32.mrf.mxu0
    %v1710 = vpop.f32.mrf.mxu0
    %1711 = vdwg.mxu0
    %1712 = vmatprep.subr.bf16.mxu0 %v1275
    %1713 = vmatpush1.bf16.msra.mxu0 %v1274
    %1714 = vmatprep.subr.bf16.mxu0 %v1271
    %1715 = vmatpush1.bf16.msra.mxu0 %v1270
    %1716 = vmatprep.subr.bf16.mxu0 %v1267
    %1717 = vmatpush1.bf16.msra.mxu0 %v1266
    %1718 = vmatprep.subr.bf16.mxu0 %v1263
    %1719 = vmatpush1.bf16.msra.mxu0 %v1262
    %1720 = vmatprep.subr.bf16.mxu0 %v1259
    %1721 = vmatpush1.bf16.msra.mxu0 %v1258
    %1722 = vmatprep.subr.bf16.mxu0 %v1255
    %1723 = vmatpush1.bf16.msra.mxu0 %v1254
    %1724 = vmatprep.subr.bf16.mxu0 %v1251
    %1725 = vmatpush1.bf16.msra.mxu0 %v1250
    %1726 = vmatprep.subr.bf16.mxu0 %v1247
    %1727 = vmatpush1.bf16.msra.mxu0 %v1246
    %1728 = vmatprep.subr.bf16.mxu0 %v1307
    %1729 = vmatpush2.bf16.msra.mxu0 %v1306
    %1730 = vmatprep.subr.bf16.mxu0 %v1303
    %1731 = vmatpush2.bf16.msra.mxu0 %v1302
    %1732 = vmatprep.subr.bf16.mxu0 %v1299
    %1733 = vmatpush2.bf16.msra.mxu0 %v1298
    %1734 = vmatprep.subr.bf16.mxu0 %v1295
    %1735 = vmatpush2.bf16.msra.mxu0 %v1294
    %1736 = vmatprep.subr.bf16.mxu0 %v1291
    %1737 = vmatpush2.bf16.msra.mxu0 %v1290
    %1738 = vmatprep.subr.bf16.mxu0 %v1287
    %1739 = vmatpush2.bf16.msra.mxu0 %v1286
    %1740 = vmatprep.subr.bf16.mxu0 %v1283
    %1741 = vmatpush2.bf16.msra.mxu0 %v1282
    %1742 = vmatprep.subr.bf16.mxu0 %v1279
    %1743 = vmatpush2.bf16.msra.mxu0 %v1278
    %1744 = vmatprep.mubr.bf16.mxu0 %v87
    %1745 = vmatmul.mubr.bf16.gmra.mxu0 %v86
    %v1746 = vpop.f32.mrf.mxu0
    %v1747 = vadd.f32 %v1706, %v1746
    %v1748 = vpop.f32.mrf.mxu0
    %v1749 = vadd.f32 %v1708, %v1748
    %v1750 = vpop.f32.mrf.mxu0
    %v1751 = vpop.f32.mrf.mxu0
    %1752 = vdwg.mxu0
    %1753 = vmatprep.subr.bf16.mxu0 %v1339
    %1754 = vmatpush1.bf16.msra.mxu0 %v1338
    %1755 = vmatprep.subr.bf16.mxu0 %v1335
    %1756 = vmatpush1.bf16.msra.mxu0 %v1334
    %1757 = vmatprep.subr.bf16.mxu0 %v1331
    %1758 = vmatpush1.bf16.msra.mxu0 %v1330
    %1759 = vmatprep.subr.bf16.mxu0 %v1327
    %1760 = vmatpush1.bf16.msra.mxu0 %v1326
    %1761 = vmatprep.subr.bf16.mxu0 %v1323
    %1762 = vmatpush1.bf16.msra.mxu0 %v1322
    %1763 = vmatprep.subr.bf16.mxu0 %v1319
    %1764 = vmatpush1.bf16.msra.mxu0 %v1318
    %1765 = vmatprep.subr.bf16.mxu0 %v1315
    %1766 = vmatpush1.bf16.msra.mxu0 %v1314
    %1767 = vmatprep.subr.bf16.mxu0 %v1311
    %1768 = vmatpush1.bf16.msra.mxu0 %v1310
    %1769 = vmatprep.subr.bf16.mxu0 %v1371
    %1770 = vmatpush2.bf16.msra.mxu0 %v1370
    %1771 = vmatprep.subr.bf16.mxu0 %v1367
    %1772 = vmatpush2.bf16.msra.mxu0 %v1366
    %1773 = vmatprep.subr.bf16.mxu0 %v1363
    %1774 = vmatpush2.bf16.msra.mxu0 %v1362
    %1775 = vmatprep.subr.bf16.mxu0 %v1359
    %1776 = vmatpush2.bf16.msra.mxu0 %v1358
    %1777 = vmatprep.subr.bf16.mxu0 %v1355
    %1778 = vmatpush2.bf16.msra.mxu0 %v1354
    %1779 = vmatprep.subr.bf16.mxu0 %v1351
    %1780 = vmatpush2.bf16.msra.mxu0 %v1350
    %1781 = vmatprep.subr.bf16.mxu0 %v1347
    %1782 = vmatpush2.bf16.msra.mxu0 %v1346
    %1783 = vmatprep.subr.bf16.mxu0 %v1343
    %1784 = vmatpush2.bf16.msra.mxu0 %v1342
    %1785 = vmatprep.mubr.bf16.mxu0 %v89
    %1786 = vmatmul.mubr.bf16.gmra.mxu0 %v88
    %v1787 = vpop.f32.mrf.mxu0
    %v1788 = vadd.f32 %v1747, %v1787
    %v1789 = vpop.f32.mrf.mxu0
    %v1790 = vadd.f32 %v1749, %v1789
    %v1791 = vpop.f32.mrf.mxu0
    %v1792 = vpop.f32.mrf.mxu0
    %1793 = vdwg.mxu0
    %1794 = vmatprep.subr.bf16.mxu0 %v1149
    %1795 = vmatpush1.bf16.msra.mxu0 %v1148
    %1796 = vmatprep.subr.bf16.mxu0 %v1145
    %1797 = vmatpush1.bf16.msra.mxu0 %v1144
    %1798 = vmatprep.subr.bf16.mxu0 %v1141
    %1799 = vmatpush1.bf16.msra.mxu0 %v1140
    %1800 = vmatprep.subr.bf16.mxu0 %v1137
    %1801 = vmatpush1.bf16.msra.mxu0 %v1136
    %1802 = vmatprep.subr.bf16.mxu0 %v1133
    %1803 = vmatpush1.bf16.msra.mxu0 %v1132
    %1804 = vmatprep.subr.bf16.mxu0 %v1129
    %1805 = vmatpush1.bf16.msra.mxu0 %v1128
    %1806 = vmatprep.subr.bf16.mxu0 %v1125
    %1807 = vmatpush1.bf16.msra.mxu0 %v1124
    %1808 = vmatprep.subr.bf16.mxu0 %v1121
    %1809 = vmatpush1.bf16.msra.mxu0 %v1120
    %1810 = vmatprep.subr.bf16.mxu0 %v1181
    %1811 = vmatpush2.bf16.msra.mxu0 %v1180
    %1812 = vmatprep.subr.bf16.mxu0 %v1177
    %1813 = vmatpush2.bf16.msra.mxu0 %v1176
    %1814 = vmatprep.subr.bf16.mxu0 %v1173
    %1815 = vmatpush2.bf16.msra.mxu0 %v1172
    %1816 = vmatprep.subr.bf16.mxu0 %v1169
    %1817 = vmatpush2.bf16.msra.mxu0 %v1168
    %1818 = vmatprep.subr.bf16.mxu0 %v1165
    %1819 = vmatpush2.bf16.msra.mxu0 %v1164
    %1820 = vmatprep.subr.bf16.mxu0 %v1161
    %1821 = vmatpush2.bf16.msra.mxu0 %v1160
    %1822 = vmatprep.subr.bf16.mxu0 %v1157
    %1823 = vmatpush2.bf16.msra.mxu0 %v1156
    %1824 = vmatprep.subr.bf16.mxu0 %v1153
    %1825 = vmatpush2.bf16.msra.mxu0 %v1152
    %1826 = vmatprep.mubr.bf16.mxu0 %v83
    %1827 = vmatmul.mubr.bf16.gmra.mxu0 %v82
    %v1828 = vpop.f32.mrf.mxu0
    %v1829 = vadd.f32 0.0, %v1828
    %v1830 = vpop.f32.mrf.mxu0
    %v1831 = vadd.f32 0.0, %v1830
    %v1832 = vpop.f32.mrf.mxu0
    %v1833 = vpop.f32.mrf.mxu0
    %1834 = vdwg.mxu0
    %1835 = vmatprep.subr.bf16.mxu0 %v1213
    %1836 = vmatpush1.bf16.msra.mxu0 %v1212
    %1837 = vmatprep.subr.bf16.mxu0 %v1209
    %1838 = vmatpush1.bf16.msra.mxu0 %v1208
    %1839 = vmatprep.subr.bf16.mxu0 %v1205
    %1840 = vmatpush1.bf16.msra.mxu0 %v1204
    %1841 = vmatprep.subr.bf16.mxu0 %v1201
    %1842 = vmatpush1.bf16.msra.mxu0 %v1200
    %1843 = vmatprep.subr.bf16.mxu0 %v1197
    %1844 = vmatpush1.bf16.msra.mxu0 %v1196
    %1845 = vmatprep.subr.bf16.mxu0 %v1193
    %1846 = vmatpush1.bf16.msra.mxu0 %v1192
    %1847 = vmatprep.subr.bf16.mxu0 %v1189
    %1848 = vmatpush1.bf16.msra.mxu0 %v1188
    %1849 = vmatprep.subr.bf16.mxu0 %v1185
    %1850 = vmatpush1.bf16.msra.mxu0 %v1184
    %1851 = vmatprep.subr.bf16.mxu0 %v1245
    %1852 = vmatpush2.bf16.msra.mxu0 %v1244
    %1853 = vmatprep.subr.bf16.mxu0 %v1241
    %1854 = vmatpush2.bf16.msra.mxu0 %v1240
    %1855 = vmatprep.subr.bf16.mxu0 %v1237
    %1856 = vmatpush2.bf16.msra.mxu0 %v1236
    %1857 = vmatprep.subr.bf16.mxu0 %v1233
    %1858 = vmatpush2.bf16.msra.mxu0 %v1232
    %1859 = vmatprep.subr.bf16.mxu0 %v1229
    %1860 = vmatpush2.bf16.msra.mxu0 %v1228
    %1861 = vmatprep.subr.bf16.mxu0 %v1225
    %1862 = vmatpush2.bf16.msra.mxu0 %v1224
    %1863 = vmatprep.subr.bf16.mxu0 %v1221
    %1864 = vmatpush2.bf16.msra.mxu0 %v1220
    %1865 = vmatprep.subr.bf16.mxu0 %v1217
    %1866 = vmatpush2.bf16.msra.mxu0 %v1216
    %1867 = vmatprep.mubr.bf16.mxu0 %v85
    %1868 = vmatmul.mubr.bf16.gmra.mxu0 %v84
    %v1869 = vpop.f32.mrf.mxu0
    %v1870 = vadd.f32 %v1829, %v1869
    %v1871 = vpop.f32.mrf.mxu0
    %v1872 = vadd.f32 %v1831, %v1871
    %v1873 = vpop.f32.mrf.mxu0
    %v1874 = vpop.f32.mrf.mxu0
    %1875 = vdwg.mxu0
    %1876 = vmatprep.subr.bf16.mxu0 %v1277
    %1877 = vmatpush1.bf16.msra.mxu0 %v1276
    %1878 = vmatprep.subr.bf16.mxu0 %v1273
    %1879 = vmatpush1.bf16.msra.mxu0 %v1272
    %1880 = vmatprep.subr.bf16.mxu0 %v1269
    %1881 = vmatpush1.bf16.msra.mxu0 %v1268
    %1882 = vmatprep.subr.bf16.mxu0 %v1265
    %1883 = vmatpush1.bf16.msra.mxu0 %v1264
    %1884 = vmatprep.subr.bf16.mxu0 %v1261
    %1885 = vmatpush1.bf16.msra.mxu0 %v1260
    %1886 = vmatprep.subr.bf16.mxu0 %v1257
    %1887 = vmatpush1.bf16.msra.mxu0 %v1256
    %1888 = vmatprep.subr.bf16.mxu0 %v1253
    %1889 = vmatpush1.bf16.msra.mxu0 %v1252
    %1890 = vmatprep.subr.bf16.mxu0 %v1249
    %1891 = vmatpush1.bf16.msra.mxu0 %v1248
    %1892 = vmatprep.subr.bf16.mxu0 %v1309
    %1893 = vmatpush2.bf16.msra.mxu0 %v1308
    %1894 = vmatprep.subr.bf16.mxu0 %v1305
    %1895 = vmatpush2.bf16.msra.mxu0 %v1304
    %1896 = vmatprep.subr.bf16.mxu0 %v1301
    %1897 = vmatpush2.bf16.msra.mxu0 %v1300
    %1898 = vmatprep.subr.bf16.mxu0 %v1297
    %1899 = vmatpush2.bf16.msra.mxu0 %v1296
    %1900 = vmatprep.subr.bf16.mxu0 %v1293
    %1901 = vmatpush2.bf16.msra.mxu0 %v1292
    %1902 = vmatprep.subr.bf16.mxu0 %v1289
    %1903 = vmatpush2.bf16.msra.mxu0 %v1288
    %1904 = vmatprep.subr.bf16.mxu0 %v1285
    %1905 = vmatpush2.bf16.msra.mxu0 %v1284
    %1906 = vmatprep.subr.bf16.mxu0 %v1281
    %1907 = vmatpush2.bf16.msra.mxu0 %v1280
    %1908 = vmatprep.mubr.bf16.mxu0 %v87
    %1909 = vmatmul.mubr.bf16.gmra.mxu0 %v86
    %v1910 = vpop.f32.mrf.mxu0
    %v1911 = vadd.f32 %v1870, %v1910
    %v1912 = vpop.f32.mrf.mxu0
    %v1913 = vadd.f32 %v1872, %v1912
    %v1914 = vpop.f32.mrf.mxu0
    %v1915 = vpop.f32.mrf.mxu0
    %1916 = vdwg.mxu0
    %1917 = vmatprep.subr.bf16.mxu0 %v1341
    %1918 = vmatpush1.bf16.msra.mxu0 %v1340
    %1919 = vmatprep.subr.bf16.mxu0 %v1337
    %1920 = vmatpush1.bf16.msra.mxu0 %v1336
    %1921 = vmatprep.subr.bf16.mxu0 %v1333
    %1922 = vmatpush1.bf16.msra.mxu0 %v1332
    %1923 = vmatprep.subr.bf16.mxu0 %v1329
    %1924 = vmatpush1.bf16.msra.mxu0 %v1328
    %1925 = vmatprep.subr.bf16.mxu0 %v1325
    %1926 = vmatpush1.bf16.msra.mxu0 %v1324
    %1927 = vmatprep.subr.bf16.mxu0 %v1321
    %1928 = vmatpush1.bf16.msra.mxu0 %v1320
    %1929 = vmatprep.subr.bf16.mxu0 %v1317
    %1930 = vmatpush1.bf16.msra.mxu0 %v1316
    %1931 = vmatprep.subr.bf16.mxu0 %v1313
    %1932 = vmatpush1.bf16.msra.mxu0 %v1312
    %1933 = vmatprep.subr.bf16.mxu0 %v1373
    %1934 = vmatpush2.bf16.msra.mxu0 %v1372
    %1935 = vmatprep.subr.bf16.mxu0 %v1369
    %1936 = vmatpush2.bf16.msra.mxu0 %v1368
    %1937 = vmatprep.subr.bf16.mxu0 %v1365
    %1938 = vmatpush2.bf16.msra.mxu0 %v1364
    %1939 = vmatprep.subr.bf16.mxu0 %v1361
    %1940 = vmatpush2.bf16.msra.mxu0 %v1360
    %1941 = vmatprep.subr.bf16.mxu0 %v1357
    %1942 = vmatpush2.bf16.msra.mxu0 %v1356
    %1943 = vmatprep.subr.bf16.mxu0 %v1353
    %1944 = vmatpush2.bf16.msra.mxu0 %v1352
    %1945 = vmatprep.subr.bf16.mxu0 %v1349
    %1946 = vmatpush2.bf16.msra.mxu0 %v1348
    %1947 = vmatprep.subr.bf16.mxu0 %v1345
    %1948 = vmatpush2.bf16.msra.mxu0 %v1344
    %1949 = vmatprep.mubr.bf16.mxu0 %v89
    %1950 = vmatmul.mubr.bf16.gmra.mxu0 %v88
    %v1951 = vpop.f32.mrf.mxu0
    %v1952 = vadd.f32 %v1911, %v1951
    %v1953 = vpop.f32.mrf.mxu0
    %v1954 = vadd.f32 %v1913, %v1953
    %v1955 = vpop.f32.mrf.mxu0
    %v1956 = vpop.f32.mrf.mxu0
    %1957 = vdwg.mxu0
    %v1958 = vadd.f32 %v90, %v1788
    %v1959 = vadd.f32 %v91, %v1790
    %v1960 = vadd.f32 %v92, %v1952
    %v1961 = vadd.f32 %v93, %v1954
    %1962 = vst [vmem:[#allocation2] sm:$0xff] %v1958
    %1963 = vst [vmem:[#allocation2 + $0x8] sm:$0xff] %v1959
    %1964 = vst [vmem:[#allocation2 + $0x10] sm:$0xff] %v1960
    %1965 = vst [vmem:[#allocation2 + $0x18] sm:$0xff] %v1961
    // Predicated region
    $region46: #{tpu_custom_call.1} parent=1 // pred_check
      %p1966 = pneg %p66
    $region47: #{tpu_custom_call.1} parent=1 // pred_check_branch
      %1968 = sbr.rel (%p1966) target = $region49
    $region48: #{tpu_custom_call.1} parent=1 // pred_region
      %v1969 = vld [vmem:[#allocation2] sm:$0xff]
      %v1970 = vld [vmem:[#allocation2 + $0x8] sm:$0xff]
      %v1971 = vld [vmem:[#allocation2 + $0x10] sm:$0xff]
      %v1972 = vld [vmem:[#allocation2 + $0x18] sm:$0xff]
      %v1973 = vld [vmem:[%s2] sm:$0xf]
      %v1975 = vlaneseq
      %v1976 = vshrl.u32 %v1975, 7
      %v1977 = vsub.s32 0, %v1976
      %v1978 = vrot.slane %v1973, %v1977
      %v1979 = vlaneseq
      %v1980 = vshrl.u32 %v1979, 7
      %v1981 = vsub.s32 1, %v1980
      %v1982 = vrot.slane %v1973, %v1981
      %v1983 = vlaneseq
      %v1984 = vshrl.u32 %v1983, 7
      %v1985 = vsub.s32 2, %v1984
      %v1986 = vrot.slane %v1973, %v1985
      %v1987 = vlaneseq
      %v1988 = vshrl.u32 %v1987, 7
      %v1989 = vsub.s32 3, %v1988
      %v1990 = vrot.slane %v1973, %v1989
      %v1995 = vadd.f32 %v1969, %v1978
      %v1996 = vadd.f32 %v1970, %v1982
      %v1997 = vadd.f32 %v1971, %v1986
      %v1998 = vadd.f32 %v1972, %v1990
      %v1999 = vmul.f32 %v1995, 0.2
      %v2000 = vmul.f32 %v1996, 0.2
      %v2001 = vmul.f32 %v1997, 0.2
      %v2002 = vmul.f32 %v1998, 0.2
      %v2003 = vmax.f32 %v1995, %v1999
      %v2004 = vmax.f32 %v1996, %v2000
      %v2005 = vmax.f32 %v1997, %v2001
      %v2006 = vmax.f32 %v1998, %v2002
      %v2007 = vpack.c.bf16 %v2003, %v2003
      %v2008 = vpack.c.bf16 %v2004, %v2004
      %v2009 = vpack.c.bf16 %v2005, %v2005
      %v2010 = vpack.c.bf16 %v2006, %v2006
      %v2011 = vld [vmem:[#allocation8] sm:$0xff]
      %v2012 = vld [vmem:[#allocation8 + $0x8] sm:$0xff]
      %v2013 = vld [vmem:[#allocation8 + $0x10] sm:$0xff]
      %v2014 = vld [vmem:[#allocation8 + $0x18] sm:$0xff]
      %v2015 = vld [vmem:[#allocation8 + $0x20] sm:$0xff]
      %v2016 = vld [vmem:[#allocation8 + $0x28] sm:$0xff]
      %v2017 = vld [vmem:[#allocation8 + $0x30] sm:$0xff]
      %v2018 = vld [vmem:[#allocation8 + $0x38] sm:$0xff]
      %v2019 = vld [vmem:[#allocation8 + $0x40] sm:$0xff]
      %v2020 = vld [vmem:[#allocation8 + $0x48] sm:$0xff]
      %v2021 = vld [vmem:[#allocation8 + $0x50] sm:$0xff]
      %v2022 = vld [vmem:[#allocation8 + $0x58] sm:$0xff]
      %v2023 = vld [vmem:[#allocation8 + $0x60] sm:$0xff]
      %v2024 = vld [vmem:[#allocation8 + $0x68] sm:$0xff]
      %v2025 = vld [vmem:[#allocation8 + $0x70] sm:$0xff]
      %v2026 = vld [vmem:[#allocation8 + $0x78] sm:$0xff]
      %v2027 = vld [vmem:[#allocation8 + $0x80] sm:$0xff]
      %v2028 = vld [vmem:[#allocation8 + $0x88] sm:$0xff]
      %v2029 = vld [vmem:[#allocation8 + $0x90] sm:$0xff]
      %v2030 = vld [vmem:[#allocation8 + $0x98] sm:$0xff]
      %v2031 = vld [vmem:[#allocation8 + $0xa0] sm:$0xff]
      %v2032 = vld [vmem:[#allocation8 + $0xa8] sm:$0xff]
      %v2033 = vld [vmem:[#allocation8 + $0xb0] sm:$0xff]
      %v2034 = vld [vmem:[#allocation8 + $0xb8] sm:$0xff]
      %v2035 = vld [vmem:[#allocation8 + $0xc0] sm:$0xff]
      %v2036 = vld [vmem:[#allocation8 + $0xc8] sm:$0xff]
      %v2037 = vld [vmem:[#allocation8 + $0xd0] sm:$0xff]
      %v2038 = vld [vmem:[#allocation8 + $0xd8] sm:$0xff]
      %v2039 = vld [vmem:[#allocation8 + $0xe0] sm:$0xff]
      %v2040 = vld [vmem:[#allocation8 + $0xe8] sm:$0xff]
      %v2041 = vld [vmem:[#allocation8 + $0xf0] sm:$0xff]
      %v2042 = vld [vmem:[#allocation8 + $0xf8] sm:$0xff]
      %v2043 = vld [vmem:[#allocation8 + $0x100] sm:$0xff]
      %v2044 = vld [vmem:[#allocation8 + $0x108] sm:$0xff]
      %v2045 = vld [vmem:[#allocation8 + $0x110] sm:$0xff]
      %v2046 = vld [vmem:[#allocation8 + $0x118] sm:$0xff]
      %v2047 = vld [vmem:[#allocation8 + $0x120] sm:$0xff]
      %v2048 = vld [vmem:[#allocation8 + $0x128] sm:$0xff]
      %v2049 = vld [vmem:[#allocation8 + $0x130] sm:$0xff]
      %v2050 = vld [vmem:[#allocation8 + $0x138] sm:$0xff]
      %v2051 = vld [vmem:[#allocation8 + $0x140] sm:$0xff]
      %v2052 = vld [vmem:[#allocation8 + $0x148] sm:$0xff]
      %v2053 = vld [vmem:[#allocation8 + $0x150] sm:$0xff]
      %v2054 = vld [vmem:[#allocation8 + $0x158] sm:$0xff]
      %v2055 = vld [vmem:[#allocation8 + $0x160] sm:$0xff]
      %v2056 = vld [vmem:[#allocation8 + $0x168] sm:$0xff]
      %v2057 = vld [vmem:[#allocation8 + $0x170] sm:$0xff]
      %v2058 = vld [vmem:[#allocation8 + $0x178] sm:$0xff]
      %v2059 = vld [vmem:[#allocation8 + $0x180] sm:$0xff]
      %v2060 = vld [vmem:[#allocation8 + $0x188] sm:$0xff]
      %v2061 = vld [vmem:[#allocation8 + $0x190] sm:$0xff]
      %v2062 = vld [vmem:[#allocation8 + $0x198] sm:$0xff]
      %v2063 = vld [vmem:[#allocation8 + $0x1a0] sm:$0xff]
      %v2064 = vld [vmem:[#allocation8 + $0x1a8] sm:$0xff]
      %v2065 = vld [vmem:[#allocation8 + $0x1b0] sm:$0xff]
      %v2066 = vld [vmem:[#allocation8 + $0x1b8] sm:$0xff]
      %v2067 = vld [vmem:[#allocation8 + $0x1c0] sm:$0xff]
      %v2068 = vld [vmem:[#allocation8 + $0x1c8] sm:$0xff]
      %v2069 = vld [vmem:[#allocation8 + $0x1d0] sm:$0xff]
      %v2070 = vld [vmem:[#allocation8 + $0x1d8] sm:$0xff]
      %v2071 = vld [vmem:[#allocation8 + $0x1e0] sm:$0xff]
      %v2072 = vld [vmem:[#allocation8 + $0x1e8] sm:$0xff]
      %v2073 = vld [vmem:[#allocation8 + $0x1f0] sm:$0xff]
      %v2074 = vld [vmem:[#allocation8 + $0x1f8] sm:$0xff]
      %v2075 = vld [vmem:[%s4] sm:$0x3]
      %v2077 = vlaneseq
      %v2078 = vshrl.u32 %v2077, 7
      %v2079 = vsub.s32 0, %v2078
      %v2080 = vrot.slane %v2075, %v2079
      %v2081 = vlaneseq
      %v2082 = vshrl.u32 %v2081, 7
      %v2083 = vsub.s32 1, %v2082
      %v2084 = vrot.slane %v2075, %v2083
      %v2151 = vunpack.c.l.b16 %v2011
      %v2152 = vunpack.c.h.b16 %v2011
      %v2153 = vunpack.c.l.b16 %v2012
      %v2154 = vunpack.c.h.b16 %v2012
      %v2155 = vunpack.c.l.b16 %v2013
      %v2156 = vunpack.c.h.b16 %v2013
      %v2157 = vunpack.c.l.b16 %v2014
      %v2158 = vunpack.c.h.b16 %v2014
      %v2159 = vunpack.c.l.b16 %v2015
      %v2160 = vunpack.c.h.b16 %v2015
      %v2161 = vunpack.c.l.b16 %v2016
      %v2162 = vunpack.c.h.b16 %v2016
      %v2163 = vunpack.c.l.b16 %v2017
      %v2164 = vunpack.c.h.b16 %v2017
      %v2165 = vunpack.c.l.b16 %v2018
      %v2166 = vunpack.c.h.b16 %v2018
      %v2167 = vunpack.c.l.b16 %v2019
      %v2168 = vunpack.c.h.b16 %v2019
      %v2169 = vunpack.c.l.b16 %v2020
      %v2170 = vunpack.c.h.b16 %v2020
      %v2171 = vunpack.c.l.b16 %v2021
      %v2172 = vunpack.c.h.b16 %v2021
      %v2173 = vunpack.c.l.b16 %v2022
      %v2174 = vunpack.c.h.b16 %v2022
      %v2175 = vunpack.c.l.b16 %v2023
      %v2176 = vunpack.c.h.b16 %v2023
      %v2177 = vunpack.c.l.b16 %v2024
      %v2178 = vunpack.c.h.b16 %v2024
      %v2179 = vunpack.c.l.b16 %v2025
      %v2180 = vunpack.c.h.b16 %v2025
      %v2181 = vunpack.c.l.b16 %v2026
      %v2182 = vunpack.c.h.b16 %v2026
      %v2183 = vunpack.c.l.b16 %v2027
      %v2184 = vunpack.c.h.b16 %v2027
      %v2185 = vunpack.c.l.b16 %v2028
      %v2186 = vunpack.c.h.b16 %v2028
      %v2187 = vunpack.c.l.b16 %v2029
      %v2188 = vunpack.c.h.b16 %v2029
      %v2189 = vunpack.c.l.b16 %v2030
      %v2190 = vunpack.c.h.b16 %v2030
      %v2191 = vunpack.c.l.b16 %v2031
      %v2192 = vunpack.c.h.b16 %v2031
      %v2193 = vunpack.c.l.b16 %v2032
      %v2194 = vunpack.c.h.b16 %v2032
      %v2195 = vunpack.c.l.b16 %v2033
      %v2196 = vunpack.c.h.b16 %v2033
      %v2197 = vunpack.c.l.b16 %v2034
      %v2198 = vunpack.c.h.b16 %v2034
      %v2199 = vunpack.c.l.b16 %v2035
      %v2200 = vunpack.c.h.b16 %v2035
      %v2201 = vunpack.c.l.b16 %v2036
      %v2202 = vunpack.c.h.b16 %v2036
      %v2203 = vunpack.c.l.b16 %v2037
      %v2204 = vunpack.c.h.b16 %v2037
      %v2205 = vunpack.c.l.b16 %v2038
      %v2206 = vunpack.c.h.b16 %v2038
      %v2207 = vunpack.c.l.b16 %v2039
      %v2208 = vunpack.c.h.b16 %v2039
      %v2209 = vunpack.c.l.b16 %v2040
      %v2210 = vunpack.c.h.b16 %v2040
      %v2211 = vunpack.c.l.b16 %v2041
      %v2212 = vunpack.c.h.b16 %v2041
      %v2213 = vunpack.c.l.b16 %v2042
      %v2214 = vunpack.c.h.b16 %v2042
      %v2215 = vunpack.c.l.b16 %v2043
      %v2216 = vunpack.c.h.b16 %v2043
      %v2217 = vunpack.c.l.b16 %v2044
      %v2218 = vunpack.c.h.b16 %v2044
      %v2219 = vunpack.c.l.b16 %v2045
      %v2220 = vunpack.c.h.b16 %v2045
      %v2221 = vunpack.c.l.b16 %v2046
      %v2222 = vunpack.c.h.b16 %v2046
      %v2223 = vunpack.c.l.b16 %v2047
      %v2224 = vunpack.c.h.b16 %v2047
      %v2225 = vunpack.c.l.b16 %v2048
      %v2226 = vunpack.c.h.b16 %v2048
      %v2227 = vunpack.c.l.b16 %v2049
      %v2228 = vunpack.c.h.b16 %v2049
      %v2229 = vunpack.c.l.b16 %v2050
      %v2230 = vunpack.c.h.b16 %v2050
      %v2231 = vunpack.c.l.b16 %v2051
      %v2232 = vunpack.c.h.b16 %v2051
      %v2233 = vunpack.c.l.b16 %v2052
      %v2234 = vunpack.c.h.b16 %v2052
      %v2235 = vunpack.c.l.b16 %v2053
      %v2236 = vunpack.c.h.b16 %v2053
      %v2237 = vunpack.c.l.b16 %v2054
      %v2238 = vunpack.c.h.b16 %v2054
      %v2239 = vunpack.c.l.b16 %v2055
      %v2240 = vunpack.c.h.b16 %v2055
      %v2241 = vunpack.c.l.b16 %v2056
      %v2242 = vunpack.c.h.b16 %v2056
      %v2243 = vunpack.c.l.b16 %v2057
      %v2244 = vunpack.c.h.b16 %v2057
      %v2245 = vunpack.c.l.b16 %v2058
      %v2246 = vunpack.c.h.b16 %v2058
      %v2247 = vunpack.c.l.b16 %v2059
      %v2248 = vunpack.c.h.b16 %v2059
      %v2249 = vunpack.c.l.b16 %v2060
      %v2250 = vunpack.c.h.b16 %v2060
      %v2251 = vunpack.c.l.b16 %v2061
      %v2252 = vunpack.c.h.b16 %v2061
      %v2253 = vunpack.c.l.b16 %v2062
      %v2254 = vunpack.c.h.b16 %v2062
      %v2255 = vunpack.c.l.b16 %v2063
      %v2256 = vunpack.c.h.b16 %v2063
      %v2257 = vunpack.c.l.b16 %v2064
      %v2258 = vunpack.c.h.b16 %v2064
      %v2259 = vunpack.c.l.b16 %v2065
      %v2260 = vunpack.c.h.b16 %v2065
      %v2261 = vunpack.c.l.b16 %v2066
      %v2262 = vunpack.c.h.b16 %v2066
      %v2263 = vunpack.c.l.b16 %v2067
      %v2264 = vunpack.c.h.b16 %v2067
      %v2265 = vunpack.c.l.b16 %v2068
      %v2266 = vunpack.c.h.b16 %v2068
      %v2267 = vunpack.c.l.b16 %v2069
      %v2268 = vunpack.c.h.b16 %v2069
      %v2269 = vunpack.c.l.b16 %v2070
      %v2270 = vunpack.c.h.b16 %v2070
      %v2271 = vunpack.c.l.b16 %v2071
      %v2272 = vunpack.c.h.b16 %v2071
      %v2273 = vunpack.c.l.b16 %v2072
      %v2274 = vunpack.c.h.b16 %v2072
      %v2275 = vunpack.c.l.b16 %v2073
      %v2276 = vunpack.c.h.b16 %v2073
      %v2277 = vunpack.c.l.b16 %v2074
      %v2278 = vunpack.c.h.b16 %v2074
      %v2279 = vpack.c.b16 %v2153, %v2151
      %v2280 = vpack.c.b16 %v2154, %v2152
      %v2281 = vpack.c.b16 %v2157, %v2155
      %v2282 = vpack.c.b16 %v2158, %v2156
      %v2283 = vpack.c.b16 %v2161, %v2159
      %v2284 = vpack.c.b16 %v2162, %v2160
      %v2285 = vpack.c.b16 %v2165, %v2163
      %v2286 = vpack.c.b16 %v2166, %v2164
      %v2287 = vpack.c.b16 %v2169, %v2167
      %v2288 = vpack.c.b16 %v2170, %v2168
      %v2289 = vpack.c.b16 %v2173, %v2171
      %v2290 = vpack.c.b16 %v2174, %v2172
      %v2291 = vpack.c.b16 %v2177, %v2175
      %v2292 = vpack.c.b16 %v2178, %v2176
      %v2293 = vpack.c.b16 %v2181, %v2179
      %v2294 = vpack.c.b16 %v2182, %v2180
      %v2295 = vpack.c.b16 %v2185, %v2183
      %v2296 = vpack.c.b16 %v2186, %v2184
      %v2297 = vpack.c.b16 %v2189, %v2187
      %v2298 = vpack.c.b16 %v2190, %v2188
      %v2299 = vpack.c.b16 %v2193, %v2191
      %v2300 = vpack.c.b16 %v2194, %v2192
      %v2301 = vpack.c.b16 %v2197, %v2195
      %v2302 = vpack.c.b16 %v2198, %v2196
      %v2303 = vpack.c.b16 %v2201, %v2199
      %v2304 = vpack.c.b16 %v2202, %v2200
      %v2305 = vpack.c.b16 %v2205, %v2203
      %v2306 = vpack.c.b16 %v2206, %v2204
      %v2307 = vpack.c.b16 %v2209, %v2207
      %v2308 = vpack.c.b16 %v2210, %v2208
      %v2309 = vpack.c.b16 %v2213, %v2211
      %v2310 = vpack.c.b16 %v2214, %v2212
      %v2311 = vpack.c.b16 %v2217, %v2215
      %v2312 = vpack.c.b16 %v2218, %v2216
      %v2313 = vpack.c.b16 %v2221, %v2219
      %v2314 = vpack.c.b16 %v2222, %v2220
      %v2315 = vpack.c.b16 %v2225, %v2223
      %v2316 = vpack.c.b16 %v2226, %v2224
      %v2317 = vpack.c.b16 %v2229, %v2227
      %v2318 = vpack.c.b16 %v2230, %v2228
      %v2319 = vpack.c.b16 %v2233, %v2231
      %v2320 = vpack.c.b16 %v2234, %v2232
      %v2321 = vpack.c.b16 %v2237, %v2235
      %v2322 = vpack.c.b16 %v2238, %v2236
      %v2323 = vpack.c.b16 %v2241, %v2239
      %v2324 = vpack.c.b16 %v2242, %v2240
      %v2325 = vpack.c.b16 %v2245, %v2243
      %v2326 = vpack.c.b16 %v2246, %v2244
      %v2327 = vpack.c.b16 %v2249, %v2247
      %v2328 = vpack.c.b16 %v2250, %v2248
      %v2329 = vpack.c.b16 %v2253, %v2251
      %v2330 = vpack.c.b16 %v2254, %v2252
      %v2331 = vpack.c.b16 %v2257, %v2255
      %v2332 = vpack.c.b16 %v2258, %v2256
      %v2333 = vpack.c.b16 %v2261, %v2259
      %v2334 = vpack.c.b16 %v2262, %v2260
      %v2335 = vpack.c.b16 %v2265, %v2263
      %v2336 = vpack.c.b16 %v2266, %v2264
      %v2337 = vpack.c.b16 %v2269, %v2267
      %v2338 = vpack.c.b16 %v2270, %v2268
      %v2339 = vpack.c.b16 %v2273, %v2271
      %v2340 = vpack.c.b16 %v2274, %v2272
      %v2341 = vpack.c.b16 %v2277, %v2275
      %v2342 = vpack.c.b16 %v2278, %v2276
      %2407 = vmatprep.subr.bf16.mxu0 %v2294
      %2408 = vmatpush1.bf16.msra.mxu0 %v2293
      %2409 = vmatprep.subr.bf16.mxu0 %v2292
      %2410 = vmatpush1.bf16.msra.mxu0 %v2291
      %2411 = vmatprep.subr.bf16.mxu0 %v2290
      %2412 = vmatpush1.bf16.msra.mxu0 %v2289
      %2413 = vmatprep.subr.bf16.mxu0 %v2288
      %2414 = vmatpush1.bf16.msra.mxu0 %v2287
      %2415 = vmatprep.subr.bf16.mxu0 %v2286
      %2416 = vmatpush1.bf16.msra.mxu0 %v2285
      %2417 = vmatprep.subr.bf16.mxu0 %v2284
      %2418 = vmatpush1.bf16.msra.mxu0 %v2283
      %2419 = vmatprep.subr.bf16.mxu0 %v2282
      %2420 = vmatpush1.bf16.msra.mxu0 %v2281
      %2421 = vmatprep.subr.bf16.mxu0 %v2280
      %2422 = vmatpush1.bf16.msra.mxu0 %v2279
      %2423 = vmatprep.subr.bf16.mxu0 %v2310
      %2424 = vmatpush2.bf16.msra.mxu0 %v2309
      %2425 = vmatprep.subr.bf16.mxu0 %v2308
      %2426 = vmatpush2.bf16.msra.mxu0 %v2307
      %2427 = vmatprep.subr.bf16.mxu0 %v2306
      %2428 = vmatpush2.bf16.msra.mxu0 %v2305
      %2429 = vmatprep.subr.bf16.mxu0 %v2304
      %2430 = vmatpush2.bf16.msra.mxu0 %v2303
      %2431 = vmatprep.subr.bf16.mxu0 %v2302
      %2432 = vmatpush2.bf16.msra.mxu0 %v2301
      %2433 = vmatprep.subr.bf16.mxu0 %v2300
      %2434 = vmatpush2.bf16.msra.mxu0 %v2299
      %2435 = vmatprep.subr.bf16.mxu0 %v2298
      %2436 = vmatpush2.bf16.msra.mxu0 %v2297
      %2437 = vmatprep.subr.bf16.mxu0 %v2296
      %2438 = vmatpush2.bf16.msra.mxu0 %v2295
      %2439 = vmatprep.mubr.bf16.mxu0 %v2008
      %2440 = vmatmul.mubr.bf16.gmra.mxu0 %v2007
      %v2441 = vpop.f32.mrf.mxu0
      %v2442 = vadd.f32 %v2080, %v2441
      %v2443 = vpop.f32.mrf.mxu0
      %v2444 = vadd.f32 %v2084, %v2443
      %v2445 = vpop.f32.mrf.mxu0
      %v2446 = vpop.f32.mrf.mxu0
      %2447 = vdwg.mxu0
      %2448 = vmatprep.subr.bf16.mxu0 %v2326
      %2449 = vmatpush1.bf16.msra.mxu0 %v2325
      %2450 = vmatprep.subr.bf16.mxu0 %v2324
      %2451 = vmatpush1.bf16.msra.mxu0 %v2323
      %2452 = vmatprep.subr.bf16.mxu0 %v2322
      %2453 = vmatpush1.bf16.msra.mxu0 %v2321
      %2454 = vmatprep.subr.bf16.mxu0 %v2320
      %2455 = vmatpush1.bf16.msra.mxu0 %v2319
      %2456 = vmatprep.subr.bf16.mxu0 %v2318
      %2457 = vmatpush1.bf16.msra.mxu0 %v2317
      %2458 = vmatprep.subr.bf16.mxu0 %v2316
      %2459 = vmatpush1.bf16.msra.mxu0 %v2315
      %2460 = vmatprep.subr.bf16.mxu0 %v2314
      %2461 = vmatpush1.bf16.msra.mxu0 %v2313
      %2462 = vmatprep.subr.bf16.mxu0 %v2312
      %2463 = vmatpush1.bf16.msra.mxu0 %v2311
      %2464 = vmatprep.subr.bf16.mxu0 %v2342
      %2465 = vmatpush2.bf16.msra.mxu0 %v2341
      %2466 = vmatprep.subr.bf16.mxu0 %v2340
      %2467 = vmatpush2.bf16.msra.mxu0 %v2339
      %2468 = vmatprep.subr.bf16.mxu0 %v2338
      %2469 = vmatpush2.bf16.msra.mxu0 %v2337
      %2470 = vmatprep.subr.bf16.mxu0 %v2336
      %2471 = vmatpush2.bf16.msra.mxu0 %v2335
      %2472 = vmatprep.subr.bf16.mxu0 %v2334
      %2473 = vmatpush2.bf16.msra.mxu0 %v2333
      %2474 = vmatprep.subr.bf16.mxu0 %v2332
      %2475 = vmatpush2.bf16.msra.mxu0 %v2331
      %2476 = vmatprep.subr.bf16.mxu0 %v2330
      %2477 = vmatpush2.bf16.msra.mxu0 %v2329
      %2478 = vmatprep.subr.bf16.mxu0 %v2328
      %2479 = vmatpush2.bf16.msra.mxu0 %v2327
      %2480 = vmatprep.mubr.bf16.mxu0 %v2010
      %2481 = vmatmul.mubr.bf16.gmra.mxu0 %v2009
      %v2482 = vpop.f32.mrf.mxu0
      %v2483 = vadd.f32 %v2442, %v2482
      %v2484 = vpop.f32.mrf.mxu0
      %v2485 = vadd.f32 %v2444, %v2484
      %v2486 = vpop.f32.mrf.mxu0
      %v2487 = vpop.f32.mrf.mxu0
      %2488 = vdwg.mxu0
      %v2489 = vmul.f32 %v2483, 0.2
      %v2490 = vmul.f32 %v2485, 0.2
      %v2491 = vmax.f32 %v2483, %v2489
      %v2492 = vmax.f32 %v2485, %v2490
      %v2493 = vld [vmem:[%s5] sm:$0x3]
      %v2495 = vlaneseq
      %v2496 = vshrl.u32 %v2495, 7
      %v2497 = vsub.s32 0, %v2496
      %v2498 = vrot.slane %v2493, %v2497
      %v2499 = vlaneseq
      %v2500 = vshrl.u32 %v2499, 7
      %v2501 = vsub.s32 1, %v2500
      %v2502 = vrot.slane %v2493, %v2501
      %v2505 = vmul.f32 %v2491, %v2498
      %v2506 = vmul.f32 %v2492, %v2502
      %v2507 = vadd.f32 %v2505, %v2506
      %2508 = vadd.xlane.f32.xlu0 %v2507
      %v2509 = vpop.xlane.xlu0 %2508
      %s2510 = sld [smem:[#allocation3]]
      %v2511 = vstv %s2510
      %v2512 = vadd.f32 %v2509, %v2511
      %v2513 = vsub.f32 0.0, %v2512
      %v2514 = vmul.f32 %v2513, 1.442695
      %v2515 = vpow.pop %v2514
      %v2516 = vadd.f32 %v2515, 1.0
      %v2517 = vrcp.pop %v2516
      %v2518 = vmul.f32 1.0, %v2517
      %vm2519 = vcmask 7168
      %2520 = vst.msk [vmem:[%s7] sm:$0xff] %vm2519, %v2518
    $region49: #{tpu_custom_call.1} parent=1 // pred_fallthru
      _
    // Predicated region
    $region50: #{tpu_custom_call.1} parent=1 // pred_check
      _
    $region51: #{tpu_custom_call.1} parent=1 // pred_check_branch
      %2522 = sbr.rel (0) target = $region53
    $region52: #{tpu_custom_call.1} parent=1 // pred_region
      _
    $region53: #{tpu_custom_call.1} parent=1 // pred_fallthru
      _
    // Predicated region
    $region54: #{tpu_custom_call.1} parent=1 // pred_check
      _
    $region55: #{tpu_custom_call.1} parent=1 // pred_check_branch
      %2524 = sbr.rel (0) target = $region57
    $region56: #{tpu_custom_call.1} parent=1 // pred_region
      _
    $region57: #{tpu_custom_call.1} parent=1 // pred_fallthru
      _
    %2525 = vsyncpa [#allocation5], 1
    %2526 = vsyncpa [#allocation7], 1

// kernel: tpu_custom_call.1
$region0: #{tpu_custom_call.1}
  #allocation0 [shape = 'u32[]', space=smem, size = 0x4, offset = 0x4, fixed_abs, tag = 'smem constant byte address 0x4 - core index']
  #allocation1 [shape = 'u32[144,128]{1,0:T(1,128)}', space=vmem, size = 0x12000, scoped, tag = 'internal scratch']
  #allocation2 [shape = 'f32[8,512]{1,0:T(8,128)}', space=vmem, size = 0x4000, scoped, tag = 'scratch operand']
  #allocation3 [shape = 'f32[1,1]{1,0:T(1,128)S(6)}', space=smem, size = 0x200, scoped, tag = 'scoped memory for tpu_custom_call.1']
  %s0 = inlined_call_operand.hbm [shape: f32[8,1024], index: 0, kind: input, shape index: {}]
  %s1 = inlined_call_operand.hbm [shape: bf16[1024,512], index: 1, kind: input, shape index: {}]
  %s2 = inlined_call_operand.vmem [shape: f32[1,512], index: 2, kind: input, shape index: {}]
  %s3 = inlined_call_operand.hbm [shape: bf16[512,256], index: 3, kind: input, shape index: {}]
  %s4 = inlined_call_operand.vmem [shape: f32[1,256], index: 4, kind: input, shape index: {}]
  %s5 = inlined_call_operand.vmem [shape: f32[1,256], index: 5, kind: input, shape index: {}]
  %s6 = inlined_call_operand.<no memory space> [shape: f32[1,1], index: 6, kind: input, shape index: {}]
  %s7 = inlined_call_operand.vmem [shape: f32[8,1], index: 7, kind: output, shape index: {}]
  %s8 = sld [smem:[#allocation0]]
  $region58: #{tpu_custom_call.1} parent=0
    _
  %s10 = ssub.s32 1, %s8
  %s11 = scalar_select 0, %s10, %s8
  %12 = sst [smem:[#allocation3]] %s6
  $region1: #{tpu_custom_call.1} parent=0
    #allocation4 [shape = 'u8[32768]{0}', space=vmem, size = 0x8000, scoped, tag = 'input window, operand 0, single buffered']
    #allocation5 [shape = 's32[1]{0}', space=sflag, size = 0x4, scoped, tag = 'scoped memory for tpu_custom_call.1']
    #allocation6 [shape = 'u8[1048576]{0}', space=vmem, size = 0x100000, scoped, tag = 'input window, operand 1, single buffered']
    #allocation7 [shape = 's32[1]{0}', space=sflag, size = 0x4, scoped, tag = 'scoped memory for tpu_custom_call.1']
    #allocation8 [shape = 'u8[262144]{0}', space=vmem, size = 0x40000, scoped, tag = 'input window, operand 3, single buffered']
    %13 = vsyncpa [#allocation5], 0
    %14 = vsyncpa [#allocation7], 0
    // Predicated region
    $region2: #{tpu_custom_call.1} parent=1 // pred_check
      _
    $region3: #{tpu_custom_call.1} parent=1 // pred_check_branch
      %16 = sbr.rel (0) target = $region5
    $region4: #{tpu_custom_call.1} parent=1 // pred_region
      %s18 = ssub.s32 1024, 1024
      %19 = vsyncadd [#allocation5], %s18
      %s21 = sshll.u32 [#allocation4], 4
      %s22 = int_to_ptr.vmem [resolvable:$true] %s21
      %24 = dma.hbm_to_vmem [thread:$0]  %s0, 1024, %s22, [#allocation5]
    $region5: #{tpu_custom_call.1} parent=1 // pred_fallthru
      _
    // Predicated region
    $region6: #{tpu_custom_call.1} parent=1 // pred_check
      _
    $region7: #{tpu_custom_call.1} parent=1 // pred_check_branch
      %26 = sbr.rel (0) target = $region9
    $region8: #{tpu_custom_call.1} parent=1 // pred_region
      %s28 = ssub.s32 32768, 32768
      %29 = vsyncadd [#allocation7], %s28
      %s30 = sshll.u32 [#allocation6], 4
      %s31 = int_to_ptr.vmem [resolvable:$true] %s30
      %36 = dma.hbm_to_vmem [thread:$0]  %s1, 32768, %s31, [#allocation7], 256, 256, 16
    $region9: #{tpu_custom_call.1} parent=1 // pred_fallthru
      _
    // Predicated region
    $region10: #{tpu_custom_call.1} parent=1 // pred_check
      _
    $region11: #{tpu_custom_call.1} parent=1 // pred_check_branch
      %38 = sbr.rel (0) target = $region13
    $region12: #{tpu_custom_call.1} parent=1 // pred_region
      _
    $region13: #{tpu_custom_call.1} parent=1 // pred_fallthru
      _
    // Predicated region
    $region14: #{tpu_custom_call.1} parent=1 // pred_check
      _
    $region15: #{tpu_custom_call.1} parent=1 // pred_check_branch
      %40 = sbr.rel (0) target = $region17
    $region16: #{tpu_custom_call.1} parent=1 // pred_region
      %s42 = ssub.s32 8192, 8192
      %43 = vsyncadd [#allocation7], %s42
      %s44 = sshll.u32 [#allocation8], 4
      %s45 = int_to_ptr.vmem [resolvable:$true] %s44
      %50 = dma.hbm_to_vmem [thread:$0]  %s3, 8192, %s45, [#allocation7], 128, 128, 8
    $region17: #{tpu_custom_call.1} parent=1 // pred_fallthru
      _
    // Predicated region
    $region18: #{tpu_custom_call.1} parent=1 // pred_check
      _
    $region19: #{tpu_custom_call.1} parent=1 // pred_check_branch
      %52 = sbr.rel (0) target = $region21
    $region20: #{tpu_custom_call.1} parent=1 // pred_region
      _
    $region21: #{tpu_custom_call.1} parent=1 // pred_fallthru
      _
    // Predicated region
    $region22: #{tpu_custom_call.1} parent=1 // pred_check
      _
    $region23: #{tpu_custom_call.1} parent=1 // pred_check_branch
      %54 = sbr.rel (0) target = $region25
    $region24: #{tpu_custom_call.1} parent=1 // pred_region
      _
    $region25: #{tpu_custom_call.1} parent=1 // pred_fallthru
      _
    // Predicated region
    $region26: #{tpu_custom_call.1} parent=1 // pred_check
      _
    $region27: #{tpu_custom_call.1} parent=1 // pred_check_branch
      %56 = sbr.rel (0) target = $region29
    $region28: #{tpu_custom_call.1} parent=1 // pred_region
      _
    $region29: #{tpu_custom_call.1} parent=1 // pred_fallthru
      _
    // Predicated region
    $region30: #{tpu_custom_call.1} parent=1 // pred_check
      _
    $region31: #{tpu_custom_call.1} parent=1 // pred_check_branch
      %58 = sbr.rel (0) target = $region33
    $region32: #{tpu_custom_call.1} parent=1 // pred_region
      %59 = dma.done [#allocation5], 1024
    $region33: #{tpu_custom_call.1} parent=1 // pred_fallthru
      _
    // Predicated region
    $region34: #{tpu_custom_call.1} parent=1 // pred_check
      _
    $region35: #{tpu_custom_call.1} parent=1 // pred_check_branch
      %61 = sbr.rel (0) target = $region37
    $region36: #{tpu_custom_call.1} parent=1 // pred_region
      %62 = dma.done [#allocation7], 32768
    $region37: #{tpu_custom_call.1} parent=1 // pred_fallthru
      _
    // Predicated region
    $region38: #{tpu_custom_call.1} parent=1 // pred_check
      _
    $region39: #{tpu_custom_call.1} parent=1 // pred_check_branch
      %64 = sbr.rel (0) target = $region41
    $region40: #{tpu_custom_call.1} parent=1 // pred_region
      %65 = dma.done [#allocation7], 8192
    $region41: #{tpu_custom_call.1} parent=1 // pred_fallthru
      _
    %p66 = scmp.eq.s32.totalorder 0, 0
    // Predicated region
    $region42: #{tpu_custom_call.1} parent=1 // pred_check
      %p67 = pneg %p66
    $region43: #{tpu_custom_call.1} parent=1 // pred_check_branch
      %69 = sbr.rel (%p67) target = $region45
    $region44: #{tpu_custom_call.1} parent=1 // pred_region
      %70 = vst [vmem:[#allocation2] sm:$0xff] 0.0
      %71 = vst [vmem:[#allocation2 + $0x8] sm:$0xff] 0.0
      %72 = vst [vmem:[#allocation2 + $0x10] sm:$0xff] 0.0
      %73 = vst [vmem:[#allocation2 + $0x18] sm:$0xff] 0.0
    $region45: #{tpu_custom_call.1} parent=1 // pred_fallthru
      _
    %v74 = vld [vmem:[#allocation4] sm:$0xff]
    %v75 = vld [vmem:[#allocation4 + $0x8] sm:$0xff]
    %v76 = vld [vmem:[#allocation4 + $0x10] sm:$0xff]
    %v77 = vld [vmem:[#allocation4 + $0x18] sm:$0xff]
    %v78 = vld [vmem:[#allocation4 + $0x20] sm:$0xff]
    %v79 = vld [vmem:[#allocation4 + $0x28] sm:$0xff]
    %v80 = vld [vmem:[#allocation4 + $0x30] sm:$0xff]
    %v81 = vld [vmem:[#allocation4 + $0x38] sm:$0xff]
    %v82 = vpack.c.bf16 %v74, %v74
    %v83 = vpack.c.bf16 %v75, %v75
    %v84 = vpack.c.bf16 %v76, %v76
    %v85 = vpack.c.bf16 %v77, %v77
    %v86 = vpack.c.bf16 %v78, %v78
    %v87 = vpack.c.bf16 %v79, %v79
    %v88 = vpack.c.bf16 %v80, %v80
    %v89 = vpack.c.bf16 %v81, %v81
    %v90 = vld [vmem:[#allocation2] sm:$0xff]
    %v91 = vld [vmem:[#allocation2 + $0x8] sm:$0xff]
    %v92 = vld [vmem:[#allocation2 + $0x10] sm:$0xff]
    %v93 = vld [vmem:[#allocation2 + $0x18] sm:$0xff]
    %v94 = vld [vmem:[#allocation6] sm:$0xff]
    %v95 = vld [vmem:[#allocation6 + $0x8] sm:$0xff]
    %v96 = vld [vmem:[#allocation6 + $0x10] sm:$0xff]
    %v97 = vld [vmem:[#allocation6 + $0x18] sm:$0xff]
    %v98 = vld [vmem:[#allocation6 + $0x20] sm:$0xff]
    %v99 = vld [vmem:[#allocation6 + $0x28] sm:$0xff]
    %v100 = vld [vmem:[#allocation6 + $0x30] sm:$0xff]
    %v101 = vld [vmem:[#allocation6 + $0x38] sm:$0xff]
    %v102 = vld [vmem:[#allocation6 + $0x40] sm:$0xff]
    %v103 = vld [vmem:[#allocation6 + $0x48] sm:$0xff]
    %v104 = vld [vmem:[#allocation6 + $0x50] sm:$0xff]
    %v105 = vld [vmem:[#allocation6 + $0x58] sm:$0xff]
    %v106 = vld [vmem:[#allocation6 + $0x60] sm:$0xff]
    %v107 = vld [vmem:[#allocation6 + $0x68] sm:$0xff]
    %v108 = vld [vmem:[#allocation6 + $0x70] sm:$0xff]
    %v109 = vld [vmem:[#allocation6 + $0x78] sm:$0xff]
    %v110 = vld [vmem:[#allocation6 + $0x80] sm:$0xff]
    %v111 = vld [vmem:[#allocation6 + $0x88] sm:$0xff]
    %v112 = vld [vmem:[#allocation6 + $0x90] sm:$0xff]
    %v113 = vld [vmem:[#allocation6 + $0x98] sm:$0xff]
    %v114 = vld [vmem:[#allocation6 + $0xa0] sm:$0xff]
    %v115 = vld [vmem:[#allocation6 + $0xa8] sm:$0xff]
    %v116 = vld [vmem:[#allocation6 + $0xb0] sm:$0xff]
    %v117 = vld [vmem:[#allocation6 + $0xb8] sm:$0xff]
    %v118 = vld [vmem:[#allocation6 + $0xc0] sm:$0xff]
    %v119 = vld [vmem:[#allocation6 + $0xc8] sm:$0xff]
    %v120 = vld [vmem:[#allocation6 + $0xd0] sm:$0xff]
    %v121 = vld [vmem:[#allocation6 + $0xd8] sm:$0xff]
    %v122 = vld [vmem:[#allocation6 + $0xe0] sm:$0xff]
    %v123 = vld [vmem:[#allocation6 + $0xe8] sm:$0xff]
    %v124 = vld [vmem:[#allocation6 + $0xf0] sm:$0xff]
    %v125 = vld [vmem:[#allocation6 + $0xf8] sm:$0xff]
    %v126 = vld [vmem:[#allocation6 + $0x100] sm:$0xff]
    %v127 = vld [vmem:[#allocation6 + $0x108] sm:$0xff]
    %v128 = vld [vmem:[#allocation6 + $0x110] sm:$0xff]
    %v129 = vld [vmem:[#allocation6 + $0x118] sm:$0xff]
    %v130 = vld [vmem:[#allocation6 + $0x120] sm:$0xff]
    %v131 = vld [vmem:[#allocation6 + $0x128] sm:$0xff]
    %v132 = vld [vmem:[#allocation6 + $0x130] sm:$0xff]
    %v133 = vld [vmem:[#allocation6 + $0x138] sm:$0xff]
    %v134 = vld [vmem:[#allocation6 + $0x140] sm:$0xff]
    %v135 = vld [vmem:[#allocation6 + $0x148] sm:$0xff]
    %v136 = vld [vmem:[#allocation6 + $0x150] sm:$0xff]
    %v137 = vld [vmem:[#allocation6 + $0x158] sm:$0xff]
    %v138 = vld [vmem:[#allocation6 + $0x160] sm:$0xff]
    %v139 = vld [vmem:[#allocation6 + $0x168] sm:$0xff]
    %v140 = vld [vmem:[#allocation6 + $0x170] sm:$0xff]
    %v141 = vld [vmem:[#allocation6 + $0x178] sm:$0xff]
    %v142 = vld [vmem:[#allocation6 + $0x180] sm:$0xff]
    %v143 = vld [vmem:[#allocation6 + $0x188] sm:$0xff]
    %v144 = vld [vmem:[#allocation6 + $0x190] sm:$0xff]
    %v145 = vld [vmem:[#allocation6 + $0x198] sm:$0xff]
    %v146 = vld [vmem:[#allocation6 + $0x1a0] sm:$0xff]
    %v147 = vld [vmem:[#allocation6 + $0x1a8] sm:$0xff]
    %v148 = vld [vmem:[#allocation6 + $0x1b0] sm:$0xff]
    %v149 = vld [vmem:[#allocation6 + $0x1b8] sm:$0xff]
    %v150 = vld [vmem:[#allocation6 + $0x1c0] sm:$0xff]
    %v151 = vld [vmem:[#allocation6 + $0x1c8] sm:$0xff]
    %v152 = vld [vmem:[#allocation6 + $0x1d0] sm:$0xff]
    %v153 = vld [vmem:[#allocation6 + $0x1d8] sm:$0xff]
    %v154 = vld [vmem:[#allocation6 + $0x1e0] sm:$0xff]
    %v155 = vld [vmem:[#allocation6 + $0x1e8] sm:$0xff]
    %v156 = vld [vmem:[#allocation6 + $0x1f0] sm:$0xff]
    %v157 = vld [vmem:[#allocation6 + $0x1f8] sm:$0xff]
    %v158 = vld [vmem:[#allocation6 + $0x200] sm:$0xff]
    %v159 = vld [vmem:[#allocation6 + $0x208] sm:$0xff]
    %v160 = vld [vmem:[#allocation6 + $0x210] sm:$0xff]
    %v161 = vld [vmem:[#allocation6 + $0x218] sm:$0xff]
    %v162 = vld [vmem:[#allocation6 + $0x220] sm:$0xff]
    %v163 = vld [vmem:[#allocation6 + $0x228] sm:$0xff]
    %v164 = vld [vmem:[#allocation6 + $0x230] sm:$0xff]
    %v165 = vld [vmem:[#allocation6 + $0x238] sm:$0xff]
    %v166 = vld [vmem:[#allocation6 + $0x240] sm:$0xff]
    %v167 = vld [vmem:[#allocation6 + $0x248] sm:$0xff]
    %v168 = vld [vmem:[#allocation6 + $0x250] sm:$0xff]
    %v169 = vld [vmem:[#allocation6 + $0x258] sm:$0xff]
    %v170 = vld [vmem:[#allocation6 + $0x260] sm:$0xff]
    %v171 = vld [vmem:[#allocation6 + $0x268] sm:$0xff]
    %v172 = vld [vmem:[#allocation6 + $0x270] sm:$0xff]
    %v173 = vld [vmem:[#allocation6 + $0x278] sm:$0xff]
    %v174 = vld [vmem:[#allocation6 + $0x280] sm:$0xff]
    %v175 = vld [vmem:[#allocation6 + $0x288] sm:$0xff]
    %v176 = vld [vmem:[#allocation6 + $0x290] sm:$0xff]
    %v177 = vld [vmem:[#allocation6 + $0x298] sm:$0xff]
    %v178 = vld [vmem:[#allocation6 + $0x2a0] sm:$0xff]
    %v179 = vld [vmem:[#allocation6 + $0x2a8] sm:$0xff]
    %v180 = vld [vmem:[#allocation6 + $0x2b0] sm:$0xff]
    %v181 = vld [vmem:[#allocation6 + $0x2b8] sm:$0xff]
    %v182 = vld [vmem:[#allocation6 + $0x2c0] sm:$0xff]
    %v183 = vld [vmem:[#allocation6 + $0x2c8] sm:$0xff]
    %v184 = vld [vmem:[#allocation6 + $0x2d0] sm:$0xff]
    %v185 = vld [vmem:[#allocation6 + $0x2d8] sm:$0xff]
    %v186 = vld [vmem:[#allocation6 + $0x2e0] sm:$0xff]
    %v187 = vld [vmem:[#allocation6 + $0x2e8] sm:$0xff]
    %v188 = vld [vmem:[#allocation6 + $0x2f0] sm:$0xff]
    %v189 = vld [vmem:[#allocation6 + $0x2f8] sm:$0xff]
    %v190 = vld [vmem:[#allocation6 + $0x300] sm:$0xff]
    %v191 = vld [vmem:[#allocation6 + $0x308] sm:$0xff]
    %v192 = vld [vmem:[#allocation6 + $0x310] sm:$0xff]
    %v193 = vld [vmem:[#allocation6 + $0x318] sm:$0xff]
    %v194 = vld [vmem:[#allocation6 + $0x320] sm:$0xff]
    %v195 = vld [vmem:[#allocation6 + $0x328] sm:$0xff]
    %v196 = vld [vmem:[#allocation6 + $0x330] sm:$0xff]
    %v197 = vld [vmem:[#allocation6 + $0x338] sm:$0xff]
    %v198 = vld [vmem:[#allocation6 + $0x340] sm:$0xff]
    %v199 = vld [vmem:[#allocation6 + $0x348] sm:$0xff]
    %v200 = vld [vmem:[#allocation6 + $0x350] sm:$0xff]
    %v201 = vld [vmem:[#allocation6 + $0x358] sm:$0xff]
    %v202 = vld [vmem:[#allocation6 + $0x360] sm:$0xff]
    %v203 = vld [vmem:[#allocation6 + $0x368] sm:$0xff]
    %v204 = vld [vmem:[#allocation6 + $0x370] sm:$0xff]
    %v205 = vld [vmem:[#allocation6 + $0x378] sm:$0xff]
    %v206 = vld [vmem:[#allocation6 + $0x380] sm:$0xff]
    %v207 = vld [vmem:[#allocation6 + $0x388] sm:$0xff]
    %v208 = vld [vmem:[#allocation6 + $0x390] sm:$0xff]
    %v209 = vld [vmem:[#allocation6 + $0x398] sm:$0xff]
    %v210 = vld [vmem:[#allocation6 + $0x3a0] sm:$0xff]
    %v211 = vld [vmem:[#allocation6 + $0x3a8] sm:$0xff]
    %v212 = vld [vmem:[#allocation6 + $0x3b0] sm:$0xff]
    %v213 = vld [vmem:[#allocation6 + $0x3b8] sm:$0xff]
    %v214 = vld [vmem:[#allocation6 + $0x3c0] sm:$0xff]
    %v215 = vld [vmem:[#allocation6 + $0x3c8] sm:$0xff]
    %v216 = vld [vmem:[#allocation6 + $0x3d0] sm:$0xff]
    %v217 = vld [vmem:[#allocation6 + $0x3d8] sm:$0xff]
    %v218 = vld [vmem:[#allocation6 + $0x3e0] sm:$0xff]
    %v219 = vld [vmem:[#allocation6 + $0x3e8] sm:$0xff]
    %v220 = vld [vmem:[#allocation6 + $0x3f0] sm:$0xff]
    %v221 = vld [vmem:[#allocation6 + $0x3f8] sm:$0xff]
    %v222 = vld [vmem:[#allocation6 + $0x400] sm:$0xff]
    %v223 = vld [vmem:[#allocation6 + $0x408] sm:$0xff]
    %v224 = vld [vmem:[#allocation6 + $0x410] sm:$0xff]
    %v225 = vld [vmem:[#allocation6 + $0x418] sm:$0xff]
    %v226 = vld [vmem:[#allocation6 + $0x420] sm:$0xff]
    %v227 = vld [vmem:[#allocation6 + $0x428] sm:$0xff]
    %v228 = vld [vmem:[#allocation6 + $0x430] sm:$0xff]
    %v229 = vld [vmem:[#allocation6 + $0x438] sm:$0xff]
    %v230 = vld [vmem:[#allocation6 + $0x440] sm:$0xff]
    %v231 = vld [vmem:[#allocation6 + $0x448] sm:$0xff]
    %v232 = vld [vmem:[#allocation6 + $0x450] sm:$0xff]
    %v233 = vld [vmem:[#allocation6 + $0x458] sm:$0xff]
    %v234 = vld [vmem:[#allocation6 + $0x460] sm:$0xff]
    %v235 = vld [vmem:[#allocation6 + $0x468] sm:$0xff]
    %v236 = vld [vmem:[#allocation6 + $0x470] sm:$0xff]
    %v237 = vld [vmem:[#allocation6 + $0x478] sm:$0xff]
    %v238 = vld [vmem:[#allocation6 + $0x480] sm:$0xff]
    %v239 = vld [vmem:[#allocation6 + $0x488] sm:$0xff]
    %v240 = vld [vmem:[#allocation6 + $0x490] sm:$0xff]
    %v241 = vld [vmem:[#allocation6 + $0x498] sm:$0xff]
    %v242 = vld [vmem:[#allocation6 + $0x4a0] sm:$0xff]
    %v243 = vld [vmem:[#allocation6 + $0x4a8] sm:$0xff]
    %v244 = vld [vmem:[#allocation6 + $0x4b0] sm:$0xff]
    %v245 = vld [vmem:[#allocation6 + $0x4b8] sm:$0xff]
    %v246 = vld [vmem:[#allocation6 + $0x4c0] sm:$0xff]
    %v247 = vld [vmem:[#allocation6 + $0x4c8] sm:$0xff]
    %v248 = vld [vmem:[#allocation6 + $0x4d0] sm:$0xff]
    %v249 = vld [vmem:[#allocation6 + $0x4d8] sm:$0xff]
    %v250 = vld [vmem:[#allocation6 + $0x4e0] sm:$0xff]
    %v251 = vld [vmem:[#allocation6 + $0x4e8] sm:$0xff]
    %v252 = vld [vmem:[#allocation6 + $0x4f0] sm:$0xff]
    %v253 = vld [vmem:[#allocation6 + $0x4f8] sm:$0xff]
    %v254 = vld [vmem:[#allocation6 + $0x500] sm:$0xff]
    %v255 = vld [vmem:[#allocation6 + $0x508] sm:$0xff]
    %v256 = vld [vmem:[#allocation6 + $0x510] sm:$0xff]
    %v257 = vld [vmem:[#allocation6 + $0x518] sm:$0xff]
    %v258 = vld [vmem:[#allocation6 + $0x520] sm:$0xff]
    %v259 = vld [vmem:[#allocation6 + $0x528] sm:$0xff]
    %v260 = vld [vmem:[#allocation6 + $0x530] sm:$0xff]
    %v261 = vld [vmem:[#allocation6 + $0x538] sm:$0xff]
    %v262 = vld [vmem:[#allocation6 + $0x540] sm:$0xff]
    %v263 = vld [vmem:[#allocation6 + $0x548] sm:$0xff]
    %v264 = vld [vmem:[#allocation6 + $0x550] sm:$0xff]
    %v265 = vld [vmem:[#allocation6 + $0x558] sm:$0xff]
    %v266 = vld [vmem:[#allocation6 + $0x560] sm:$0xff]
    %v267 = vld [vmem:[#allocation6 + $0x568] sm:$0xff]
    %v268 = vld [vmem:[#allocation6 + $0x570] sm:$0xff]
    %v269 = vld [vmem:[#allocation6 + $0x578] sm:$0xff]
    %v270 = vld [vmem:[#allocation6 + $0x580] sm:$0xff]
    %v271 = vld [vmem:[#allocation6 + $0x588] sm:$0xff]
    %v272 = vld [vmem:[#allocation6 + $0x590] sm:$0xff]
    %v273 = vld [vmem:[#allocation6 + $0x598] sm:$0xff]
    %v274 = vld [vmem:[#allocation6 + $0x5a0] sm:$0xff]
    %v275 = vld [vmem:[#allocation6 + $0x5a8] sm:$0xff]
    %v276 = vld [vmem:[#allocation6 + $0x5b0] sm:$0xff]
    %v277 = vld [vmem:[#allocation6 + $0x5b8] sm:$0xff]
    %v278 = vld [vmem:[#allocation6 + $0x5c0] sm:$0xff]
    %v279 = vld [vmem:[#allocation6 + $0x5c8] sm:$0xff]
    %v280 = vld [vmem:[#allocation6 + $0x5d0] sm:$0xff]
    %v281 = vld [vmem:[#allocation6 + $0x5d8] sm:$0xff]
    %v282 = vld [vmem:[#allocation6 + $0x5e0] sm:$0xff]
    %v283 = vld [vmem:[#allocation6 + $0x5e8] sm:$0xff]
    %v284 = vld [vmem:[#allocation6 + $0x5f0] sm:$0xff]
    %v285 = vld [vmem:[#allocation6 + $0x5f8] sm:$0xff]
    %v286 = vld [vmem:[#allocation6 + $0x600] sm:$0xff]
    %v287 = vld [vmem:[#allocation6 + $0x608] sm:$0xff]
    %v288 = vld [vmem:[#allocation6 + $0x610] sm:$0xff]
    %v289 = vld [vmem:[#allocation6 + $0x618] sm:$0xff]
    %v290 = vld [vmem:[#allocation6 + $0x620] sm:$0xff]
    %v291 = vld [vmem:[#allocation6 + $0x628] sm:$0xff]
    %v292 = vld [vmem:[#allocation6 + $0x630] sm:$0xff]
    %v293 = vld [vmem:[#allocation6 + $0x638] sm:$0xff]
    %v294 = vld [vmem:[#allocation6 + $0x640] sm:$0xff]
    %v295 = vld [vmem:[#allocation6 + $0x648] sm:$0xff]
    %v296 = vld [vmem:[#allocation6 + $0x650] sm:$0xff]
    %v297 = vld [vmem:[#allocation6 + $0x658] sm:$0xff]
    %v298 = vld [vmem:[#allocation6 + $0x660] sm:$0xff]
    %v299 = vld [vmem:[#allocation6 + $0x668] sm:$0xff]
    %v300 = vld [vmem:[#allocation6 + $0x670] sm:$0xff]
    %v301 = vld [vmem:[#allocation6 + $0x678] sm:$0xff]
    %v302 = vld [vmem:[#allocation6 + $0x680] sm:$0xff]
    %v303 = vld [vmem:[#allocation6 + $0x688] sm:$0xff]
    %v304 = vld [vmem:[#allocation6 + $0x690] sm:$0xff]
    %v305 = vld [vmem:[#allocation6 + $0x698] sm:$0xff]
    %v306 = vld [vmem:[#allocation6 + $0x6a0] sm:$0xff]
    %v307 = vld [vmem:[#allocation6 + $0x6a8] sm:$0xff]
    %v308 = vld [vmem:[#allocation6 + $0x6b0] sm:$0xff]
    %v309 = vld [vmem:[#allocation6 + $0x6b8] sm:$0xff]
    %v310 = vld [vmem:[#allocation6 + $0x6c0] sm:$0xff]
    %v311 = vld [vmem:[#allocation6 + $0x6c8] sm:$0xff]
    %v312 = vld [vmem:[#allocation6 + $0x6d0] sm:$0xff]
    %v313 = vld [vmem:[#allocation6 + $0x6d8] sm:$0xff]
    %v314 = vld [vmem:[#allocation6 + $0x6e0] sm:$0xff]
    %v315 = vld [vmem:[#allocation6 + $0x6e8] sm:$0xff]
    %v316 = vld [vmem:[#allocation6 + $0x6f0] sm:$0xff]
    %v317 = vld [vmem:[#allocation6 + $0x6f8] sm:$0xff]
    %v318 = vld [vmem:[#allocation6 + $0x700] sm:$0xff]
    %v319 = vld [vmem:[#allocation6 + $0x708] sm:$0xff]
    %v320 = vld [vmem:[#allocation6 + $0x710] sm:$0xff]
    %v321 = vld [vmem:[#allocation6 + $0x718] sm:$0xff]
    %v322 = vld [vmem:[#allocation6 + $0x720] sm:$0xff]
    %v323 = vld [vmem:[#allocation6 + $0x728] sm:$0xff]
    %v324 = vld [vmem:[#allocation6 + $0x730] sm:$0xff]
    %v325 = vld [vmem:[#allocation6 + $0x738] sm:$0xff]
    %v326 = vld [vmem:[#allocation6 + $0x740] sm:$0xff]
    %v327 = vld [vmem:[#allocation6 + $0x748] sm:$0xff]
    %v328 = vld [vmem:[#allocation6 + $0x750] sm:$0xff]
    %v329 = vld [vmem:[#allocation6 + $0x758] sm:$0xff]
    %v330 = vld [vmem:[#allocation6 + $0x760] sm:$0xff]
    %v331 = vld [vmem:[#allocation6 + $0x768] sm:$0xff]
    %v332 = vld [vmem:[#allocation6 + $0x770] sm:$0xff]
    %v333 = vld [vmem:[#allocation6 + $0x778] sm:$0xff]
    %v334 = vld [vmem:[#allocation6 + $0x780] sm:$0xff]
    %v335 = vld [vmem:[#allocation6 + $0x788] sm:$0xff]
    %v336 = vld [vmem:[#allocation6 + $0x790] sm:$0xff]
    %v337 = vld [vmem:[#allocation6 + $0x798] sm:$0xff]
    %v338 = vld [vmem:[#allocation6 + $0x7a0] sm:$0xff]
    %v339 = vld [vmem:[#allocation6 + $0x7a8] sm:$0xff]
    %v340 = vld [vmem:[#allocation6 + $0x7b0] sm:$0xff]
    %v341 = vld [vmem:[#allocation6 + $0x7b8] sm:$0xff]
    %v342 = vld [vmem:[#allocation6 + $0x7c0] sm:$0xff]
    %v343 = vld [vmem:[#allocation6 + $0x7c8] sm:$0xff]
    %v344 = vld [vmem:[#allocation6 + $0x7d0] sm:$0xff]
    %v345 = vld [vmem:[#allocation6 + $0x7d8] sm:$0xff]
    %v346 = vld [vmem:[#allocation6 + $0x7e0] sm:$0xff]
    %v347 = vld [vmem:[#allocation6 + $0x7e8] sm:$0xff]
    %v348 = vld [vmem:[#allocation6 + $0x7f0] sm:$0xff]
    %v349 = vld [vmem:[#allocation6 + $0x7f8] sm:$0xff]
    %v606 = vunpack.c.l.b16 %v94
    %v607 = vunpack.c.h.b16 %v94
    %v608 = vunpack.c.l.b16 %v95
    %v609 = vunpack.c.h.b16 %v95
    %v610 = vunpack.c.l.b16 %v96
    %v611 = vunpack.c.h.b16 %v96
    %v612 = vunpack.c.l.b16 %v97
    %v613 = vunpack.c.h.b16 %v97
    %v614 = vunpack.c.l.b16 %v98
    %v615 = vunpack.c.h.b16 %v98
    %v616 = vunpack.c.l.b16 %v99
    %v617 = vunpack.c.h.b16 %v99
    %v618 = vunpack.c.l.b16 %v100
    %v619 = vunpack.c.h.b16 %v100
    %v620 = vunpack.c.l.b16 %v101
    %v621 = vunpack.c.h.b16 %v101
    %v622 = vunpack.c.l.b16 %v102
    %v623 = vunpack.c.h.b16 %v102
    %v624 = vunpack.c.l.b16 %v103
    %v625 = vunpack.c.h.b16 %v103
    %v626 = vunpack.c.l.b16 %v104
    %v627 = vunpack.c.h.b16 %v104
    %v628 = vunpack.c.l.b16 %v105
    %v629 = vunpack.c.h.b16 %v105
    %v630 = vunpack.c.l.b16 %v106
    %v631 = vunpack.c.h.b16 %v106
    %v632 = vunpack.c.l.b16 %v107
    %v633 = vunpack.c.h.b16 %v107
    %v634 = vunpack.c.l.b16 %v108
    %v635 = vunpack.c.h.b16 %v108
    %v636 = vunpack.c.l.b16 %v109
    %v637 = vunpack.c.h.b16 %v109
    %v638 = vunpack.c.l.b16 %v110
    %v639 = vunpack.c.h.b16 %v110
    %v640 = vunpack.c.l.b16 %v111
    %v641 = vunpack.c.h.b16 %v111
    %v642 = vunpack.c.l.b16 %v112
    %v643 = vunpack.c.h.b16 %v112
    %v644 = vunpack.c.l.b16 %v113
    %v645 = vunpack.c.h.b16 %v113
    %v646 = vunpack.c.l.b16 %v114
    %v647 = vunpack.c.h.b16 %v114
    %v648 = vunpack.c.l.b16 %v115
    %v649 = vunpack.c.h.b16 %v115
    %v650 = vunpack.c.l.b16 %v116
    %v651 = vunpack.c.h.b16 %v116
    %v652 = vunpack.c.l.b16 %v117
    %v653 = vunpack.c.h.b16 %v117
    %v654 = vunpack.c.l.b16 %v118
    %v655 = vunpack.c.h.b16 %v118
    %v656 = vunpack.c.l.b16 %v119
    %v657 = vunpack.c.h.b16 %v119
    %v658 = vunpack.c.l.b16 %v120
    %v659 = vunpack.c.h.b16 %v120
    %v660 = vunpack.c.l.b16 %v121
    %v661 = vunpack.c.h.b16 %v121
    %v662 = vunpack.c.l.b16 %v122
    %v663 = vunpack.c.h.b16 %v122
    %v664 = vunpack.c.l.b16 %v123
    %v665 = vunpack.c.h.b16 %v123
    %v666 = vunpack.c.l.b16 %v124
    %v667 = vunpack.c.h.b16 %v124
    %v668 = vunpack.c.l.b16 %v125
    %v669 = vunpack.c.h.b16 %v125
    %v670 = vunpack.c.l.b16 %v126
    %v671 = vunpack.c.h.b16 %v126
    %v672 = vunpack.c.l.b16 %v127
    %v673 = vunpack.c.h.b16 %v127
    %v674 = vunpack.c.l.b16 %v128
    %v675 = vunpack.c.h.b16 %v128
    %v676 = vunpack.c.l.b16 %v129
    %v677 = vunpack.c.h.b16 %v129
    %v678 = vunpack.c.l.b16 %v130
    %v679 = vunpack.c.h.b16 %v130
    %v680 = vunpack.c.l.b16 %v131
    %v681 = vunpack.c.h.b16 %v131
    %v682 = vunpack.c.l.b16 %v132
    %v683 = vunpack.c.h.b16 %v132
    %v684 = vunpack.c.l.b16 %v133
    %v685 = vunpack.c.h.b16 %v133
    %v686 = vunpack.c.l.b16 %v134
    %v687 = vunpack.c.h.b16 %v134
    %v688 = vunpack.c.l.b16 %v135
    %v689 = vunpack.c.h.b16 %v135
    %v690 = vunpack.c.l.b16 %v136
    %v691 = vunpack.c.h.b16 %v136
    %v692 = vunpack.c.l.b16 %v137
    %v693 = vunpack.c.h.b16 %v137
    %v694 = vunpack.c.l.b16 %v138
    %v695 = vunpack.c.h.b16 %v138
    %v696 = vunpack.c.l.b16 %v139
    %v697 = vunpack.c.h.b16 %v139
    %v698 = vunpack.c.l.b16 %v140
    %v699 = vunpack.c.h.b16 %v140
    %v700 = vunpack.c.l.b16 %v141
    %v701 = vunpack.c.h.b16 %v141
    %v702 = vunpack.c.l.b16 %v142
    %v703 = vunpack.c.h.b16 %v142
    %v704 = vunpack.c.l.b16 %v143
    %v705 = vunpack.c.h.b16 %v143
    %v706 = vunpack.c.l.b16 %v144
    %v707 = vunpack.c.h.b16 %v144
    %v708 = vunpack.c.l.b16 %v145
    %v709 = vunpack.c.h.b16 %v145
    %v710 = vunpack.c.l.b16 %v146
    %v711 = vunpack.c.h.b16 %v146
    %v712 = vunpack.c.l.b16 %v147
    %v713 = vunpack.c.h.b16 %v147
    %v714 = vunpack.c.l.b16 %v148
    %v715 = vunpack.c.h.b16 %v148
    %v716 = vunpack.c.l.b16 %v149
    %v717 = vunpack.c.h.b16 %v149
    %v718 = vunpack.c.l.b16 %v150
    %v719 = vunpack.c.h.b16 %v150
    %v720 = vunpack.c.l.b16 %v151
    %v721 = vunpack.c.h.b16 %v151
    %v722 = vunpack.c.l.b16 %v152
    %v723 = vunpack.c.h.b16 %v152
    %v724 = vunpack.c.l.b16 %v153
    %v725 = vunpack.c.h.b16 %v153
    %v726 = vunpack.c.l.b16 %v154
    %v727 = vunpack.c.h.b16 %v154
    %v728 = vunpack.c.l.b16 %v155
    %v729 = vunpack.c.h.b16 %v155
    %v730 = vunpack.c.l.b16 %v156
    %v731 = vunpack.c.h.b16 %v156
    %v732 = vunpack.c.l.b16 %v157
    %v733 = vunpack.c.h.b16 %v157
    %v734 = vunpack.c.l.b16 %v158
    %v735 = vunpack.c.h.b16 %v158
    %v736 = vunpack.c.l.b16 %v159
    %v737 = vunpack.c.h.b16 %v159
    %v738 = vunpack.c.l.b16 %v160
    %v739 = vunpack.c.h.b16 %v160
    %v740 = vunpack.c.l.b16 %v161
    %v741 = vunpack.c.h.b16 %v161
    %v742 = vunpack.c.l.b16 %v162
    %v743 = vunpack.c.h.b16 %v162
    %v744 = vunpack.c.l.b16 %v163
    %v745 = vunpack.c.h.b16 %v163
    %v746 = vunpack.c.l.b16 %v164
    %v747 = vunpack.c.h.b16 %v164
    %v748 = vunpack.c.l.b16 %v165
    %v749 = vunpack.c.h.b16 %v165
    %v750 = vunpack.c.l.b16 %v166
    %v751 = vunpack.c.h.b16 %v166
    %v752 = vunpack.c.l.b16 %v167
    %v753 = vunpack.c.h.b16 %v167
    %v754 = vunpack.c.l.b16 %v168
    %v755 = vunpack.c.h.b16 %v168
    %v756 = vunpack.c.l.b16 %v169
    %v757 = vunpack.c.h.b16 %v169
    %v758 = vunpack.c.l.b16 %v170
    %v759 = vunpack.c.h.b16 %v170
    %v760 = vunpack.c.l.b16 %v171
    %v761 = vunpack.c.h.b16 %v171
    %v762 = vunpack.c.l.b16 %v172
    %v763 = vunpack.c.h.b16 %v172
    %v764 = vunpack.c.l.b16 %v173
    %v765 = vunpack.c.h.b16 %v173
    %v766 = vunpack.c.l.b16 %v174
    %v767 = vunpack.c.h.b16 %v174
    %v768 = vunpack.c.l.b16 %v175
    %v769 = vunpack.c.h.b16 %v175
    %v770 = vunpack.c.l.b16 %v176
    %v771 = vunpack.c.h.b16 %v176
    %v772 = vunpack.c.l.b16 %v177
    %v773 = vunpack.c.h.b16 %v177
    %v774 = vunpack.c.l.b16 %v178
    %v775 = vunpack.c.h.b16 %v178
    %v776 = vunpack.c.l.b16 %v179
    %v777 = vunpack.c.h.b16 %v179
    %v778 = vunpack.c.l.b16 %v180
    %v779 = vunpack.c.h.b16 %v180
    %v780 = vunpack.c.l.b16 %v181
    %v781 = vunpack.c.h.b16 %v181
    %v782 = vunpack.c.l.b16 %v182
    %v783 = vunpack.c.h.b16 %v182
    %v784 = vunpack.c.l.b16 %v183
    %v785 = vunpack.c.h.b16 %v183
    %v786 = vunpack.c.l.b16 %v184
    %v787 = vunpack.c.h.b16 %v184
    %v788 = vunpack.c.l.b16 %v185
    %v789 = vunpack.c.h.b16 %v185
    %v790 = vunpack.c.l.b16 %v186
    %v791 = vunpack.c.h.b16 %v186
    %v792 = vunpack.c.l.b16 %v187
    %v793 = vunpack.c.h.b16 %v187
    %v794 = vunpack.c.l.b16 %v188
    %v795 = vunpack.c.h.b16 %v188
    %v796 = vunpack.c.l.b16 %v189
    %v797 = vunpack.c.h.b16 %v189
    %v798 = vunpack.c.l.b16 %v190
    %v799 = vunpack.c.h.b16 %v190
    %v800 = vunpack.c.l.b16 %v191
    %v801 = vunpack.c.h.b16 %v191
    %v802 = vunpack.c.l.b16 %v192
    %v803 = vunpack.c.h.b16 %v192
    %v804 = vunpack.c.l.b16 %v193
    %v805 = vunpack.c.h.b16 %v193
    %v806 = vunpack.c.l.b16 %v194
    %v807 = vunpack.c.h.b16 %v194
    %v808 = vunpack.c.l.b16 %v195
    %v809 = vunpack.c.h.b16 %v195
    %v810 = vunpack.c.l.b16 %v196
    %v811 = vunpack.c.h.b16 %v196
    %v812 = vunpack.c.l.b16 %v197
    %v813 = vunpack.c.h.b16 %v197
    %v814 = vunpack.c.l.b16 %v198
    %v815 = vunpack.c.h.b16 %v198
    %v816 = vunpack.c.l.b16 %v199
    %v817 = vunpack.c.h.b16 %v199
    %v818 = vunpack.c.l.b16 %v200
    %v819 = vunpack.c.h.b16 %v200
    %v820 = vunpack.c.l.b16 %v201
    %v821 = vunpack.c.h.b16 %v201
    %v822 = vunpack.c.l.b16 %v202
    %v823 = vunpack.c.h.b16 %v202
    %v824 = vunpack.c.l.b16 %v203
    %v825 = vunpack.c.h.b16 %v203
    %v826 = vunpack.c.l.b16 %v204
    %v827 = vunpack.c.h.b16 %v204
    %v828 = vunpack.c.l.b16 %v205
    %v829 = vunpack.c.h.b16 %v205
    %v830 = vunpack.c.l.b16 %v206
    %v831 = vunpack.c.h.b16 %v206
    %v832 = vunpack.c.l.b16 %v207
    %v833 = vunpack.c.h.b16 %v207
    %v834 = vunpack.c.l.b16 %v208
    %v835 = vunpack.c.h.b16 %v208
    %v836 = vunpack.c.l.b16 %v209
    %v837 = vunpack.c.h.b16 %v209
    %v838 = vunpack.c.l.b16 %v210
    %v839 = vunpack.c.h.b16 %v210
    %v840 = vunpack.c.l.b16 %v211
    %v841 = vunpack.c.h.b16 %v211
    %v842 = vunpack.c.l.b16 %v212
    %v843 = vunpack.c.h.b16 %v212
    %v844 = vunpack.c.l.b16 %v213
    %v845 = vunpack.c.h.b16 %v213
    %v846 = vunpack.c.l.b16 %v214
    %v847 = vunpack.c.h.b16 %v214
    %v848 = vunpack.c.l.b16 %v215
    %v849 = vunpack.c.h.b16 %v215
    %v850 = vunpack.c.l.b16 %v216
    %v851 = vunpack.c.h.b16 %v216
    %v852 = vunpack.c.l.b16 %v217
    %v853 = vunpack.c.h.b16 %v217
    %v854 = vunpack.c.l.b16 %v218
    %v855 = vunpack.c.h.b16 %v218
    %v856 = vunpack.c.l.b16 %v219
    %v857 = vunpack.c.h.b16 %v219
    %v858 = vunpack.c.l.b16 %v220
    %v859 = vunpack.c.h.b16 %v220
    %v860 = vunpack.c.l.b16 %v221
    %v861 = vunpack.c.h.b16 %v221
    %v862 = vunpack.c.l.b16 %v222
    %v863 = vunpack.c.h.b16 %v222
    %v864 = vunpack.c.l.b16 %v223
    %v865 = vunpack.c.h.b16 %v223
    %v866 = vunpack.c.l.b16 %v224
    %v867 = vunpack.c.h.b16 %v224
    %v868 = vunpack.c.l.b16 %v225
    %v869 = vunpack.c.h.b16 %v225
    %v870 = vunpack.c.l.b16 %v226
    %v871 = vunpack.c.h.b16 %v226
    %v872 = vunpack.c.l.b16 %v227
    %v873 = vunpack.c.h.b16 %v227
    %v874 = vunpack.c.l.b16 %v228
    %v875 = vunpack.c.h.b16 %v228
    %v876 = vunpack.c.l.b16 %v229
    %v877 = vunpack.c.h.b16 %v229
    %v878 = vunpack.c.l.b16 %v230
    %v879 = vunpack.c.h.b16 %v230
    %v880 = vunpack.c.l.b16 %v231
    %v881 = vunpack.c.h.b16 %v231
    %v882 = vunpack.c.l.b16 %v232
    %v883 = vunpack.c.h.b16 %v232
    %v884 = vunpack.c.l.b16 %v233
    %v885 = vunpack.c.h.b16 %v233
    %v886 = vunpack.c.l.b16 %v234
    %v887 = vunpack.c.h.b16 %v234
    %v888 = vunpack.c.l.b16 %v235
    %v889 = vunpack.c.h.b16 %v235
    %v890 = vunpack.c.l.b16 %v236
    %v891 = vunpack.c.h.b16 %v236
    %v892 = vunpack.c.l.b16 %v237
    %v893 = vunpack.c.h.b16 %v237
    %v894 = vunpack.c.l.b16 %v238
    %v895 = vunpack.c.h.b16 %v238
    %v896 = vunpack.c.l.b16 %v239
    %v897 = vunpack.c.h.b16 %v239
    %v898 = vunpack.c.l.b16 %v240
    %v899 = vunpack.c.h.b16 %v240
    %v900 = vunpack.c.l.b16 %v241
    %v901 = vunpack.c.h.b16 %v241
    %v902 = vunpack.c.l.b16 %v242
    %v903 = vunpack.c.h.b16 %v242
    %v904 = vunpack.c.l.b16 %v243
    %v905 = vunpack.c.h.b16 %v243
    %v906 = vunpack.c.l.b16 %v244
    %v907 = vunpack.c.h.b16 %v244
    %v908 = vunpack.c.l.b16 %v245
    %v909 = vunpack.c.h.b16 %v245
    %v910 = vunpack.c.l.b16 %v246
    %v911 = vunpack.c.h.b16 %v246
    %v912 = vunpack.c.l.b16 %v247
    %v913 = vunpack.c.h.b16 %v247
    %v914 = vunpack.c.l.b16 %v248
    %v915 = vunpack.c.h.b16 %v248
    %v916 = vunpack.c.l.b16 %v249
    %v917 = vunpack.c.h.b16 %v249
    %v918 = vunpack.c.l.b16 %v250
    %v919 = vunpack.c.h.b16 %v250
    %v920 = vunpack.c.l.b16 %v251
    %v921 = vunpack.c.h.b16 %v251
    %v922 = vunpack.c.l.b16 %v252
    %v923 = vunpack.c.h.b16 %v252
    %v924 = vunpack.c.l.b16 %v253
    %v925 = vunpack.c.h.b16 %v253
    %v926 = vunpack.c.l.b16 %v254
    %v927 = vunpack.c.h.b16 %v254
    %v928 = vunpack.c.l.b16 %v255
    %v929 = vunpack.c.h.b16 %v255
    %v930 = vunpack.c.l.b16 %v256
    %v931 = vunpack.c.h.b16 %v256
    %v932 = vunpack.c.l.b16 %v257
    %v933 = vunpack.c.h.b16 %v257
    %v934 = vunpack.c.l.b16 %v258
    %v935 = vunpack.c.h.b16 %v258
    %v936 = vunpack.c.l.b16 %v259
    %v937 = vunpack.c.h.b16 %v259
    %v938 = vunpack.c.l.b16 %v260
    %v939 = vunpack.c.h.b16 %v260
    %v940 = vunpack.c.l.b16 %v261
    %v941 = vunpack.c.h.b16 %v261
    %v942 = vunpack.c.l.b16 %v262
    %v943 = vunpack.c.h.b16 %v262
    %v944 = vunpack.c.l.b16 %v263
    %v945 = vunpack.c.h.b16 %v263
    %v946 = vunpack.c.l.b16 %v264
    %v947 = vunpack.c.h.b16 %v264
    %v948 = vunpack.c.l.b16 %v265
    %v949 = vunpack.c.h.b16 %v265
    %v950 = vunpack.c.l.b16 %v266
    %v951 = vunpack.c.h.b16 %v266
    %v952 = vunpack.c.l.b16 %v267
    %v953 = vunpack.c.h.b16 %v267
    %v954 = vunpack.c.l.b16 %v268
    %v955 = vunpack.c.h.b16 %v268
    %v956 = vunpack.c.l.b16 %v269
    %v957 = vunpack.c.h.b16 %v269
    %v958 = vunpack.c.l.b16 %v270
    %v959 = vunpack.c.h.b16 %v270
    %v960 = vunpack.c.l.b16 %v271
    %v961 = vunpack.c.h.b16 %v271
    %v962 = vunpack.c.l.b16 %v272
    %v963 = vunpack.c.h.b16 %v272
    %v964 = vunpack.c.l.b16 %v273
    %v965 = vunpack.c.h.b16 %v273
    %v966 = vunpack.c.l.b16 %v274
    %v967 = vunpack.c.h.b16 %v274
    %v968 = vunpack.c.l.b16 %v275
    %v969 = vunpack.c.h.b16 %v275
    %v970 = vunpack.c.l.b16 %v276
    %v971 = vunpack.c.h.b16 %v276
    %v972 = vunpack.c.l.b16 %v277
    %v973 = vunpack.c.h.b16 %v277
    %v974 = vunpack.c.l.b16 %v278
    %v975 = vunpack.c.h.b16 %v278
    %v976 = vunpack.c.l.b16 %v279
    %v977 = vunpack.c.h.b16 %v279
    %v978 = vunpack.c.l.b16 %v280
    %v979 = vunpack.c.h.b16 %v280
    %v980 = vunpack.c.l.b16 %v281
    %v981 = vunpack.c.h.b16 %v281
    %v982 = vunpack.c.l.b16 %v282
    %v983 = vunpack.c.h.b16 %v282
    %v984 = vunpack.c.l.b16 %v283
    %v985 = vunpack.c.h.b16 %v283
    %v986 = vunpack.c.l.b16 %v284
    %v987 = vunpack.c.h.b16 %v284
    %v988 = vunpack.c.l.b16 %v285
    %v989 = vunpack.c.h.b16 %v285
    %v990 = vunpack.c.l.b16 %v286
    %v991 = vunpack.c.h.b16 %v286
    %v992 = vunpack.c.l.b16 %v287
    %v993 = vunpack.c.h.b16 %v287
    %v994 = vunpack.c.l.b16 %v288
    %v995 = vunpack.c.h.b16 %v288
    %v996 = vunpack.c.l.b16 %v289
    %v997 = vunpack.c.h.b16 %v289
    %v998 = vunpack.c.l.b16 %v290
    %v999 = vunpack.c.h.b16 %v290
    %v1000 = vunpack.c.l.b16 %v291
    %v1001 = vunpack.c.h.b16 %v291
    %v1002 = vunpack.c.l.b16 %v292
    %v1003 = vunpack.c.h.b16 %v292
    %v1004 = vunpack.c.l.b16 %v293
    %v1005 = vunpack.c.h.b16 %v293
    %v1006 = vunpack.c.l.b16 %v294
    %v1007 = vunpack.c.h.b16 %v294
    %v1008 = vunpack.c.l.b16 %v295
    %v1009 = vunpack.c.h.b16 %v295
    %v1010 = vunpack.c.l.b16 %v296
    %v1011 = vunpack.c.h.b16 %v296
    %v1012 = vunpack.c.l.b16 %v297
    %v1013 = vunpack.c.h.b16 %v297
    %v1014 = vunpack.c.l.b16 %v298
    %v1015 = vunpack.c.h.b16 %v298
    %v1016 = vunpack.c.l.b16 %v299
    %v1017 = vunpack.c.h.b16 %v299
    %v1018 = vunpack.c.l.b16 %v300
    %v1019 = vunpack.c.h.b16 %v300
    %v1020 = vunpack.c.l.b16 %v301
    %v1021 = vunpack.c.h.b16 %v301
    %v1022 = vunpack.c.l.b16 %v302
    %v1023 = vunpack.c.h.b16 %v302
    %v1024 = vunpack.c.l.b16 %v303
    %v1025 = vunpack.c.h.b16 %v303
    %v1026 = vunpack.c.l.b16 %v304
    %v1027 = vunpack.c.h.b16 %v304
    %v1028 = vunpack.c.l.b16 %v305
    %v1029 = vunpack.c.h.b16 %v305
    %v1030 = vunpack.c.l.b16 %v306
    %v1031 = vunpack.c.h.b16 %v306
    %v1032 = vunpack.c.l.b16 %v307
    %v1033 = vunpack.c.h.b16 %v307
    %v1034 = vunpack.c.l.b16 %v308
    %v1035 = vunpack.c.h.b16 %v308
    %v1036 = vunpack.c.l.b16 %v309
    %v1037 = vunpack.c.h.b16 %v309
    %v1038 = vunpack.c.l.b16 %v310
    %v1039 = vunpack.c.h.b16 %v310
    %v1040 = vunpack.c.l.b16 %v311
    %v1041 = vunpack.c.h.b16 %v311
    %v1042 = vunpack.c.l.b16 %v312
    %v1043 = vunpack.c.h.b16 %v312
    %v1044 = vunpack.c.l.b16 %v313
    %v1045 = vunpack.c.h.b16 %v313
    %v1046 = vunpack.c.l.b16 %v314
    %v1047 = vunpack.c.h.b16 %v314
    %v1048 = vunpack.c.l.b16 %v315
    %v1049 = vunpack.c.h.b16 %v315
    %v1050 = vunpack.c.l.b16 %v316
    %v1051 = vunpack.c.h.b16 %v316
    %v1052 = vunpack.c.l.b16 %v317
    %v1053 = vunpack.c.h.b16 %v317
    %v1054 = vunpack.c.l.b16 %v318
    %v1055 = vunpack.c.h.b16 %v318
    %v1056 = vunpack.c.l.b16 %v319
    %v1057 = vunpack.c.h.b16 %v319
    %v1058 = vunpack.c.l.b16 %v320
    %v1059 = vunpack.c.h.b16 %v320
    %v1060 = vunpack.c.l.b16 %v321
    %v1061 = vunpack.c.h.b16 %v321
    %v1062 = vunpack.c.l.b16 %v322
    %v1063 = vunpack.c.h.b16 %v322
    %v1064 = vunpack.c.l.b16 %v323
    %v1065 = vunpack.c.h.b16 %v323
    %v1066 = vunpack.c.l.b16 %v324
    %v1067 = vunpack.c.h.b16 %v324
    %v1068 = vunpack.c.l.b16 %v325
    %v1069 = vunpack.c.h.b16 %v325
    %v1070 = vunpack.c.l.b16 %v326
    %v1071 = vunpack.c.h.b16 %v326
    %v1072 = vunpack.c.l.b16 %v327
    %v1073 = vunpack.c.h.b16 %v327
    %v1074 = vunpack.c.l.b16 %v328
    %v1075 = vunpack.c.h.b16 %v328
    %v1076 = vunpack.c.l.b16 %v329
    %v1077 = vunpack.c.h.b16 %v329
    %v1078 = vunpack.c.l.b16 %v330
    %v1079 = vunpack.c.h.b16 %v330
    %v1080 = vunpack.c.l.b16 %v331
    %v1081 = vunpack.c.h.b16 %v331
    %v1082 = vunpack.c.l.b16 %v332
    %v1083 = vunpack.c.h.b16 %v332
    %v1084 = vunpack.c.l.b16 %v333
    %v1085 = vunpack.c.h.b16 %v333
    %v1086 = vunpack.c.l.b16 %v334
    %v1087 = vunpack.c.h.b16 %v334
    %v1088 = vunpack.c.l.b16 %v335
    %v1089 = vunpack.c.h.b16 %v335
    %v1090 = vunpack.c.l.b16 %v336
    %v1091 = vunpack.c.h.b16 %v336
    %v1092 = vunpack.c.l.b16 %v337
    %v1093 = vunpack.c.h.b16 %v337
    %v1094 = vunpack.c.l.b16 %v338
    %v1095 = vunpack.c.h.b16 %v338
    %v1096 = vunpack.c.l.b16 %v339
    %v1097 = vunpack.c.h.b16 %v339
    %v1098 = vunpack.c.l.b16 %v340
    %v1099 = vunpack.c.h.b16 %v340
    %v1100 = vunpack.c.l.b16 %v341
    %v1101 = vunpack.c.h.b16 %v341
    %v1102 = vunpack.c.l.b16 %v342
    %v1103 = vunpack.c.h.b16 %v342
    %v1104 = vunpack.c.l.b16 %v343
    %v1105 = vunpack.c.h.b16 %v343
    %v1106 = vunpack.c.l.b16 %v344
    %v1107 = vunpack.c.h.b16 %v344
    %v1108 = vunpack.c.l.b16 %v345
    %v1109 = vunpack.c.h.b16 %v345
    %v1110 = vunpack.c.l.b16 %v346
    %v1111 = vunpack.c.h.b16 %v346
    %v1112 = vunpack.c.l.b16 %v347
    %v1113 = vunpack.c.h.b16 %v347
    %v1114 = vunpack.c.l.b16 %v348
    %v1115 = vunpack.c.h.b16 %v348
    %v1116 = vunpack.c.l.b16 %v349
    %v1117 = vunpack.c.h.b16 %v349
    %v1118 = vpack.c.b16 %v610, %v606
    %v1119 = vpack.c.b16 %v611, %v607
    %v1120 = vpack.c.b16 %v612, %v608
    %v1121 = vpack.c.b16 %v613, %v609
    %v1122 = vpack.c.b16 %v618, %v614
    %v1123 = vpack.c.b16 %v619, %v615
    %v1124 = vpack.c.b16 %v620, %v616
    %v1125 = vpack.c.b16 %v621, %v617
    %v1126 = vpack.c.b16 %v626, %v622
    %v1127 = vpack.c.b16 %v627, %v623
    %v1128 = vpack.c.b16 %v628, %v624
    %v1129 = vpack.c.b16 %v629, %v625
    %v1130 = vpack.c.b16 %v634, %v630
    %v1131 = vpack.c.b16 %v635, %v631
    %v1132 = vpack.c.b16 %v636, %v632
    %v1133 = vpack.c.b16 %v637, %v633
    %v1134 = vpack.c.b16 %v642, %v638
    %v1135 = vpack.c.b16 %v643, %v639
    %v1136 = vpack.c.b16 %v644, %v640
    %v1137 = vpack.c.b16 %v645, %v641
    %v1138 = vpack.c.b16 %v650, %v646
    %v1139 = vpack.c.b16 %v651, %v647
    %v1140 = vpack.c.b16 %v652, %v648
    %v1141 = vpack.c.b16 %v653, %v649
    %v1142 = vpack.c.b16 %v658, %v654
    %v1143 = vpack.c.b16 %v659, %v655
    %v1144 = vpack.c.b16 %v660, %v656
    %v1145 = vpack.c.b16 %v661, %v657
    %v1146 = vpack.c.b16 %v666, %v662
    %v1147 = vpack.c.b16 %v667, %v663
    %v1148 = vpack.c.b16 %v668, %v664
    %v1149 = vpack.c.b16 %v669, %v665
    %v1150 = vpack.c.b16 %v674, %v670
    %v1151 = vpack.c.b16 %v675, %v671
    %v1152 = vpack.c.b16 %v676, %v672
    %v1153 = vpack.c.b16 %v677, %v673
    %v1154 = vpack.c.b16 %v682, %v678
    %v1155 = vpack.c.b16 %v683, %v679
    %v1156 = vpack.c.b16 %v684, %v680
    %v1157 = vpack.c.b16 %v685, %v681
    %v1158 = vpack.c.b16 %v690, %v686
    %v1159 = vpack.c.b16 %v691, %v687
    %v1160 = vpack.c.b16 %v692, %v688
    %v1161 = vpack.c.b16 %v693, %v689
    %v1162 = vpack.c.b16 %v698, %v694
    %v1163 = vpack.c.b16 %v699, %v695
    %v1164 = vpack.c.b16 %v700, %v696
    %v1165 = vpack.c.b16 %v701, %v697
    %v1166 = vpack.c.b16 %v706, %v702
    %v1167 = vpack.c.b16 %v707, %v703
    %v1168 = vpack.c.b16 %v708, %v704
    %v1169 = vpack.c.b16 %v709, %v705
    %v1170 = vpack.c.b16 %v714, %v710
    %v1171 = vpack.c.b16 %v715, %v711
    %v1172 = vpack.c.b16 %v716, %v712
    %v1173 = vpack.c.b16 %v717, %v713
    %v1174 = vpack.c.b16 %v722, %v718
    %v1175 = vpack.c.b16 %v723, %v719
    %v1176 = vpack.c.b16 %v724, %v720
    %v1177 = vpack.c.b16 %v725, %v721
    %v1178 = vpack.c.b16 %v730, %v726
    %v1179 = vpack.c.b16 %v731, %v727
    %v1180 = vpack.c.b16 %v732, %v728
    %v1181 = vpack.c.b16 %v733, %v729
    %v1182 = vpack.c.b16 %v738, %v734
    %v1183 = vpack.c.b16 %v739, %v735
    %v1184 = vpack.c.b16 %v740, %v736
    %v1185 = vpack.c.b16 %v741, %v737
    %v1186 = vpack.c.b16 %v746, %v742
    %v1187 = vpack.c.b16 %v747, %v743
    %v1188 = vpack.c.b16 %v748, %v744
    %v1189 = vpack.c.b16 %v749, %v745
    %v1190 = vpack.c.b16 %v754, %v750
    %v1191 = vpack.c.b16 %v755, %v751
    %v1192 = vpack.c.b16 %v756, %v752
    %v1193 = vpack.c.b16 %v757, %v753
    %v1194 = vpack.c.b16 %v762, %v758
    %v1195 = vpack.c.b16 %v763, %v759
    %v1196 = vpack.c.b16 %v764, %v760
    %v1197 = vpack.c.b16 %v765, %v761
    %v1198 = vpack.c.b16 %v770, %v766
    %v1199 = vpack.c.b16 %v771, %v767
    %v1200 = vpack.c.b16 %v772, %v768
    %v1201 = vpack.c.b16 %v773, %v769
    %v1202 = vpack.c.b16 %v778, %v774
    %v1203 = vpack.c.b16 %v779, %v775
    %v1204 = vpack.c.b16 %v780, %v776
    %v1205 = vpack.c.b16 %v781, %v777
    %v1206 = vpack.c.b16 %v786, %v782
    %v1207 = vpack.c.b16 %v787, %v783
    %v1208 = vpack.c.b16 %v788, %v784
    %v1209 = vpack.c.b16 %v789, %v785
    %v1210 = vpack.c.b16 %v794, %v790
    %v1211 = vpack.c.b16 %v795, %v791
    %v1212 = vpack.c.b16 %v796, %v792
    %v1213 = vpack.c.b16 %v797, %v793
    %v1214 = vpack.c.b16 %v802, %v798
    %v1215 = vpack.c.b16 %v803, %v799
    %v1216 = vpack.c.b16 %v804, %v800
    %v1217 = vpack.c.b16 %v805, %v801
    %v1218 = vpack.c.b16 %v810, %v806
    %v1219 = vpack.c.b16 %v811, %v807
    %v1220 = vpack.c.b16 %v812, %v808
    %v1221 = vpack.c.b16 %v813, %v809
    %v1222 = vpack.c.b16 %v818, %v814
    %v1223 = vpack.c.b16 %v819, %v815
    %v1224 = vpack.c.b16 %v820, %v816
    %v1225 = vpack.c.b16 %v821, %v817
    %v1226 = vpack.c.b16 %v826, %v822
    %v1227 = vpack.c.b16 %v827, %v823
    %v1228 = vpack.c.b16 %v828, %v824
    %v1229 = vpack.c.b16 %v829, %v825
    %v1230 = vpack.c.b16 %v834, %v830
    %v1231 = vpack.c.b16 %v835, %v831
    %v1232 = vpack.c.b16 %v836, %v832
    %v1233 = vpack.c.b16 %v837, %v833
    %v1234 = vpack.c.b16 %v842, %v838
    %v1235 = vpack.c.b16 %v843, %v839
    %v1236 = vpack.c.b16 %v844, %v840
    %v1237 = vpack.c.b16 %v845, %v841
    %v1238 = vpack.c.b16 %v850, %v846
    %v1239 = vpack.c.b16 %v851, %v847
    %v1240 = vpack.c.b16 %v852, %v848
    %v1241 = vpack.c.b16 %v853, %v849
    %v1242 = vpack.c.b16 %v858, %v854
    %v1243 = vpack.c.b16 %v859, %v855
    %v1244 = vpack.c.b16 %v860, %v856
    %v1245 = vpack.c.b16 %v861, %v857
    %v1246 = vpack.c.b16 %v866, %v862
    %v1247 = vpack.c.b16 %v867, %v863
    %v1248 = vpack.c.b16 %v868, %v864
    %v1249 = vpack.c.b16 %v869, %v865
    %v1250 = vpack.c.b16 %v874, %v870
    %v1251 = vpack.c.b16 %v875, %v871
    %v1252 = vpack.c.b16 %v876, %v872
    %v1253 = vpack.c.b16 %v877, %v873
    %v1254 = vpack.c.b16 %v882, %v878
    %v1255 = vpack.c.b16 %v883, %v879
    %v1256 = vpack.c.b16 %v884, %v880
    %v1257 = vpack.c.b16 %v885, %v881
    %v1258 = vpack.c.b16 %v890, %v886
    %v1259 = vpack.c.b16 %v891, %v887
    %v1260 = vpack.c.b16 %v892, %v888
    %v1261 = vpack.c.b16 %v893, %v889
    %v1262 = vpack.c.b16 %v898, %v894
    %v1263 = vpack.c.b16 %v899, %v895
    %v1264 = vpack.c.b16 %v900, %v896
    %v1265 = vpack.c.b16 %v901, %v897
    %v1266 = vpack.c.b16 %v906, %v902
    %v1267 = vpack.c.b16 %v907, %v903
    %v1268 = vpack.c.b16 %v908, %v904
    %v1269 = vpack.c.b16 %v909, %v905
    %v1270 = vpack.c.b16 %v914, %v910
    %v1271 = vpack.c.b16 %v915, %v911
    %v1272 = vpack.c.b16 %v916, %v912
    %v1273 = vpack.c.b16 %v917, %v913
    %v1274 = vpack.c.b16 %v922, %v918
    %v1275 = vpack.c.b16 %v923, %v919
    %v1276 = vpack.c.b16 %v924, %v920
    %v1277 = vpack.c.b16 %v925, %v921
    %v1278 = vpack.c.b16 %v930, %v926
    %v1279 = vpack.c.b16 %v931, %v927
    %v1280 = vpack.c.b16 %v932, %v928
    %v1281 = vpack.c.b16 %v933, %v929
    %v1282 = vpack.c.b16 %v938, %v934
    %v1283 = vpack.c.b16 %v939, %v935
    %v1284 = vpack.c.b16 %v940, %v936
    %v1285 = vpack.c.b16 %v941, %v937
    %v1286 = vpack.c.b16 %v946, %v942
    %v1287 = vpack.c.b16 %v947, %v943
    %v1288 = vpack.c.b16 %v948, %v944
    %v1289 = vpack.c.b16 %v949, %v945
    %v1290 = vpack.c.b16 %v954, %v950
    %v1291 = vpack.c.b16 %v955, %v951
    %v1292 = vpack.c.b16 %v956, %v952
    %v1293 = vpack.c.b16 %v957, %v953
    %v1294 = vpack.c.b16 %v962, %v958
    %v1295 = vpack.c.b16 %v963, %v959
    %v1296 = vpack.c.b16 %v964, %v960
    %v1297 = vpack.c.b16 %v965, %v961
    %v1298 = vpack.c.b16 %v970, %v966
    %v1299 = vpack.c.b16 %v971, %v967
    %v1300 = vpack.c.b16 %v972, %v968
    %v1301 = vpack.c.b16 %v973, %v969
    %v1302 = vpack.c.b16 %v978, %v974
    %v1303 = vpack.c.b16 %v979, %v975
    %v1304 = vpack.c.b16 %v980, %v976
    %v1305 = vpack.c.b16 %v981, %v977
    %v1306 = vpack.c.b16 %v986, %v982
    %v1307 = vpack.c.b16 %v987, %v983
    %v1308 = vpack.c.b16 %v988, %v984
    %v1309 = vpack.c.b16 %v989, %v985
    %v1310 = vpack.c.b16 %v994, %v990
    %v1311 = vpack.c.b16 %v995, %v991
    %v1312 = vpack.c.b16 %v996, %v992
    %v1313 = vpack.c.b16 %v997, %v993
    %v1314 = vpack.c.b16 %v1002, %v998
    %v1315 = vpack.c.b16 %v1003, %v999
    %v1316 = vpack.c.b16 %v1004, %v1000
    %v1317 = vpack.c.b16 %v1005, %v1001
    %v1318 = vpack.c.b16 %v1010, %v1006
    %v1319 = vpack.c.b16 %v1011, %v1007
    %v1320 = vpack.c.b16 %v1012, %v1008
    %v1321 = vpack.c.b16 %v1013, %v1009
    %v1322 = vpack.c.b16 %v1018, %v1014
    %v1323 = vpack.c.b16 %v1019, %v1015
    %v1324 = vpack.c.b16 %v1020, %v1016
    %v1325 = vpack.c.b16 %v1021, %v1017
    %v1326 = vpack.c.b16 %v1026, %v1022
    %v1327 = vpack.c.b16 %v1027, %v1023
    %v1328 = vpack.c.b16 %v1028, %v1024
    %v1329 = vpack.c.b16 %v1029, %v1025
    %v1330 = vpack.c.b16 %v1034, %v1030
    %v1331 = vpack.c.b16 %v1035, %v1031
    %v1332 = vpack.c.b16 %v1036, %v1032
    %v1333 = vpack.c.b16 %v1037, %v1033
    %v1334 = vpack.c.b16 %v1042, %v1038
    %v1335 = vpack.c.b16 %v1043, %v1039
    %v1336 = vpack.c.b16 %v1044, %v1040
    %v1337 = vpack.c.b16 %v1045, %v1041
    %v1338 = vpack.c.b16 %v1050, %v1046
    %v1339 = vpack.c.b16 %v1051, %v1047
    %v1340 = vpack.c.b16 %v1052, %v1048
    %v1341 = vpack.c.b16 %v1053, %v1049
    %v1342 = vpack.c.b16 %v1058, %v1054
    %v1343 = vpack.c.b16 %v1059, %v1055
    %v1344 = vpack.c.b16 %v1060, %v1056
    %v1345 = vpack.c.b16 %v1061, %v1057
    %v1346 = vpack.c.b16 %v1066, %v1062
    %v1347 = vpack.c.b16 %v1067, %v1063
    %v1348 = vpack.c.b16 %v1068, %v1064
    %v1349 = vpack.c.b16 %v1069, %v1065
    %v1350 = vpack.c.b16 %v1074, %v1070
    %v1351 = vpack.c.b16 %v1075, %v1071
    %v1352 = vpack.c.b16 %v1076, %v1072
    %v1353 = vpack.c.b16 %v1077, %v1073
    %v1354 = vpack.c.b16 %v1082, %v1078
    %v1355 = vpack.c.b16 %v1083, %v1079
    %v1356 = vpack.c.b16 %v1084, %v1080
    %v1357 = vpack.c.b16 %v1085, %v1081
    %v1358 = vpack.c.b16 %v1090, %v1086
    %v1359 = vpack.c.b16 %v1091, %v1087
    %v1360 = vpack.c.b16 %v1092, %v1088
    %v1361 = vpack.c.b16 %v1093, %v1089
    %v1362 = vpack.c.b16 %v1098, %v1094
    %v1363 = vpack.c.b16 %v1099, %v1095
    %v1364 = vpack.c.b16 %v1100, %v1096
    %v1365 = vpack.c.b16 %v1101, %v1097
    %v1366 = vpack.c.b16 %v1106, %v1102
    %v1367 = vpack.c.b16 %v1107, %v1103
    %v1368 = vpack.c.b16 %v1108, %v1104
    %v1369 = vpack.c.b16 %v1109, %v1105
    %v1370 = vpack.c.b16 %v1114, %v1110
    %v1371 = vpack.c.b16 %v1115, %v1111
    %v1372 = vpack.c.b16 %v1116, %v1112
    %v1373 = vpack.c.b16 %v1117, %v1113
    %1630 = vmatprep.subr.bf16.mxu0 %v1147
    %1631 = vmatpush1.bf16.msra.mxu0 %v1146
    %1632 = vmatprep.subr.bf16.mxu0 %v1143
    %1633 = vmatpush1.bf16.msra.mxu0 %v1142
    %1634 = vmatprep.subr.bf16.mxu0 %v1139
    %1635 = vmatpush1.bf16.msra.mxu0 %v1138
    %1636 = vmatprep.subr.bf16.mxu0 %v1135
    %1637 = vmatpush1.bf16.msra.mxu0 %v1134
    %1638 = vmatprep.subr.bf16.mxu0 %v1131
    %1639 = vmatpush1.bf16.msra.mxu0 %v1130
    %1640 = vmatprep.subr.bf16.mxu0 %v1127
    %1641 = vmatpush1.bf16.msra.mxu0 %v1126
    %1642 = vmatprep.subr.bf16.mxu0 %v1123
    %1643 = vmatpush1.bf16.msra.mxu0 %v1122
    %1644 = vmatprep.subr.bf16.mxu0 %v1119
    %1645 = vmatpush1.bf16.msra.mxu0 %v1118
    %1646 = vmatprep.subr.bf16.mxu0 %v1179
    %1647 = vmatpush2.bf16.msra.mxu0 %v1178
    %1648 = vmatprep.subr.bf16.mxu0 %v1175
    %1649 = vmatpush2.bf16.msra.mxu0 %v1174
    %1650 = vmatprep.subr.bf16.mxu0 %v1171
    %1651 = vmatpush2.bf16.msra.mxu0 %v1170
    %1652 = vmatprep.subr.bf16.mxu0 %v1167
    %1653 = vmatpush2.bf16.msra.mxu0 %v1166
    %1654 = vmatprep.subr.bf16.mxu0 %v1163
    %1655 = vmatpush2.bf16.msra.mxu0 %v1162
    %1656 = vmatprep.subr.bf16.mxu0 %v1159
    %1657 = vmatpush2.bf16.msra.mxu0 %v1158
    %1658 = vmatprep.subr.bf16.mxu0 %v1155
    %1659 = vmatpush2.bf16.msra.mxu0 %v1154
    %1660 = vmatprep.subr.bf16.mxu0 %v1151
    %1661 = vmatpush2.bf16.msra.mxu0 %v1150
    %1662 = vmatprep.mubr.bf16.mxu0 %v83
    %1663 = vmatmul.mubr.bf16.gmra.mxu0 %v82
    %v1664 = vpop.f32.mrf.mxu0
    %v1665 = vadd.f32 0.0, %v1664
    %v1666 = vpop.f32.mrf.mxu0
    %v1667 = vadd.f32 0.0, %v1666
    %v1668 = vpop.f32.mrf.mxu0
    %v1669 = vpop.f32.mrf.mxu0
    %1670 = vdwg.mxu0
    %1671 = vmatprep.subr.bf16.mxu0 %v1211
    %1672 = vmatpush1.bf16.msra.mxu0 %v1210
    %1673 = vmatprep.subr.bf16.mxu0 %v1207
    %1674 = vmatpush1.bf16.msra.mxu0 %v1206
    %1675 = vmatprep.subr.bf16.mxu0 %v1203
    %1676 = vmatpush1.bf16.msra.mxu0 %v1202
    %1677 = vmatprep.subr.bf16.mxu0 %v1199
    %1678 = vmatpush1.bf16.msra.mxu0 %v1198
    %1679 = vmatprep.subr.bf16.mxu0 %v1195
    %1680 = vmatpush1.bf16.msra.mxu0 %v1194
    %1681 = vmatprep.subr.bf16.mxu0 %v1191
    %1682 = vmatpush1.bf16.msra.mxu0 %v1190
    %1683 = vmatprep.subr.bf16.mxu0 %v1187
    %1684 = vmatpush1.bf16.msra.mxu0 %v1186
    %1685 = vmatprep.subr.bf16.mxu0 %v1183
    %1686 = vmatpush1.bf16.msra.mxu0 %v1182
    %1687 = vmatprep.subr.bf16.mxu0 %v1243
    %1688 = vmatpush2.bf16.msra.mxu0 %v1242
    %1689 = vmatprep.subr.bf16.mxu0 %v1239
    %1690 = vmatpush2.bf16.msra.mxu0 %v1238
    %1691 = vmatprep.subr.bf16.mxu0 %v1235
    %1692 = vmatpush2.bf16.msra.mxu0 %v1234
    %1693 = vmatprep.subr.bf16.mxu0 %v1231
    %1694 = vmatpush2.bf16.msra.mxu0 %v1230
    %1695 = vmatprep.subr.bf16.mxu0 %v1227
    %1696 = vmatpush2.bf16.msra.mxu0 %v1226
    %1697 = vmatprep.subr.bf16.mxu0 %v1223
    %1698 = vmatpush2.bf16.msra.mxu0 %v1222
    %1699 = vmatprep.subr.bf16.mxu0 %v1219
    %1700 = vmatpush2.bf16.msra.mxu0 %v1218
    %1701 = vmatprep.subr.bf16.mxu0 %v1215
    %1702 = vmatpush2.bf16.msra.mxu0 %v1214
    %1703 = vmatprep.mubr.bf16.mxu0 %v85
    %1704 = vmatmul.mubr.bf16.gmra.mxu0 %v84
    %v1705 = vpop.f32.mrf.mxu0
    %v1706 = vadd.f32 %v1665, %v1705
    %v1707 = vpop.f32.mrf.mxu0
    %v1708 = vadd.f32 %v1667, %v1707
    %v1709 = vpop.f32.mrf.mxu0
    %v1710 = vpop.f32.mrf.mxu0
    %1711 = vdwg.mxu0
    %1712 = vmatprep.subr.bf16.mxu0 %v1275
    %1713 = vmatpush1.bf16.msra.mxu0 %v1274
    %1714 = vmatprep.subr.bf16.mxu0 %v1271
    %1715 = vmatpush1.bf16.msra.mxu0 %v1270
    %1716 = vmatprep.subr.bf16.mxu0 %v1267
    %1717 = vmatpush1.bf16.msra.mxu0 %v1266
    %1718 = vmatprep.subr.bf16.mxu0 %v1263
    %1719 = vmatpush1.bf16.msra.mxu0 %v1262
    %1720 = vmatprep.subr.bf16.mxu0 %v1259
    %1721 = vmatpush1.bf16.msra.mxu0 %v1258
    %1722 = vmatprep.subr.bf16.mxu0 %v1255
    %1723 = vmatpush1.bf16.msra.mxu0 %v1254
    %1724 = vmatprep.subr.bf16.mxu0 %v1251
    %1725 = vmatpush1.bf16.msra.mxu0 %v1250
    %1726 = vmatprep.subr.bf16.mxu0 %v1247
    %1727 = vmatpush1.bf16.msra.mxu0 %v1246
    %1728 = vmatprep.subr.bf16.mxu0 %v1307
    %1729 = vmatpush2.bf16.msra.mxu0 %v1306
    %1730 = vmatprep.subr.bf16.mxu0 %v1303
    %1731 = vmatpush2.bf16.msra.mxu0 %v1302
    %1732 = vmatprep.subr.bf16.mxu0 %v1299
    %1733 = vmatpush2.bf16.msra.mxu0 %v1298
    %1734 = vmatprep.subr.bf16.mxu0 %v1295
    %1735 = vmatpush2.bf16.msra.mxu0 %v1294
    %1736 = vmatprep.subr.bf16.mxu0 %v1291
    %1737 = vmatpush2.bf16.msra.mxu0 %v1290
    %1738 = vmatprep.subr.bf16.mxu0 %v1287
    %1739 = vmatpush2.bf16.msra.mxu0 %v1286
    %1740 = vmatprep.subr.bf16.mxu0 %v1283
    %1741 = vmatpush2.bf16.msra.mxu0 %v1282
    %1742 = vmatprep.subr.bf16.mxu0 %v1279
    %1743 = vmatpush2.bf16.msra.mxu0 %v1278
    %1744 = vmatprep.mubr.bf16.mxu0 %v87
    %1745 = vmatmul.mubr.bf16.gmra.mxu0 %v86
    %v1746 = vpop.f32.mrf.mxu0
    %v1747 = vadd.f32 %v1706, %v1746
    %v1748 = vpop.f32.mrf.mxu0
    %v1749 = vadd.f32 %v1708, %v1748
    %v1750 = vpop.f32.mrf.mxu0
    %v1751 = vpop.f32.mrf.mxu0
    %1752 = vdwg.mxu0
    %1753 = vmatprep.subr.bf16.mxu0 %v1339
    %1754 = vmatpush1.bf16.msra.mxu0 %v1338
    %1755 = vmatprep.subr.bf16.mxu0 %v1335
    %1756 = vmatpush1.bf16.msra.mxu0 %v1334
    %1757 = vmatprep.subr.bf16.mxu0 %v1331
    %1758 = vmatpush1.bf16.msra.mxu0 %v1330
    %1759 = vmatprep.subr.bf16.mxu0 %v1327
    %1760 = vmatpush1.bf16.msra.mxu0 %v1326
    %1761 = vmatprep.subr.bf16.mxu0 %v1323
    %1762 = vmatpush1.bf16.msra.mxu0 %v1322
    %1763 = vmatprep.subr.bf16.mxu0 %v1319
    %1764 = vmatpush1.bf16.msra.mxu0 %v1318
    %1765 = vmatprep.subr.bf16.mxu0 %v1315
    %1766 = vmatpush1.bf16.msra.mxu0 %v1314
    %1767 = vmatprep.subr.bf16.mxu0 %v1311
    %1768 = vmatpush1.bf16.msra.mxu0 %v1310
    %1769 = vmatprep.subr.bf16.mxu0 %v1371
    %1770 = vmatpush2.bf16.msra.mxu0 %v1370
    %1771 = vmatprep.subr.bf16.mxu0 %v1367
    %1772 = vmatpush2.bf16.msra.mxu0 %v1366
    %1773 = vmatprep.subr.bf16.mxu0 %v1363
    %1774 = vmatpush2.bf16.msra.mxu0 %v1362
    %1775 = vmatprep.subr.bf16.mxu0 %v1359
    %1776 = vmatpush2.bf16.msra.mxu0 %v1358
    %1777 = vmatprep.subr.bf16.mxu0 %v1355
    %1778 = vmatpush2.bf16.msra.mxu0 %v1354
    %1779 = vmatprep.subr.bf16.mxu0 %v1351
    %1780 = vmatpush2.bf16.msra.mxu0 %v1350
    %1781 = vmatprep.subr.bf16.mxu0 %v1347
    %1782 = vmatpush2.bf16.msra.mxu0 %v1346
    %1783 = vmatprep.subr.bf16.mxu0 %v1343
    %1784 = vmatpush2.bf16.msra.mxu0 %v1342
    %1785 = vmatprep.mubr.bf16.mxu0 %v89
    %1786 = vmatmul.mubr.bf16.gmra.mxu0 %v88
    %v1787 = vpop.f32.mrf.mxu0
    %v1788 = vadd.f32 %v1747, %v1787
    %v1789 = vpop.f32.mrf.mxu0
    %v1790 = vadd.f32 %v1749, %v1789
    %v1791 = vpop.f32.mrf.mxu0
    %v1792 = vpop.f32.mrf.mxu0
    %1793 = vdwg.mxu0
    %1794 = vmatprep.subr.bf16.mxu0 %v1149
    %1795 = vmatpush1.bf16.msra.mxu0 %v1148
    %1796 = vmatprep.subr.bf16.mxu0 %v1145
    %1797 = vmatpush1.bf16.msra.mxu0 %v1144
    %1798 = vmatprep.subr.bf16.mxu0 %v1141
    %1799 = vmatpush1.bf16.msra.mxu0 %v1140
    %1800 = vmatprep.subr.bf16.mxu0 %v1137
    %1801 = vmatpush1.bf16.msra.mxu0 %v1136
    %1802 = vmatprep.subr.bf16.mxu0 %v1133
    %1803 = vmatpush1.bf16.msra.mxu0 %v1132
    %1804 = vmatprep.subr.bf16.mxu0 %v1129
    %1805 = vmatpush1.bf16.msra.mxu0 %v1128
    %1806 = vmatprep.subr.bf16.mxu0 %v1125
    %1807 = vmatpush1.bf16.msra.mxu0 %v1124
    %1808 = vmatprep.subr.bf16.mxu0 %v1121
    %1809 = vmatpush1.bf16.msra.mxu0 %v1120
    %1810 = vmatprep.subr.bf16.mxu0 %v1181
    %1811 = vmatpush2.bf16.msra.mxu0 %v1180
    %1812 = vmatprep.subr.bf16.mxu0 %v1177
    %1813 = vmatpush2.bf16.msra.mxu0 %v1176
    %1814 = vmatprep.subr.bf16.mxu0 %v1173
    %1815 = vmatpush2.bf16.msra.mxu0 %v1172
    %1816 = vmatprep.subr.bf16.mxu0 %v1169
    %1817 = vmatpush2.bf16.msra.mxu0 %v1168
    %1818 = vmatprep.subr.bf16.mxu0 %v1165
    %1819 = vmatpush2.bf16.msra.mxu0 %v1164
    %1820 = vmatprep.subr.bf16.mxu0 %v1161
    %1821 = vmatpush2.bf16.msra.mxu0 %v1160
    %1822 = vmatprep.subr.bf16.mxu0 %v1157
    %1823 = vmatpush2.bf16.msra.mxu0 %v1156
    %1824 = vmatprep.subr.bf16.mxu0 %v1153
    %1825 = vmatpush2.bf16.msra.mxu0 %v1152
    %1826 = vmatprep.mubr.bf16.mxu0 %v83
    %1827 = vmatmul.mubr.bf16.gmra.mxu0 %v82
    %v1828 = vpop.f32.mrf.mxu0
    %v1829 = vadd.f32 0.0, %v1828
    %v1830 = vpop.f32.mrf.mxu0
    %v1831 = vadd.f32 0.0, %v1830
    %v1832 = vpop.f32.mrf.mxu0
    %v1833 = vpop.f32.mrf.mxu0
    %1834 = vdwg.mxu0
    %1835 = vmatprep.subr.bf16.mxu0 %v1213
    %1836 = vmatpush1.bf16.msra.mxu0 %v1212
    %1837 = vmatprep.subr.bf16.mxu0 %v1209
    %1838 = vmatpush1.bf16.msra.mxu0 %v1208
    %1839 = vmatprep.subr.bf16.mxu0 %v1205
    %1840 = vmatpush1.bf16.msra.mxu0 %v1204
    %1841 = vmatprep.subr.bf16.mxu0 %v1201
    %1842 = vmatpush1.bf16.msra.mxu0 %v1200
    %1843 = vmatprep.subr.bf16.mxu0 %v1197
    %1844 = vmatpush1.bf16.msra.mxu0 %v1196
    %1845 = vmatprep.subr.bf16.mxu0 %v1193
    %1846 = vmatpush1.bf16.msra.mxu0 %v1192
    %1847 = vmatprep.subr.bf16.mxu0 %v1189
    %1848 = vmatpush1.bf16.msra.mxu0 %v1188
    %1849 = vmatprep.subr.bf16.mxu0 %v1185
    %1850 = vmatpush1.bf16.msra.mxu0 %v1184
    %1851 = vmatprep.subr.bf16.mxu0 %v1245
    %1852 = vmatpush2.bf16.msra.mxu0 %v1244
    %1853 = vmatprep.subr.bf16.mxu0 %v1241
    %1854 = vmatpush2.bf16.msra.mxu0 %v1240
    %1855 = vmatprep.subr.bf16.mxu0 %v1237
    %1856 = vmatpush2.bf16.msra.mxu0 %v1236
    %1857 = vmatprep.subr.bf16.mxu0 %v1233
    %1858 = vmatpush2.bf16.msra.mxu0 %v1232
    %1859 = vmatprep.subr.bf16.mxu0 %v1229
    %1860 = vmatpush2.bf16.msra.mxu0 %v1228
    %1861 = vmatprep.subr.bf16.mxu0 %v1225
    %1862 = vmatpush2.bf16.msra.mxu0 %v1224
    %1863 = vmatprep.subr.bf16.mxu0 %v1221
    %1864 = vmatpush2.bf16.msra.mxu0 %v1220
    %1865 = vmatprep.subr.bf16.mxu0 %v1217
    %1866 = vmatpush2.bf16.msra.mxu0 %v1216
    %1867 = vmatprep.mubr.bf16.mxu0 %v85
    %1868 = vmatmul.mubr.bf16.gmra.mxu0 %v84
    %v1869 = vpop.f32.mrf.mxu0
    %v1870 = vadd.f32 %v1829, %v1869
    %v1871 = vpop.f32.mrf.mxu0
    %v1872 = vadd.f32 %v1831, %v1871
    %v1873 = vpop.f32.mrf.mxu0
    %v1874 = vpop.f32.mrf.mxu0
    %1875 = vdwg.mxu0
    %1876 = vmatprep.subr.bf16.mxu0 %v1277
    %1877 = vmatpush1.bf16.msra.mxu0 %v1276
    %1878 = vmatprep.subr.bf16.mxu0 %v1273
    %1879 = vmatpush1.bf16.msra.mxu0 %v1272
    %1880 = vmatprep.subr.bf16.mxu0 %v1269
    %1881 = vmatpush1.bf16.msra.mxu0 %v1268
    %1882 = vmatprep.subr.bf16.mxu0 %v1265
    %1883 = vmatpush1.bf16.msra.mxu0 %v1264
    %1884 = vmatprep.subr.bf16.mxu0 %v1261
    %1885 = vmatpush1.bf16.msra.mxu0 %v1260
    %1886 = vmatprep.subr.bf16.mxu0 %v1257
    %1887 = vmatpush1.bf16.msra.mxu0 %v1256
    %1888 = vmatprep.subr.bf16.mxu0 %v1253
    %1889 = vmatpush1.bf16.msra.mxu0 %v1252
    %1890 = vmatprep.subr.bf16.mxu0 %v1249
    %1891 = vmatpush1.bf16.msra.mxu0 %v1248
    %1892 = vmatprep.subr.bf16.mxu0 %v1309
    %1893 = vmatpush2.bf16.msra.mxu0 %v1308
    %1894 = vmatprep.subr.bf16.mxu0 %v1305
    %1895 = vmatpush2.bf16.msra.mxu0 %v1304
    %1896 = vmatprep.subr.bf16.mxu0 %v1301
    %1897 = vmatpush2.bf16.msra.mxu0 %v1300
    %1898 = vmatprep.subr.bf16.mxu0 %v1297
    %1899 = vmatpush2.bf16.msra.mxu0 %v1296
    %1900 = vmatprep.subr.bf16.mxu0 %v1293
    %1901 = vmatpush2.bf16.msra.mxu0 %v1292
    %1902 = vmatprep.subr.bf16.mxu0 %v1289
    %1903 = vmatpush2.bf16.msra.mxu0 %v1288
    %1904 = vmatprep.subr.bf16.mxu0 %v1285
    %1905 = vmatpush2.bf16.msra.mxu0 %v1284
    %1906 = vmatprep.subr.bf16.mxu0 %v1281
    %1907 = vmatpush2.bf16.msra.mxu0 %v1280
    %1908 = vmatprep.mubr.bf16.mxu0 %v87
    %1909 = vmatmul.mubr.bf16.gmra.mxu0 %v86
    %v1910 = vpop.f32.mrf.mxu0
    %v1911 = vadd.f32 %v1870, %v1910
    %v1912 = vpop.f32.mrf.mxu0
    %v1913 = vadd.f32 %v1872, %v1912
    %v1914 = vpop.f32.mrf.mxu0
    %v1915 = vpop.f32.mrf.mxu0
    %1916 = vdwg.mxu0
    %1917 = vmatprep.subr.bf16.mxu0 %v1341
    %1918 = vmatpush1.bf16.msra.mxu0 %v1340
    %1919 = vmatprep.subr.bf16.mxu0 %v1337
    %1920 = vmatpush1.bf16.msra.mxu0 %v1336
    %1921 = vmatprep.subr.bf16.mxu0 %v1333
    %1922 = vmatpush1.bf16.msra.mxu0 %v1332
    %1923 = vmatprep.subr.bf16.mxu0 %v1329
    %1924 = vmatpush1.bf16.msra.mxu0 %v1328
    %1925 = vmatprep.subr.bf16.mxu0 %v1325
    %1926 = vmatpush1.bf16.msra.mxu0 %v1324
    %1927 = vmatprep.subr.bf16.mxu0 %v1321
    %1928 = vmatpush1.bf16.msra.mxu0 %v1320
    %1929 = vmatprep.subr.bf16.mxu0 %v1317
    %1930 = vmatpush1.bf16.msra.mxu0 %v1316
    %1931 = vmatprep.subr.bf16.mxu0 %v1313
    %1932 = vmatpush1.bf16.msra.mxu0 %v1312
    %1933 = vmatprep.subr.bf16.mxu0 %v1373
    %1934 = vmatpush2.bf16.msra.mxu0 %v1372
    %1935 = vmatprep.subr.bf16.mxu0 %v1369
    %1936 = vmatpush2.bf16.msra.mxu0 %v1368
    %1937 = vmatprep.subr.bf16.mxu0 %v1365
    %1938 = vmatpush2.bf16.msra.mxu0 %v1364
    %1939 = vmatprep.subr.bf16.mxu0 %v1361
    %1940 = vmatpush2.bf16.msra.mxu0 %v1360
    %1941 = vmatprep.subr.bf16.mxu0 %v1357
    %1942 = vmatpush2.bf16.msra.mxu0 %v1356
    %1943 = vmatprep.subr.bf16.mxu0 %v1353
    %1944 = vmatpush2.bf16.msra.mxu0 %v1352
    %1945 = vmatprep.subr.bf16.mxu0 %v1349
    %1946 = vmatpush2.bf16.msra.mxu0 %v1348
    %1947 = vmatprep.subr.bf16.mxu0 %v1345
    %1948 = vmatpush2.bf16.msra.mxu0 %v1344
    %1949 = vmatprep.mubr.bf16.mxu0 %v89
    %1950 = vmatmul.mubr.bf16.gmra.mxu0 %v88
    %v1951 = vpop.f32.mrf.mxu0
    %v1952 = vadd.f32 %v1911, %v1951
    %v1953 = vpop.f32.mrf.mxu0
    %v1954 = vadd.f32 %v1913, %v1953
    %v1955 = vpop.f32.mrf.mxu0
    %v1956 = vpop.f32.mrf.mxu0
    %1957 = vdwg.mxu0
    %v1958 = vadd.f32 %v90, %v1788
    %v1959 = vadd.f32 %v91, %v1790
    %v1960 = vadd.f32 %v92, %v1952
    %v1961 = vadd.f32 %v93, %v1954
    %1962 = vst [vmem:[#allocation2] sm:$0xff] %v1958
    %1963 = vst [vmem:[#allocation2 + $0x8] sm:$0xff] %v1959
    %1964 = vst [vmem:[#allocation2 + $0x10] sm:$0xff] %v1960
    %1965 = vst [vmem:[#allocation2 + $0x18] sm:$0xff] %v1961
    // Predicated region
    $region46: #{tpu_custom_call.1} parent=1 // pred_check
      %p1966 = pneg %p66
    $region47: #{tpu_custom_call.1} parent=1 // pred_check_branch
      %1968 = sbr.rel (%p1966) target = $region49
    $region48: #{tpu_custom_call.1} parent=1 // pred_region
      %v1969 = vld [vmem:[#allocation2] sm:$0xff]
      %v1970 = vld [vmem:[#allocation2 + $0x8] sm:$0xff]
      %v1971 = vld [vmem:[#allocation2 + $0x10] sm:$0xff]
      %v1972 = vld [vmem:[#allocation2 + $0x18] sm:$0xff]
      %v1973 = vld [vmem:[%s2] sm:$0xf]
      %v1975 = vlaneseq
      %v1976 = vshrl.u32 %v1975, 7
      %v1977 = vsub.s32 0, %v1976
      %v1978 = vrot.slane %v1973, %v1977
      %v1979 = vlaneseq
      %v1980 = vshrl.u32 %v1979, 7
      %v1981 = vsub.s32 1, %v1980
      %v1982 = vrot.slane %v1973, %v1981
      %v1983 = vlaneseq
      %v1984 = vshrl.u32 %v1983, 7
      %v1985 = vsub.s32 2, %v1984
      %v1986 = vrot.slane %v1973, %v1985
      %v1987 = vlaneseq
      %v1988 = vshrl.u32 %v1987, 7
      %v1989 = vsub.s32 3, %v1988
      %v1990 = vrot.slane %v1973, %v1989
      %v1995 = vadd.f32 %v1969, %v1978
      %v1996 = vadd.f32 %v1970, %v1982
      %v1997 = vadd.f32 %v1971, %v1986
      %v1998 = vadd.f32 %v1972, %v1990
      %v1999 = vmul.f32 %v1995, 0.2
      %v2000 = vmul.f32 %v1996, 0.2
      %v2001 = vmul.f32 %v1997, 0.2
      %v2002 = vmul.f32 %v1998, 0.2
      %v2003 = vmax.f32 %v1995, %v1999
      %v2004 = vmax.f32 %v1996, %v2000
      %v2005 = vmax.f32 %v1997, %v2001
      %v2006 = vmax.f32 %v1998, %v2002
      %v2007 = vpack.c.bf16 %v2003, %v2003
      %v2008 = vpack.c.bf16 %v2004, %v2004
      %v2009 = vpack.c.bf16 %v2005, %v2005
      %v2010 = vpack.c.bf16 %v2006, %v2006
      %v2011 = vld [vmem:[#allocation8] sm:$0xff]
      %v2012 = vld [vmem:[#allocation8 + $0x8] sm:$0xff]
      %v2013 = vld [vmem:[#allocation8 + $0x10] sm:$0xff]
      %v2014 = vld [vmem:[#allocation8 + $0x18] sm:$0xff]
      %v2015 = vld [vmem:[#allocation8 + $0x20] sm:$0xff]
      %v2016 = vld [vmem:[#allocation8 + $0x28] sm:$0xff]
      %v2017 = vld [vmem:[#allocation8 + $0x30] sm:$0xff]
      %v2018 = vld [vmem:[#allocation8 + $0x38] sm:$0xff]
      %v2019 = vld [vmem:[#allocation8 + $0x40] sm:$0xff]
      %v2020 = vld [vmem:[#allocation8 + $0x48] sm:$0xff]
      %v2021 = vld [vmem:[#allocation8 + $0x50] sm:$0xff]
      %v2022 = vld [vmem:[#allocation8 + $0x58] sm:$0xff]
      %v2023 = vld [vmem:[#allocation8 + $0x60] sm:$0xff]
      %v2024 = vld [vmem:[#allocation8 + $0x68] sm:$0xff]
      %v2025 = vld [vmem:[#allocation8 + $0x70] sm:$0xff]
      %v2026 = vld [vmem:[#allocation8 + $0x78] sm:$0xff]
      %v2027 = vld [vmem:[#allocation8 + $0x80] sm:$0xff]
      %v2028 = vld [vmem:[#allocation8 + $0x88] sm:$0xff]
      %v2029 = vld [vmem:[#allocation8 + $0x90] sm:$0xff]
      %v2030 = vld [vmem:[#allocation8 + $0x98] sm:$0xff]
      %v2031 = vld [vmem:[#allocation8 + $0xa0] sm:$0xff]
      %v2032 = vld [vmem:[#allocation8 + $0xa8] sm:$0xff]
      %v2033 = vld [vmem:[#allocation8 + $0xb0] sm:$0xff]
      %v2034 = vld [vmem:[#allocation8 + $0xb8] sm:$0xff]
      %v2035 = vld [vmem:[#allocation8 + $0xc0] sm:$0xff]
      %v2036 = vld [vmem:[#allocation8 + $0xc8] sm:$0xff]
      %v2037 = vld [vmem:[#allocation8 + $0xd0] sm:$0xff]
      %v2038 = vld [vmem:[#allocation8 + $0xd8] sm:$0xff]
      %v2039 = vld [vmem:[#allocation8 + $0xe0] sm:$0xff]
      %v2040 = vld [vmem:[#allocation8 + $0xe8] sm:$0xff]
      %v2041 = vld [vmem:[#allocation8 + $0xf0] sm:$0xff]
      %v2042 = vld [vmem:[#allocation8 + $0xf8] sm:$0xff]
      %v2043 = vld [vmem:[#allocation8 + $0x100] sm:$0xff]
      %v2044 = vld [vmem:[#allocation8 + $0x108] sm:$0xff]
      %v2045 = vld [vmem:[#allocation8 + $0x110] sm:$0xff]
      %v2046 = vld [vmem:[#allocation8 + $0x118] sm:$0xff]
      %v2047 = vld [vmem:[#allocation8 + $0x120] sm:$0xff]
      %v2048 = vld [vmem:[#allocation8 + $0x128] sm:$0xff]
      %v2049 = vld [vmem:[#allocation8 + $0x130] sm:$0xff]
      %v2050 = vld [vmem:[#allocation8 + $0x138] sm:$0xff]
      %v2051 = vld [vmem:[#allocation8 + $0x140] sm:$0xff]
      %v2052 = vld [vmem:[#allocation8 + $0x148] sm:$0xff]
      %v2053 = vld [vmem:[#allocation8 + $0x150] sm:$0xff]
      %v2054 = vld [vmem:[#allocation8 + $0x158] sm:$0xff]
      %v2055 = vld [vmem:[#allocation8 + $0x160] sm:$0xff]
      %v2056 = vld [vmem:[#allocation8 + $0x168] sm:$0xff]
      %v2057 = vld [vmem:[#allocation8 + $0x170] sm:$0xff]
      %v2058 = vld [vmem:[#allocation8 + $0x178] sm:$0xff]
      %v2059 = vld [vmem:[#allocation8 + $0x180] sm:$0xff]
      %v2060 = vld [vmem:[#allocation8 + $0x188] sm:$0xff]
      %v2061 = vld [vmem:[#allocation8 + $0x190] sm:$0xff]
      %v2062 = vld [vmem:[#allocation8 + $0x198] sm:$0xff]
      %v2063 = vld [vmem:[#allocation8 + $0x1a0] sm:$0xff]
      %v2064 = vld [vmem:[#allocation8 + $0x1a8] sm:$0xff]
      %v2065 = vld [vmem:[#allocation8 + $0x1b0] sm:$0xff]
      %v2066 = vld [vmem:[#allocation8 + $0x1b8] sm:$0xff]
      %v2067 = vld [vmem:[#allocation8 + $0x1c0] sm:$0xff]
      %v2068 = vld [vmem:[#allocation8 + $0x1c8] sm:$0xff]
      %v2069 = vld [vmem:[#allocation8 + $0x1d0] sm:$0xff]
      %v2070 = vld [vmem:[#allocation8 + $0x1d8] sm:$0xff]
      %v2071 = vld [vmem:[#allocation8 + $0x1e0] sm:$0xff]
      %v2072 = vld [vmem:[#allocation8 + $0x1e8] sm:$0xff]
      %v2073 = vld [vmem:[#allocation8 + $0x1f0] sm:$0xff]
      %v2074 = vld [vmem:[#allocation8 + $0x1f8] sm:$0xff]
      %v2075 = vld [vmem:[%s4] sm:$0x3]
      %v2077 = vlaneseq
      %v2078 = vshrl.u32 %v2077, 7
      %v2079 = vsub.s32 0, %v2078
      %v2080 = vrot.slane %v2075, %v2079
      %v2081 = vlaneseq
      %v2082 = vshrl.u32 %v2081, 7
      %v2083 = vsub.s32 1, %v2082
      %v2084 = vrot.slane %v2075, %v2083
      %v2151 = vunpack.c.l.b16 %v2011
      %v2152 = vunpack.c.h.b16 %v2011
      %v2153 = vunpack.c.l.b16 %v2012
      %v2154 = vunpack.c.h.b16 %v2012
      %v2155 = vunpack.c.l.b16 %v2013
      %v2156 = vunpack.c.h.b16 %v2013
      %v2157 = vunpack.c.l.b16 %v2014
      %v2158 = vunpack.c.h.b16 %v2014
      %v2159 = vunpack.c.l.b16 %v2015
      %v2160 = vunpack.c.h.b16 %v2015
      %v2161 = vunpack.c.l.b16 %v2016
      %v2162 = vunpack.c.h.b16 %v2016
      %v2163 = vunpack.c.l.b16 %v2017
      %v2164 = vunpack.c.h.b16 %v2017
      %v2165 = vunpack.c.l.b16 %v2018
      %v2166 = vunpack.c.h.b16 %v2018
      %v2167 = vunpack.c.l.b16 %v2019
      %v2168 = vunpack.c.h.b16 %v2019
      %v2169 = vunpack.c.l.b16 %v2020
      %v2170 = vunpack.c.h.b16 %v2020
      %v2171 = vunpack.c.l.b16 %v2021
      %v2172 = vunpack.c.h.b16 %v2021
      %v2173 = vunpack.c.l.b16 %v2022
      %v2174 = vunpack.c.h.b16 %v2022
      %v2175 = vunpack.c.l.b16 %v2023
      %v2176 = vunpack.c.h.b16 %v2023
      %v2177 = vunpack.c.l.b16 %v2024
      %v2178 = vunpack.c.h.b16 %v2024
      %v2179 = vunpack.c.l.b16 %v2025
      %v2180 = vunpack.c.h.b16 %v2025
      %v2181 = vunpack.c.l.b16 %v2026
      %v2182 = vunpack.c.h.b16 %v2026
      %v2183 = vunpack.c.l.b16 %v2027
      %v2184 = vunpack.c.h.b16 %v2027
      %v2185 = vunpack.c.l.b16 %v2028
      %v2186 = vunpack.c.h.b16 %v2028
      %v2187 = vunpack.c.l.b16 %v2029
      %v2188 = vunpack.c.h.b16 %v2029
      %v2189 = vunpack.c.l.b16 %v2030
      %v2190 = vunpack.c.h.b16 %v2030
      %v2191 = vunpack.c.l.b16 %v2031
      %v2192 = vunpack.c.h.b16 %v2031
      %v2193 = vunpack.c.l.b16 %v2032
      %v2194 = vunpack.c.h.b16 %v2032
      %v2195 = vunpack.c.l.b16 %v2033
      %v2196 = vunpack.c.h.b16 %v2033
      %v2197 = vunpack.c.l.b16 %v2034
      %v2198 = vunpack.c.h.b16 %v2034
      %v2199 = vunpack.c.l.b16 %v2035
      %v2200 = vunpack.c.h.b16 %v2035
      %v2201 = vunpack.c.l.b16 %v2036
      %v2202 = vunpack.c.h.b16 %v2036
      %v2203 = vunpack.c.l.b16 %v2037
      %v2204 = vunpack.c.h.b16 %v2037
      %v2205 = vunpack.c.l.b16 %v2038
      %v2206 = vunpack.c.h.b16 %v2038
      %v2207 = vunpack.c.l.b16 %v2039
      %v2208 = vunpack.c.h.b16 %v2039
      %v2209 = vunpack.c.l.b16 %v2040
      %v2210 = vunpack.c.h.b16 %v2040
      %v2211 = vunpack.c.l.b16 %v2041
      %v2212 = vunpack.c.h.b16 %v2041
      %v2213 = vunpack.c.l.b16 %v2042
      %v2214 = vunpack.c.h.b16 %v2042
      %v2215 = vunpack.c.l.b16 %v2043
      %v2216 = vunpack.c.h.b16 %v2043
      %v2217 = vunpack.c.l.b16 %v2044
      %v2218 = vunpack.c.h.b16 %v2044
      %v2219 = vunpack.c.l.b16 %v2045
      %v2220 = vunpack.c.h.b16 %v2045
      %v2221 = vunpack.c.l.b16 %v2046
      %v2222 = vunpack.c.h.b16 %v2046
      %v2223 = vunpack.c.l.b16 %v2047
      %v2224 = vunpack.c.h.b16 %v2047
      %v2225 = vunpack.c.l.b16 %v2048
      %v2226 = vunpack.c.h.b16 %v2048
      %v2227 = vunpack.c.l.b16 %v2049
      %v2228 = vunpack.c.h.b16 %v2049
      %v2229 = vunpack.c.l.b16 %v2050
      %v2230 = vunpack.c.h.b16 %v2050
      %v2231 = vunpack.c.l.b16 %v2051
      %v2232 = vunpack.c.h.b16 %v2051
      %v2233 = vunpack.c.l.b16 %v2052
      %v2234 = vunpack.c.h.b16 %v2052
      %v2235 = vunpack.c.l.b16 %v2053
      %v2236 = vunpack.c.h.b16 %v2053
      %v2237 = vunpack.c.l.b16 %v2054
      %v2238 = vunpack.c.h.b16 %v2054
      %v2239 = vunpack.c.l.b16 %v2055
      %v2240 = vunpack.c.h.b16 %v2055
      %v2241 = vunpack.c.l.b16 %v2056
      %v2242 = vunpack.c.h.b16 %v2056
      %v2243 = vunpack.c.l.b16 %v2057
      %v2244 = vunpack.c.h.b16 %v2057
      %v2245 = vunpack.c.l.b16 %v2058
      %v2246 = vunpack.c.h.b16 %v2058
      %v2247 = vunpack.c.l.b16 %v2059
      %v2248 = vunpack.c.h.b16 %v2059
      %v2249 = vunpack.c.l.b16 %v2060
      %v2250 = vunpack.c.h.b16 %v2060
      %v2251 = vunpack.c.l.b16 %v2061
      %v2252 = vunpack.c.h.b16 %v2061
      %v2253 = vunpack.c.l.b16 %v2062
      %v2254 = vunpack.c.h.b16 %v2062
      %v2255 = vunpack.c.l.b16 %v2063
      %v2256 = vunpack.c.h.b16 %v2063
      %v2257 = vunpack.c.l.b16 %v2064
      %v2258 = vunpack.c.h.b16 %v2064
      %v2259 = vunpack.c.l.b16 %v2065
      %v2260 = vunpack.c.h.b16 %v2065
      %v2261 = vunpack.c.l.b16 %v2066
      %v2262 = vunpack.c.h.b16 %v2066
      %v2263 = vunpack.c.l.b16 %v2067
      %v2264 = vunpack.c.h.b16 %v2067
      %v2265 = vunpack.c.l.b16 %v2068
      %v2266 = vunpack.c.h.b16 %v2068
      %v2267 = vunpack.c.l.b16 %v2069
      %v2268 = vunpack.c.h.b16 %v2069
      %v2269 = vunpack.c.l.b16 %v2070
      %v2270 = vunpack.c.h.b16 %v2070
      %v2271 = vunpack.c.l.b16 %v2071
      %v2272 = vunpack.c.h.b16 %v2071
      %v2273 = vunpack.c.l.b16 %v2072
      %v2274 = vunpack.c.h.b16 %v2072
      %v2275 = vunpack.c.l.b16 %v2073
      %v2276 = vunpack.c.h.b16 %v2073
      %v2277 = vunpack.c.l.b16 %v2074
      %v2278 = vunpack.c.h.b16 %v2074
      %v2279 = vpack.c.b16 %v2153, %v2151
      %v2280 = vpack.c.b16 %v2154, %v2152
      %v2281 = vpack.c.b16 %v2157, %v2155
      %v2282 = vpack.c.b16 %v2158, %v2156
      %v2283 = vpack.c.b16 %v2161, %v2159
      %v2284 = vpack.c.b16 %v2162, %v2160
      %v2285 = vpack.c.b16 %v2165, %v2163
      %v2286 = vpack.c.b16 %v2166, %v2164
      %v2287 = vpack.c.b16 %v2169, %v2167
      %v2288 = vpack.c.b16 %v2170, %v2168
      %v2289 = vpack.c.b16 %v2173, %v2171
      %v2290 = vpack.c.b16 %v2174, %v2172
      %v2291 = vpack.c.b16 %v2177, %v2175
      %v2292 = vpack.c.b16 %v2178, %v2176
      %v2293 = vpack.c.b16 %v2181, %v2179
      %v2294 = vpack.c.b16 %v2182, %v2180
      %v2295 = vpack.c.b16 %v2185, %v2183
      %v2296 = vpack.c.b16 %v2186, %v2184
      %v2297 = vpack.c.b16 %v2189, %v2187
      %v2298 = vpack.c.b16 %v2190, %v2188
      %v2299 = vpack.c.b16 %v2193, %v2191
      %v2300 = vpack.c.b16 %v2194, %v2192
      %v2301 = vpack.c.b16 %v2197, %v2195
      %v2302 = vpack.c.b16 %v2198, %v2196
      %v2303 = vpack.c.b16 %v2201, %v2199
      %v2304 = vpack.c.b16 %v2202, %v2200
      %v2305 = vpack.c.b16 %v2205, %v2203
      %v2306 = vpack.c.b16 %v2206, %v2204
      %v2307 = vpack.c.b16 %v2209, %v2207
      %v2308 = vpack.c.b16 %v2210, %v2208
      %v2309 = vpack.c.b16 %v2213, %v2211
      %v2310 = vpack.c.b16 %v2214, %v2212
      %v2311 = vpack.c.b16 %v2217, %v2215
      %v2312 = vpack.c.b16 %v2218, %v2216
      %v2313 = vpack.c.b16 %v2221, %v2219
      %v2314 = vpack.c.b16 %v2222, %v2220
      %v2315 = vpack.c.b16 %v2225, %v2223
      %v2316 = vpack.c.b16 %v2226, %v2224
      %v2317 = vpack.c.b16 %v2229, %v2227
      %v2318 = vpack.c.b16 %v2230, %v2228
      %v2319 = vpack.c.b16 %v2233, %v2231
      %v2320 = vpack.c.b16 %v2234, %v2232
      %v2321 = vpack.c.b16 %v2237, %v2235
      %v2322 = vpack.c.b16 %v2238, %v2236
      %v2323 = vpack.c.b16 %v2241, %v2239
      %v2324 = vpack.c.b16 %v2242, %v2240
      %v2325 = vpack.c.b16 %v2245, %v2243
      %v2326 = vpack.c.b16 %v2246, %v2244
      %v2327 = vpack.c.b16 %v2249, %v2247
      %v2328 = vpack.c.b16 %v2250, %v2248
      %v2329 = vpack.c.b16 %v2253, %v2251
      %v2330 = vpack.c.b16 %v2254, %v2252
      %v2331 = vpack.c.b16 %v2257, %v2255
      %v2332 = vpack.c.b16 %v2258, %v2256
      %v2333 = vpack.c.b16 %v2261, %v2259
      %v2334 = vpack.c.b16 %v2262, %v2260
      %v2335 = vpack.c.b16 %v2265, %v2263
      %v2336 = vpack.c.b16 %v2266, %v2264
      %v2337 = vpack.c.b16 %v2269, %v2267
      %v2338 = vpack.c.b16 %v2270, %v2268
      %v2339 = vpack.c.b16 %v2273, %v2271
      %v2340 = vpack.c.b16 %v2274, %v2272
      %v2341 = vpack.c.b16 %v2277, %v2275
      %v2342 = vpack.c.b16 %v2278, %v2276
      %2407 = vmatprep.subr.bf16.mxu0 %v2294
      %2408 = vmatpush1.bf16.msra.mxu0 %v2293
      %2409 = vmatprep.subr.bf16.mxu0 %v2292
      %2410 = vmatpush1.bf16.msra.mxu0 %v2291
      %2411 = vmatprep.subr.bf16.mxu0 %v2290
      %2412 = vmatpush1.bf16.msra.mxu0 %v2289
      %2413 = vmatprep.subr.bf16.mxu0 %v2288
      %2414 = vmatpush1.bf16.msra.mxu0 %v2287
      %2415 = vmatprep.subr.bf16.mxu0 %v2286
      %2416 = vmatpush1.bf16.msra.mxu0 %v2285
      %2417 = vmatprep.subr.bf16.mxu0 %v2284
      %2418 = vmatpush1.bf16.msra.mxu0 %v2283
      %2419 = vmatprep.subr.bf16.mxu0 %v2282
      %2420 = vmatpush1.bf16.msra.mxu0 %v2281
      %2421 = vmatprep.subr.bf16.mxu0 %v2280
      %2422 = vmatpush1.bf16.msra.mxu0 %v2279
      %2423 = vmatprep.subr.bf16.mxu0 %v2310
      %2424 = vmatpush2.bf16.msra.mxu0 %v2309
      %2425 = vmatprep.subr.bf16.mxu0 %v2308
      %2426 = vmatpush2.bf16.msra.mxu0 %v2307
      %2427 = vmatprep.subr.bf16.mxu0 %v2306
      %2428 = vmatpush2.bf16.msra.mxu0 %v2305
      %2429 = vmatprep.subr.bf16.mxu0 %v2304
      %2430 = vmatpush2.bf16.msra.mxu0 %v2303
      %2431 = vmatprep.subr.bf16.mxu0 %v2302
      %2432 = vmatpush2.bf16.msra.mxu0 %v2301
      %2433 = vmatprep.subr.bf16.mxu0 %v2300
      %2434 = vmatpush2.bf16.msra.mxu0 %v2299
      %2435 = vmatprep.subr.bf16.mxu0 %v2298
      %2436 = vmatpush2.bf16.msra.mxu0 %v2297
      %2437 = vmatprep.subr.bf16.mxu0 %v2296
      %2438 = vmatpush2.bf16.msra.mxu0 %v2295
      %2439 = vmatprep.mubr.bf16.mxu0 %v2008
      %2440 = vmatmul.mubr.bf16.gmra.mxu0 %v2007
      %v2441 = vpop.f32.mrf.mxu0
      %v2442 = vadd.f32 %v2080, %v2441
      %v2443 = vpop.f32.mrf.mxu0
      %v2444 = vadd.f32 %v2084, %v2443
      %v2445 = vpop.f32.mrf.mxu0
      %v2446 = vpop.f32.mrf.mxu0
      %2447 = vdwg.mxu0
      %2448 = vmatprep.subr.bf16.mxu0 %v2326
      %2449 = vmatpush1.bf16.msra.mxu0 %v2325
      %2450 = vmatprep.subr.bf16.mxu0 %v2324
      %2451 = vmatpush1.bf16.msra.mxu0 %v2323
      %2452 = vmatprep.subr.bf16.mxu0 %v2322
      %2453 = vmatpush1.bf16.msra.mxu0 %v2321
      %2454 = vmatprep.subr.bf16.mxu0 %v2320
      %2455 = vmatpush1.bf16.msra.mxu0 %v2319
      %2456 = vmatprep.subr.bf16.mxu0 %v2318
      %2457 = vmatpush1.bf16.msra.mxu0 %v2317
      %2458 = vmatprep.subr.bf16.mxu0 %v2316
      %2459 = vmatpush1.bf16.msra.mxu0 %v2315
      %2460 = vmatprep.subr.bf16.mxu0 %v2314
      %2461 = vmatpush1.bf16.msra.mxu0 %v2313
      %2462 = vmatprep.subr.bf16.mxu0 %v2312
      %2463 = vmatpush1.bf16.msra.mxu0 %v2311
      %2464 = vmatprep.subr.bf16.mxu0 %v2342
      %2465 = vmatpush2.bf16.msra.mxu0 %v2341
      %2466 = vmatprep.subr.bf16.mxu0 %v2340
      %2467 = vmatpush2.bf16.msra.mxu0 %v2339
      %2468 = vmatprep.subr.bf16.mxu0 %v2338
      %2469 = vmatpush2.bf16.msra.mxu0 %v2337
      %2470 = vmatprep.subr.bf16.mxu0 %v2336
      %2471 = vmatpush2.bf16.msra.mxu0 %v2335
      %2472 = vmatprep.subr.bf16.mxu0 %v2334
      %2473 = vmatpush2.bf16.msra.mxu0 %v2333
      %2474 = vmatprep.subr.bf16.mxu0 %v2332
      %2475 = vmatpush2.bf16.msra.mxu0 %v2331
      %2476 = vmatprep.subr.bf16.mxu0 %v2330
      %2477 = vmatpush2.bf16.msra.mxu0 %v2329
      %2478 = vmatprep.subr.bf16.mxu0 %v2328
      %2479 = vmatpush2.bf16.msra.mxu0 %v2327
      %2480 = vmatprep.mubr.bf16.mxu0 %v2010
      %2481 = vmatmul.mubr.bf16.gmra.mxu0 %v2009
      %v2482 = vpop.f32.mrf.mxu0
      %v2483 = vadd.f32 %v2442, %v2482
      %v2484 = vpop.f32.mrf.mxu0
      %v2485 = vadd.f32 %v2444, %v2484
      %v2486 = vpop.f32.mrf.mxu0
      %v2487 = vpop.f32.mrf.mxu0
      %2488 = vdwg.mxu0
      %v2489 = vmul.f32 %v2483, 0.2
      %v2490 = vmul.f32 %v2485, 0.2
      %v2491 = vmax.f32 %v2483, %v2489
      %v2492 = vmax.f32 %v2485, %v2490
      %v2493 = vld [vmem:[%s5] sm:$0x3]
      %v2495 = vlaneseq
      %v2496 = vshrl.u32 %v2495, 7
      %v2497 = vsub.s32 0, %v2496
      %v2498 = vrot.slane %v2493, %v2497
      %v2499 = vlaneseq
      %v2500 = vshrl.u32 %v2499, 7
      %v2501 = vsub.s32 1, %v2500
      %v2502 = vrot.slane %v2493, %v2501
      %v2505 = vmul.f32 %v2491, %v2498
      %v2506 = vmul.f32 %v2492, %v2502
      %v2507 = vadd.f32 %v2505, %v2506
      %2508 = vadd.xlane.f32.xlu0 %v2507
      %v2509 = vpop.xlane.xlu0 %2508
      %s2510 = sld [smem:[#allocation3]]
      %v2511 = vstv %s2510
      %v2512 = vadd.f32 %v2509, %v2511
      %v2513 = vsub.f32 0.0, %v2512
      %v2514 = vmul.f32 %v2513, 1.442695
      %v2515 = vpow.pop %v2514
      %v2516 = vadd.f32 %v2515, 1.0
      %v2517 = vrcp.pop %v2516
      %v2518 = vmul.f32 1.0, %v2517
      %vm2519 = vcmask 7168
      %2520 = vst.msk [vmem:[%s7] sm:$0xff] %vm2519, %v2518
    $region49: #{tpu_custom_call.1} parent=1 // pred_fallthru
      _
    // Predicated region
    $region50: #{tpu_custom_call.1} parent=1 // pred_check
      _
    $region51: #{tpu_custom_call.1} parent=1 // pred_check_branch
      %2522 = sbr.rel (0) target = $region53
    $region52: #{tpu_custom_call.1} parent=1 // pred_region
      _
    $region53: #{tpu_custom_call.1} parent=1 // pred_fallthru
      _
    // Predicated region
    $region54: #{tpu_custom_call.1} parent=1 // pred_check
      _
    $region55: #{tpu_custom_call.1} parent=1 // pred_check_branch
      %2524 = sbr.rel (0) target = $region57
    $region56: #{tpu_custom_call.1} parent=1 // pred_region
      _
    $region57: #{tpu_custom_call.1} parent=1 // pred_fallthru
      _
    %2525 = vsyncpa [#allocation5], 1
    %2526 = vsyncpa [#allocation7], 1

</llo_original>
